<compile_context>
chip_gen: v5e
topology: v5e:2x2
jax: 0.10.0
libtpu: 0.0.40
codegen_flags: <defaults>
</compile_context>

<pallas_src>
import math

import jax
import jax.numpy as jnp
from jax import lax
from jax.experimental import pallas as pl
from jax.experimental.pallas import tpu as pltpu

# Synthetic model dims consistent with TextRCNN.__init__ (small shapes)
V = 100   # vocabulary_size
E = 32    # embedding_dimension
H = 32    # hidden_size
L = 64    # hidden_size_linear
C = 4     # class_num
NUM_LAYERS = 2  # hidden_layers (bidirectional)


def init_params(key):
    """Deterministic synthetic parameters (PyTorch default-init style)."""
    p = {}
    keys = iter(jax.random.split(key, 40))

    def u(shape, bound):
        return jax.random.uniform(next(keys), shape, jnp.float32, -bound, bound)

    p["embedding"] = jax.random.normal(next(keys), (V, E), jnp.float32)

    k = 1.0 / math.sqrt(H)
    for layer, in_sz in ((0, E), (1, 2 * H)):
        for suffix in ("", "r"):        # "" = forward, "r" = reverse direction
            p[f"w_ih_l{layer}{suffix}"] = u((4 * H, in_sz), k)
            p[f"w_hh_l{layer}{suffix}"] = u((4 * H, H), k)
            p[f"b_ih_l{layer}{suffix}"] = u((4 * H,), k)
            p[f"b_hh_l{layer}{suffix}"] = u((4 * H,), k)

    kW = 1.0 / math.sqrt(2 * H + E)
    p["W_w"] = u((L, 2 * H + E), kW)
    p["W_b"] = u((L,), kW)
    kfc = 1.0 / math.sqrt(L)
    p["fc_w"] = u((C, L), kfc)
    p["fc_b"] = u((C,), kfc)
    return p


def _fuse_bidir_weights(w_ih_f, w_hh_f, b_ih_f, b_hh_f,
                        w_ih_b, w_hh_b, b_ih_b, b_hh_b):
    """Host-side prep: transpose to (in, 4H), scale the g-gate (3rd quarter)
    by 2 (so tanh(x) = 2*sigmoid(2x) - 1 needs no in-kernel tanh), fuse the two
    directions along lanes, and build a block-diagonal recurrent weight."""
    g_scale = jnp.ones((4 * H,), jnp.float32).at[2 * H:3 * H].set(2.0)

    wih_f = w_ih_f.T.astype(jnp.float32) * g_scale            # (in, 4H)
    wih_b = w_ih_b.T.astype(jnp.float32) * g_scale
    wih = jnp.concatenate([wih_f, wih_b], axis=1)             # (in, 8H)

    whh_f = w_hh_f.T.astype(jnp.float32) * g_scale             # (H, 4H)
    whh_b = w_hh_b.T.astype(jnp.float32) * g_scale
    whh = jnp.zeros((2 * H, 8 * H), jnp.float32)
    whh = whh.at[0:H, 0:4 * H].set(whh_f)
    whh = whh.at[H:2 * H, 4 * H:8 * H].set(whh_b)              # block-diag (2H, 8H)

    b_f = (b_ih_f + b_hh_f).astype(jnp.float32) * g_scale
    b_b = (b_ih_b + b_hh_b).astype(jnp.float32) * g_scale
    b = jnp.concatenate([b_f, b_b]).reshape(1, 8 * H)          # (1, 8H)
    return wih, whh, b


def textrcnn_forward(tokens, p):
    """tokens: (B, T) int32 token ids -> (B, C) softmax probabilities."""
    B, T = tokens.shape
    Bp = ((B + 7) // 8) * 8                                    # pad batch to sublanes
    Vp = ((V + 127) // 128) * 128                              # lane-pad vocab (>=128)
    Cp = 128                                                   # lane-dense fc head

    # Tokens time-major, padded rows get id V -> zero row of the padded table.
    tok_tm = jnp.pad(jnp.transpose(tokens).astype(jnp.int32),
                     ((0, 0), (0, Bp - B)), constant_values=V)  # (T, Bp)
    tok2d = tok_tm.reshape(T * Bp, 1)

    # TODO(synk): args.static / args.multichannel pretrained-embedding branches
    # are config-time options not exercised here (single learned embedding).
    emb_tbl = jnp.zeros((Vp, E), jnp.float32).at[:V, :].set(p["embedding"])

    wih0, whh0, b0 = _fuse_bidir_weights(
        p["w_ih_l0"], p["w_hh_l0"], p["b_ih_l0"], p["b_hh_l0"],
        p["w_ih_l0r"], p["w_hh_l0r"], p["b_ih_l0r"], p["b_hh_l0r"])
    wih1, whh1, b1 = _fuse_bidir_weights(
        p["w_ih_l1"], p["w_hh_l1"], p["b_ih_l1"], p["b_hh_l1"],
        p["w_ih_l1r"], p["w_hh_l1r"], p["b_ih_l1r"], p["b_hh_l1r"])

    wW = p["W_w"].T.astype(jnp.float32)                        # (2H+E, L), rows [h|x]
    bW = p["W_b"].reshape(1, L).astype(jnp.float32)
    wfc = jnp.zeros((L, Cp), jnp.float32).at[:, :C].set(p["fc_w"].T)
    bfc = jnp.zeros((1, Cp), jnp.float32).at[:, :C].set(p["fc_b"].reshape(1, C))

    def kernel(tok_ref, emb_ref,
               wih0_ref, whh0_ref, b0_ref,
               wih1_ref, whh1_ref, b1_ref,
               wW_ref, bW_ref, wfc_ref, bfc_ref,
               out_ref, hseq_scr):
        f32 = jnp.float32

        # ----- in-kernel embedding lookup: one-hot @ table (single MXU matmul) -----
        tok = tok_ref[...]                                     # (T*Bp, 1) int32
        vlane = lax.broadcasted_iota(jnp.int32, (T * Bp, Vp), 1)
        onehot = (vlane == tok).astype(f32)
        x = jnp.dot(onehot, emb_ref[...], preferred_element_type=f32)   # (T*Bp, E)

        # Gate lane-mask built ONCE and closed over (no per-cell iota re-emission).
        glane = lax.broadcasted_iota(jnp.int32, (Bp, 4 * H), 1)
        gmask = (glane >= 2 * H) & (glane < 3 * H)

        def lstm_cell(g, c):
            # g-gate pre-activation was pre-scaled x2 on the host, so the whole
            # 128-lane gate vector needs only ONE sigmoid; the masked lanes use
            # tanh(x) = 2*sigmoid(2x) - 1 (plain VPU mul/sub).
            sig = jax.nn.sigmoid(g)
            act = jnp.where(gmask, 2.0 * sig - 1.0, sig)
            c_new = act[:, H:2 * H] * c + act[:, 0:H] * act[:, 2 * H:3 * H]
            h_new = act[:, 3 * H:4 * H] * jnp.tanh(c_new)
            return h_new, c_new

        def bidir(precomp, whh_blk, base):
            # precomp: (T*Bp, 8H) SSA value (hoisted x@Wih + bias, both directions).
            zeros = jnp.zeros((Bp, H), f32)
            hf, cf, hb, cb = zeros, zeros, zeros, zeros
            # Statically unrolled recurrence; forward (t=s) and backward (t=T-1-s)
            # chains share ONE fused block-diagonal recurrent matmul per round.
            for s in range(T):
                tf_, tb = s, T - 1 - s
                hcat = jnp.concatenate([hf, hb], axis=1)       # (Bp, 2H)
                grec = jnp.dot(hcat, whh_blk, preferred_element_type=f32)  # (Bp, 8H)
                gf = precomp[tf_ * Bp:(tf_ + 1) * Bp, 0:4 * H] + grec[:, 0:4 * H]
                gb = precomp[tb * Bp:(tb + 1) * Bp, 4 * H:8 * H] + grec[:, 4 * H:8 * H]
                hf, cf = lstm_cell(gf, cf)
                hb, cb = lstm_cell(gb, cb)
                hseq_scr[base + tf_ * Bp: base + (tf_ + 1) * Bp, 0:H] = hf
                hseq_scr[base + tb * Bp: base + (tb + 1) * Bp, H:2 * H] = hb

        # ----- layer 0: hoisted fused input projection (+bias), kept as SSA -----
        prec0 = jnp.dot(x, wih0_ref[...], preferred_element_type=f32) + b0_ref[...]
        bidir(prec0, whh0_ref[...], 0)

        # ----- layer 1: input is the layer-0 rows of the packed scratch -----
        # TODO(synk): inter-layer LSTM dropout is an inference-mode identity (no RNG).
        h0 = hseq_scr[0:T * Bp, :]                             # (T*Bp, 2H)
        prec1 = jnp.dot(h0, wih1_ref[...], preferred_element_type=f32) + b1_ref[...]
        bidir(prec1, whh1_ref[...], T * Bp)
        h1 = hseq_scr[T * Bp:2 * T * Bp, :]                    # (T*Bp, 2H)

        # ----- fused tanh(W @ [lstm_out ; emb]) over all timesteps, max-pool over T -----
        lin = jnp.tanh(
            jnp.dot(h1, wW_ref[0:2 * H, :], preferred_element_type=f32)
            + jnp.dot(x, wW_ref[2 * H:2 * H + E, :], preferred_element_type=f32)
            + bW_ref[...])                                     # (T*Bp, L)
        pooled = lin[0:Bp, :]
        for t in range(1, T):
            pooled = jnp.maximum(pooled, lin[t * Bp:(t + 1) * Bp, :])

        # TODO(synk): post-pool nn.Dropout is an inference-mode identity (no RNG).

        # ----- lane-dense fc + masked softmax (128-lane output, sliced in wrapper) -----
        logits = jnp.dot(pooled, wfc_ref[...],
                         preferred_element_type=f32) + bfc_ref[...]      # (Bp, 128)
        clane = lax.broadcasted_iota(jnp.int32, (Bp, Cp), 1)
        logits = jnp.where(clane < C, logits, -1e30)
        m = jnp.max(logits, axis=-1, keepdims=True)
        e = jnp.exp(logits - m)
        out_ref[...] = e * pl.reciprocal(jnp.sum(e, axis=-1, keepdims=True))

    inputs = (tok2d, emb_tbl,
              wih0, whh0, b0,
              wih1, whh1, b1,
              wW, bW, wfc, bfc)

    vmem = pl.BlockSpec(memory_space=pltpu.MemorySpace.VMEM)
    out_padded = pl.pallas_call(
        kernel,
        out_shape=jax.ShapeDtypeStruct((Bp, Cp), jnp.float32),
        in_specs=[vmem] * len(inputs),
        out_specs=vmem,
        scratch_shapes=[pltpu.VMEM((2 * T * Bp, 2 * H), jnp.float32)],  # [layer0 ; layer1] h
    )(*inputs)
    return out_padded[:B, :C]


def textrcnn_ref(tokens, p):
    """Pure-JAX reference matching PyTorch semantics (eval mode)."""
    x = jnp.transpose(p["embedding"][tokens], (1, 0, 2))        # (T, B, E)

    def run_dir(xs, wih, whh, bih, bhh, reverse):
        B = xs.shape[1]

        def step(carry, x_t):
            h, c = carry
            g = x_t @ wih.T + h @ whh.T + bih + bhh
            i, f, gg, o = jnp.split(g, 4, axis=-1)
            i = jax.nn.sigmoid(i); f = jax.nn.sigmoid(f)
            gg = jnp.tanh(gg); o = jax.nn.sigmoid(o)
            c = f * c + i * gg
            h = o * jnp.tanh(c)
            return (h, c), h

        seq = xs[::-1] if reverse else xs
        init = (jnp.zeros((B, H)), jnp.zeros((B, H)))
        _, hs = lax.scan(step, init, seq)
        return hs[::-1] if reverse else hs

    h = x
    for layer in range(NUM_LAYERS):
        hf = run_dir(h, p[f"w_ih_l{layer}"], p[f"w_hh_l{layer}"],
                     p[f"b_ih_l{layer}"], p[f"b_hh_l{layer}"], False)
        hb = run_dir(h, p[f"w_ih_l{layer}r"], p[f"w_hh_l{layer}r"],
                     p[f"b_ih_l{layer}r"], p[f"b_hh_l{layer}r"], True)
        h = jnp.concatenate([hf, hb], axis=-1)

    feats = jnp.transpose(jnp.concatenate([h, x], axis=-1), (1, 0, 2))  # (B,T,2H+E)
    lin = jnp.tanh(feats @ p["W_w"].T + p["W_b"])                       # (B,T,L)
    pooled = jnp.max(lin, axis=1)                                       # (B,L)
    logits = pooled @ p["fc_w"].T + p["fc_b"]
    return jax.nn.softmax(logits, axis=-1)


if __name__ == "__main__":
    B, T = 2, 8
    key = jax.random.PRNGKey(0)
    pkey, tkey = jax.random.split(key)
    params = init_params(pkey)
    tokens = jax.random.randint(tkey, (B, T), 0, V, dtype=jnp.int32)

    out = jax.block_until_ready(textrcnn_forward(tokens, params))
    ref = jax.block_until_ready(textrcnn_ref(tokens, params))

    assert out.shape == (B, C)
    # Tolerance relaxed slightly vs 1e-5: the in-kernel g-gate uses the exact
    # identity tanh(x) = 2*sigmoid(2x) - 1 (different EUP approximation path).
    assert bool(jnp.allclose(out, ref, atol=1e-4, rtol=1e-3)), (out, ref)
    print("KERNEL_OK")
</pallas_src>

<mosaic_0001>
module attributes {stable_mosaic.version = 11 : i64} {
  func.func @kernel(%arg0: memref<64x1xi32, #tpu.memory_space<vmem>>, %arg1: memref<128x32xf32, #tpu.memory_space<vmem>>, %arg2: memref<32x256xf32, #tpu.memory_space<vmem>>, %arg3: memref<64x256xf32, #tpu.memory_space<vmem>>, %arg4: memref<1x256xf32, #tpu.memory_space<vmem>>, %arg5: memref<64x256xf32, #tpu.memory_space<vmem>>, %arg6: memref<64x256xf32, #tpu.memory_space<vmem>>, %arg7: memref<1x256xf32, #tpu.memory_space<vmem>>, %arg8: memref<96x64xf32, #tpu.memory_space<vmem>>, %arg9: memref<1x64xf32, #tpu.memory_space<vmem>>, %arg10: memref<64x128xf32, #tpu.memory_space<vmem>>, %arg11: memref<1x128xf32, #tpu.memory_space<vmem>>, %arg12: memref<8x128xf32, #tpu.memory_space<vmem>>, %arg13: memref<128x64xf32, #tpu.memory_space<vmem>>) attributes {dimension_semantics = [], scalar_prefetch = 0 : i64, scratch_operands = 1 : i64, tpu.core_type = #tpu.core_type<tc>} {
    %c0 = arith.constant 0 : index
    %c0_0 = arith.constant 0 : index
    %0 = vector.load %arg0[%c0, %c0_0] : memref<64x1xi32, #tpu.memory_space<vmem>>, vector<64x1xi32>
    %1 = tpu.iota {dimensions = array<i32: 1>} : vector<64x128xi32>
    %2 = vector.broadcast %0 : vector<64x1xi32> to vector<64x128xi32>
    %3 = arith.cmpi eq, %1, %2 : vector<64x128xi32>
    %4 = arith.extui %3 : vector<64x128xi1> to vector<64x128xi32>
    %5 = arith.sitofp %4 : vector<64x128xi32> to vector<64x128xf32>
    %c0_1 = arith.constant 0 : index
    %c0_2 = arith.constant 0 : index
    %6 = vector.load %arg1[%c0_1, %c0_2] : memref<128x32xf32, #tpu.memory_space<vmem>>, vector<128x32xf32>
    %cst = arith.constant dense<0.000000e+00> : vector<64x32xf32>
    %7 = tpu.matmul %5, %6, %cst {dimension_numbers = #tpu.dot_dimension_numbers<[1], [0], [0], [1], [0, 0, 1, 1], [], []>} : vector<64x128xf32>, vector<128x32xf32>, vector<64x32xf32> -> vector<64x32xf32>
    %8 = tpu.iota {dimensions = array<i32: 1>} : vector<8x128xi32>
    %c64_i32 = arith.constant 64 : i32
    %9 = vector.broadcast %c64_i32 : i32 to vector<8x128xi32>
    %10 = arith.cmpi sge, %8, %9 : vector<8x128xi32>
    %c96_i32 = arith.constant 96 : i32
    %11 = vector.broadcast %c96_i32 : i32 to vector<8x128xi32>
    %12 = arith.cmpi slt, %8, %11 : vector<8x128xi32>
    %13 = arith.andi %10, %12 : vector<8x128xi1>
    %c0_3 = arith.constant 0 : index
    %c0_4 = arith.constant 0 : index
    %14 = vector.load %arg2[%c0_3, %c0_4] : memref<32x256xf32, #tpu.memory_space<vmem>>, vector<32x256xf32>
    %cst_5 = arith.constant dense<0.000000e+00> : vector<64x256xf32>
    %15 = tpu.matmul %7, %14, %cst_5 {dimension_numbers = #tpu.dot_dimension_numbers<[1], [0], [0], [1], [0, 0, 1, 1], [], []>} : vector<64x32xf32>, vector<32x256xf32>, vector<64x256xf32> -> vector<64x256xf32>
    %c0_6 = arith.constant 0 : index
    %c0_7 = arith.constant 0 : index
    %16 = vector.load %arg4[%c0_6, %c0_7] : memref<1x256xf32, #tpu.memory_space<vmem>>, vector<1x256xf32>
    %17 = vector.broadcast %16 : vector<1x256xf32> to vector<64x256xf32>
    %18 = arith.addf %15, %17 : vector<64x256xf32>
    %c0_8 = arith.constant 0 : index
    %c0_9 = arith.constant 0 : index
    %19 = vector.load %arg3[%c0_8, %c0_9] : memref<64x256xf32, #tpu.memory_space<vmem>>, vector<64x256xf32>
    %cst_10 = arith.constant 0.000000e+00 : f32
    %20 = vector.broadcast %cst_10 : f32 to vector<8x32xf32>
    %21 = tpu.concatenate %20, %20 in 1 : vector<8x32xf32>, vector<8x32xf32> -> vector<8x64xf32>
    %cst_11 = arith.constant dense<0.000000e+00> : vector<8x256xf32>
    %22 = tpu.matmul %21, %19, %cst_11 {dimension_numbers = #tpu.dot_dimension_numbers<[1], [0], [0], [1], [0, 0, 1, 1], [], []>} : vector<8x64xf32>, vector<64x256xf32>, vector<8x256xf32> -> vector<8x256xf32>
    %23 = vector.extract_strided_slice %18 {offsets = [0, 0], sizes = [8, 128], strides = [1, 1]} : vector<64x256xf32> to vector<8x128xf32>
    %24 = vector.extract_strided_slice %22 {offsets = [0, 0], sizes = [8, 128], strides = [1, 1]} : vector<8x256xf32> to vector<8x128xf32>
    %25 = arith.addf %23, %24 : vector<8x128xf32>
    %26 = vector.extract_strided_slice %18 {offsets = [56, 128], sizes = [8, 128], strides = [1, 1]} : vector<64x256xf32> to vector<8x128xf32>
    %27 = vector.extract_strided_slice %22 {offsets = [0, 128], sizes = [8, 128], strides = [1, 1]} : vector<8x256xf32> to vector<8x128xf32>
    %28 = arith.addf %26, %27 : vector<8x128xf32>
    %29 = arith.negf %25 : vector<8x128xf32>
    %30 = math.exp %29 : vector<8x128xf32>
    %cst_12 = arith.constant 1.000000e+00 : f32
    %31 = vector.broadcast %cst_12 : f32 to vector<8x128xf32>
    %32 = arith.addf %31, %30 : vector<8x128xf32>
    %33 = arith.divf %31, %32 : vector<8x128xf32>
    %cst_13 = arith.constant 2.000000e+00 : f32
    %34 = vector.broadcast %cst_13 : f32 to vector<8x128xf32>
    %35 = arith.mulf %34, %33 : vector<8x128xf32>
    %cst_14 = arith.constant 1.000000e+00 : f32
    %36 = vector.broadcast %cst_14 : f32 to vector<8x128xf32>
    %37 = arith.subf %35, %36 : vector<8x128xf32>
    %38 = arith.select %13, %37, %33 : vector<8x128xi1>, vector<8x128xf32>
    %39 = vector.extract_strided_slice %38 {offsets = [0, 32], sizes = [8, 32], strides = [1, 1]} : vector<8x128xf32> to vector<8x32xf32>
    %40 = arith.mulf %39, %20 : vector<8x32xf32>
    %41 = vector.extract_strided_slice %38 {offsets = [0, 0], sizes = [8, 32], strides = [1, 1]} : vector<8x128xf32> to vector<8x32xf32>
    %42 = vector.extract_strided_slice %38 {offsets = [0, 64], sizes = [8, 32], strides = [1, 1]} : vector<8x128xf32> to vector<8x32xf32>
    %43 = arith.mulf %41, %42 : vector<8x32xf32>
    %44 = arith.addf %40, %43 : vector<8x32xf32>
    %45 = vector.extract_strided_slice %38 {offsets = [0, 96], sizes = [8, 32], strides = [1, 1]} : vector<8x128xf32> to vector<8x32xf32>
    %46 = math.tanh %44 : vector<8x32xf32>
    %47 = arith.mulf %45, %46 : vector<8x32xf32>
    %48 = arith.negf %28 : vector<8x128xf32>
    %49 = math.exp %48 : vector<8x128xf32>
    %cst_15 = arith.constant 1.000000e+00 : f32
    %50 = vector.broadcast %cst_15 : f32 to vector<8x128xf32>
    %51 = arith.addf %50, %49 : vector<8x128xf32>
    %52 = arith.divf %50, %51 : vector<8x128xf32>
    %cst_16 = arith.constant 2.000000e+00 : f32
    %53 = vector.broadcast %cst_16 : f32 to vector<8x128xf32>
    %54 = arith.mulf %53, %52 : vector<8x128xf32>
    %cst_17 = arith.constant 1.000000e+00 : f32
    %55 = vector.broadcast %cst_17 : f32 to vector<8x128xf32>
    %56 = arith.subf %54, %55 : vector<8x128xf32>
    %57 = arith.select %13, %56, %52 : vector<8x128xi1>, vector<8x128xf32>
    %58 = vector.extract_strided_slice %57 {offsets = [0, 32], sizes = [8, 32], strides = [1, 1]} : vector<8x128xf32> to vector<8x32xf32>
    %59 = arith.mulf %58, %20 : vector<8x32xf32>
    %60 = vector.extract_strided_slice %57 {offsets = [0, 0], sizes = [8, 32], strides = [1, 1]} : vector<8x128xf32> to vector<8x32xf32>
    %61 = vector.extract_strided_slice %57 {offsets = [0, 64], sizes = [8, 32], strides = [1, 1]} : vector<8x128xf32> to vector<8x32xf32>
    %62 = arith.mulf %60, %61 : vector<8x32xf32>
    %63 = arith.addf %59, %62 : vector<8x32xf32>
    %64 = vector.extract_strided_slice %57 {offsets = [0, 96], sizes = [8, 32], strides = [1, 1]} : vector<8x128xf32> to vector<8x32xf32>
    %65 = math.tanh %63 : vector<8x32xf32>
    %66 = arith.mulf %64, %65 : vector<8x32xf32>
    %c0_18 = arith.constant 0 : index
    %c0_19 = arith.constant 0 : index
    %67 = vector.load %arg13[%c0_18, %c0_19] : memref<128x64xf32, #tpu.memory_space<vmem>>, vector<8x32xf32>
    tpu.vector_store %arg13[%c0_18, %c0_19], %47 {strides = array<i32>} : memref<128x64xf32, #tpu.memory_space<vmem>>, vector<8x32xf32>,
    %c56 = arith.constant 56 : index
    %c32 = arith.constant 32 : index
    %68 = vector.load %arg13[%c56, %c32] : memref<128x64xf32, #tpu.memory_space<vmem>>, vector<8x32xf32>
    tpu.vector_store %arg13[%c56, %c32], %66 {strides = array<i32>} : memref<128x64xf32, #tpu.memory_space<vmem>>, vector<8x32xf32>,
    %69 = tpu.concatenate %47, %66 in 1 : vector<8x32xf32>, vector<8x32xf32> -> vector<8x64xf32>
    %cst_20 = arith.constant dense<0.000000e+00> : vector<8x256xf32>
    %70 = tpu.matmul %69, %19, %cst_20 {dimension_numbers = #tpu.dot_dimension_numbers<[1], [0], [0], [1], [0, 0, 1, 1], [], []>} : vector<8x64xf32>, vector<64x256xf32>, vector<8x256xf32> -> vector<8x256xf32>
    %71 = vector.extract_strided_slice %18 {offsets = [8, 0], sizes = [8, 128], strides = [1, 1]} : vector<64x256xf32> to vector<8x128xf32>
    %72 = vector.extract_strided_slice %70 {offsets = [0, 0], sizes = [8, 128], strides = [1, 1]} : vector<8x256xf32> to vector<8x128xf32>
    %73 = arith.addf %71, %72 : vector<8x128xf32>
    %74 = vector.extract_strided_slice %18 {offsets = [48, 128], sizes = [8, 128], strides = [1, 1]} : vector<64x256xf32> to vector<8x128xf32>
    %75 = vector.extract_strided_slice %70 {offsets = [0, 128], sizes = [8, 128], strides = [1, 1]} : vector<8x256xf32> to vector<8x128xf32>
    %76 = arith.addf %74, %75 : vector<8x128xf32>
    %77 = arith.negf %73 : vector<8x128xf32>
    %78 = math.exp %77 : vector<8x128xf32>
    %cst_21 = arith.constant 1.000000e+00 : f32
    %79 = vector.broadcast %cst_21 : f32 to vector<8x128xf32>
    %80 = arith.addf %79, %78 : vector<8x128xf32>
    %81 = arith.divf %79, %80 : vector<8x128xf32>
    %cst_22 = arith.constant 2.000000e+00 : f32
    %82 = vector.broadcast %cst_22 : f32 to vector<8x128xf32>
    %83 = arith.mulf %82, %81 : vector<8x128xf32>
    %cst_23 = arith.constant 1.000000e+00 : f32
    %84 = vector.broadcast %cst_23 : f32 to vector<8x128xf32>
    %85 = arith.subf %83, %84 : vector<8x128xf32>
    %86 = arith.select %13, %85, %81 : vector<8x128xi1>, vector<8x128xf32>
    %87 = vector.extract_strided_slice %86 {offsets = [0, 32], sizes = [8, 32], strides = [1, 1]} : vector<8x128xf32> to vector<8x32xf32>
    %88 = arith.mulf %87, %44 : vector<8x32xf32>
    %89 = vector.extract_strided_slice %86 {offsets = [0, 0], sizes = [8, 32], strides = [1, 1]} : vector<8x128xf32> to vector<8x32xf32>
    %90 = vector.extract_strided_slice %86 {offsets = [0, 64], sizes = [8, 32], strides = [1, 1]} : vector<8x128xf32> to vector<8x32xf32>
    %91 = arith.mulf %89, %90 : vector<8x32xf32>
    %92 = arith.addf %88, %91 : vector<8x32xf32>
    %93 = vector.extract_strided_slice %86 {offsets = [0, 96], sizes = [8, 32], strides = [1, 1]} : vector<8x128xf32> to vector<8x32xf32>
    %94 = math.tanh %92 : vector<8x32xf32>
    %95 = arith.mulf %93, %94 : vector<8x32xf32>
    %96 = arith.negf %76 : vector<8x128xf32>
    %97 = math.exp %96 : vector<8x128xf32>
    %cst_24 = arith.constant 1.000000e+00 : f32
    %98 = vector.broadcast %cst_24 : f32 to vector<8x128xf32>
    %99 = arith.addf %98, %97 : vector<8x128xf32>
    %100 = arith.divf %98, %99 : vector<8x128xf32>
    %cst_25 = arith.constant 2.000000e+00 : f32
    %101 = vector.broadcast %cst_25 : f32 to vector<8x128xf32>
    %102 = arith.mulf %101, %100 : vector<8x128xf32>
    %cst_26 = arith.constant 1.000000e+00 : f32
    %103 = vector.broadcast %cst_26 : f32 to vector<8x128xf32>
    %104 = arith.subf %102, %103 : vector<8x128xf32>
    %105 = arith.select %13, %104, %100 : vector<8x128xi1>, vector<8x128xf32>
    %106 = vector.extract_strided_slice %105 {offsets = [0, 32], sizes = [8, 32], strides = [1, 1]} : vector<8x128xf32> to vector<8x32xf32>
    %107 = arith.mulf %106, %63 : vector<8x32xf32>
    %108 = vector.extract_strided_slice %105 {offsets = [0, 0], sizes = [8, 32], strides = [1, 1]} : vector<8x128xf32> to vector<8x32xf32>
    %109 = vector.extract_strided_slice %105 {offsets = [0, 64], sizes = [8, 32], strides = [1, 1]} : vector<8x128xf32> to vector<8x32xf32>
    %110 = arith.mulf %108, %109 : vector<8x32xf32>
    %111 = arith.addf %107, %110 : vector<8x32xf32>
    %112 = vector.extract_strided_slice %105 {offsets = [0, 96], sizes = [8, 32], strides = [1, 1]} : vector<8x128xf32> to vector<8x32xf32>
    %113 = math.tanh %111 : vector<8x32xf32>
    %114 = arith.mulf %112, %113 : vector<8x32xf32>
    %c8 = arith.constant 8 : index
    %c0_27 = arith.constant 0 : index
    %115 = vector.load %arg13[%c8, %c0_27] : memref<128x64xf32, #tpu.memory_space<vmem>>, vector<8x32xf32>
    tpu.vector_store %arg13[%c8, %c0_27], %95 {strides = array<i32>} : memref<128x64xf32, #tpu.memory_space<vmem>>, vector<8x32xf32>,
    %c48 = arith.constant 48 : index
    %c32_28 = arith.constant 32 : index
    %116 = vector.load %arg13[%c48, %c32_28] : memref<128x64xf32, #tpu.memory_space<vmem>>, vector<8x32xf32>
    tpu.vector_store %arg13[%c48, %c32_28], %114 {strides = array<i32>} : memref<128x64xf32, #tpu.memory_space<vmem>>, vector<8x32xf32>,
    %117 = tpu.concatenate %95, %114 in 1 : vector<8x32xf32>, vector<8x32xf32> -> vector<8x64xf32>
    %cst_29 = arith.constant dense<0.000000e+00> : vector<8x256xf32>
    %118 = tpu.matmul %117, %19, %cst_29 {dimension_numbers = #tpu.dot_dimension_numbers<[1], [0], [0], [1], [0, 0, 1, 1], [], []>} : vector<8x64xf32>, vector<64x256xf32>, vector<8x256xf32> -> vector<8x256xf32>
    %119 = vector.extract_strided_slice %18 {offsets = [16, 0], sizes = [8, 128], strides = [1, 1]} : vector<64x256xf32> to vector<8x128xf32>
    %120 = vector.extract_strided_slice %118 {offsets = [0, 0], sizes = [8, 128], strides = [1, 1]} : vector<8x256xf32> to vector<8x128xf32>
    %121 = arith.addf %119, %120 : vector<8x128xf32>
    %122 = vector.extract_strided_slice %18 {offsets = [40, 128], sizes = [8, 128], strides = [1, 1]} : vector<64x256xf32> to vector<8x128xf32>
    %123 = vector.extract_strided_slice %118 {offsets = [0, 128], sizes = [8, 128], strides = [1, 1]} : vector<8x256xf32> to vector<8x128xf32>
    %124 = arith.addf %122, %123 : vector<8x128xf32>
    %125 = arith.negf %121 : vector<8x128xf32>
    %126 = math.exp %125 : vector<8x128xf32>
    %cst_30 = arith.constant 1.000000e+00 : f32
    %127 = vector.broadcast %cst_30 : f32 to vector<8x128xf32>
    %128 = arith.addf %127, %126 : vector<8x128xf32>
    %129 = arith.divf %127, %128 : vector<8x128xf32>
    %cst_31 = arith.constant 2.000000e+00 : f32
    %130 = vector.broadcast %cst_31 : f32 to vector<8x128xf32>
    %131 = arith.mulf %130, %129 : vector<8x128xf32>
    %cst_32 = arith.constant 1.000000e+00 : f32
    %132 = vector.broadcast %cst_32 : f32 to vector<8x128xf32>
    %133 = arith.subf %131, %132 : vector<8x128xf32>
    %134 = arith.select %13, %133, %129 : vector<8x128xi1>, vector<8x128xf32>
    %135 = vector.extract_strided_slice %134 {offsets = [0, 32], sizes = [8, 32], strides = [1, 1]} : vector<8x128xf32> to vector<8x32xf32>
    %136 = arith.mulf %135, %92 : vector<8x32xf32>
    %137 = vector.extract_strided_slice %134 {offsets = [0, 0], sizes = [8, 32], strides = [1, 1]} : vector<8x128xf32> to vector<8x32xf32>
    %138 = vector.extract_strided_slice %134 {offsets = [0, 64], sizes = [8, 32], strides = [1, 1]} : vector<8x128xf32> to vector<8x32xf32>
    %139 = arith.mulf %137, %138 : vector<8x32xf32>
    %140 = arith.addf %136, %139 : vector<8x32xf32>
    %141 = vector.extract_strided_slice %134 {offsets = [0, 96], sizes = [8, 32], strides = [1, 1]} : vector<8x128xf32> to vector<8x32xf32>
    %142 = math.tanh %140 : vector<8x32xf32>
    %143 = arith.mulf %141, %142 : vector<8x32xf32>
    %144 = arith.negf %124 : vector<8x128xf32>
    %145 = math.exp %144 : vector<8x128xf32>
    %cst_33 = arith.constant 1.000000e+00 : f32
    %146 = vector.broadcast %cst_33 : f32 to vector<8x128xf32>
    %147 = arith.addf %146, %145 : vector<8x128xf32>
    %148 = arith.divf %146, %147 : vector<8x128xf32>
    %cst_34 = arith.constant 2.000000e+00 : f32
    %149 = vector.broadcast %cst_34 : f32 to vector<8x128xf32>
    %150 = arith.mulf %149, %148 : vector<8x128xf32>
    %cst_35 = arith.constant 1.000000e+00 : f32
    %151 = vector.broadcast %cst_35 : f32 to vector<8x128xf32>
    %152 = arith.subf %150, %151 : vector<8x128xf32>
    %153 = arith.select %13, %152, %148 : vector<8x128xi1>, vector<8x128xf32>
    %154 = vector.extract_strided_slice %153 {offsets = [0, 32], sizes = [8, 32], strides = [1, 1]} : vector<8x128xf32> to vector<8x32xf32>
    %155 = arith.mulf %154, %111 : vector<8x32xf32>
    %156 = vector.extract_strided_slice %153 {offsets = [0, 0], sizes = [8, 32], strides = [1, 1]} : vector<8x128xf32> to vector<8x32xf32>
    %157 = vector.extract_strided_slice %153 {offsets = [0, 64], sizes = [8, 32], strides = [1, 1]} : vector<8x128xf32> to vector<8x32xf32>
    %158 = arith.mulf %156, %157 : vector<8x32xf32>
    %159 = arith.addf %155, %158 : vector<8x32xf32>
    %160 = vector.extract_strided_slice %153 {offsets = [0, 96], sizes = [8, 32], strides = [1, 1]} : vector<8x128xf32> to vector<8x32xf32>
    %161 = math.tanh %159 : vector<8x32xf32>
    %162 = arith.mulf %160, %161 : vector<8x32xf32>
    %c16 = arith.constant 16 : index
    %c0_36 = arith.constant 0 : index
    %163 = vector.load %arg13[%c16, %c0_36] : memref<128x64xf32, #tpu.memory_space<vmem>>, vector<8x32xf32>
    tpu.vector_store %arg13[%c16, %c0_36], %143 {strides = array<i32>} : memref<128x64xf32, #tpu.memory_space<vmem>>, vector<8x32xf32>,
    %c40 = arith.constant 40 : index
    %c32_37 = arith.constant 32 : index
    %164 = vector.load %arg13[%c40, %c32_37] : memref<128x64xf32, #tpu.memory_space<vmem>>, vector<8x32xf32>
    tpu.vector_store %arg13[%c40, %c32_37], %162 {strides = array<i32>} : memref<128x64xf32, #tpu.memory_space<vmem>>, vector<8x32xf32>,
    %165 = tpu.concatenate %143, %162 in 1 : vector<8x32xf32>, vector<8x32xf32> -> vector<8x64xf32>
    %cst_38 = arith.constant dense<0.000000e+00> : vector<8x256xf32>
    %166 = tpu.matmul %165, %19, %cst_38 {dimension_numbers = #tpu.dot_dimension_numbers<[1], [0], [0], [1], [0, 0, 1, 1], [], []>} : vector<8x64xf32>, vector<64x256xf32>, vector<8x256xf32> -> vector<8x256xf32>
    %167 = vector.extract_strided_slice %18 {offsets = [24, 0], sizes = [8, 128], strides = [1, 1]} : vector<64x256xf32> to vector<8x128xf32>
    %168 = vector.extract_strided_slice %166 {offsets = [0, 0], sizes = [8, 128], strides = [1, 1]} : vector<8x256xf32> to vector<8x128xf32>
    %169 = arith.addf %167, %168 : vector<8x128xf32>
    %170 = vector.extract_strided_slice %18 {offsets = [32, 128], sizes = [8, 128], strides = [1, 1]} : vector<64x256xf32> to vector<8x128xf32>
    %171 = vector.extract_strided_slice %166 {offsets = [0, 128], sizes = [8, 128], strides = [1, 1]} : vector<8x256xf32> to vector<8x128xf32>
    %172 = arith.addf %170, %171 : vector<8x128xf32>
    %173 = arith.negf %169 : vector<8x128xf32>
    %174 = math.exp %173 : vector<8x128xf32>
    %cst_39 = arith.constant 1.000000e+00 : f32
    %175 = vector.broadcast %cst_39 : f32 to vector<8x128xf32>
    %176 = arith.addf %175, %174 : vector<8x128xf32>
    %177 = arith.divf %175, %176 : vector<8x128xf32>
    %cst_40 = arith.constant 2.000000e+00 : f32
    %178 = vector.broadcast %cst_40 : f32 to vector<8x128xf32>
    %179 = arith.mulf %178, %177 : vector<8x128xf32>
    %cst_41 = arith.constant 1.000000e+00 : f32
    %180 = vector.broadcast %cst_41 : f32 to vector<8x128xf32>
    %181 = arith.subf %179, %180 : vector<8x128xf32>
    %182 = arith.select %13, %181, %177 : vector<8x128xi1>, vector<8x128xf32>
    %183 = vector.extract_strided_slice %182 {offsets = [0, 32], sizes = [8, 32], strides = [1, 1]} : vector<8x128xf32> to vector<8x32xf32>
    %184 = arith.mulf %183, %140 : vector<8x32xf32>
    %185 = vector.extract_strided_slice %182 {offsets = [0, 0], sizes = [8, 32], strides = [1, 1]} : vector<8x128xf32> to vector<8x32xf32>
    %186 = vector.extract_strided_slice %182 {offsets = [0, 64], sizes = [8, 32], strides = [1, 1]} : vector<8x128xf32> to vector<8x32xf32>
    %187 = arith.mulf %185, %186 : vector<8x32xf32>
    %188 = arith.addf %184, %187 : vector<8x32xf32>
    %189 = vector.extract_strided_slice %182 {offsets = [0, 96], sizes = [8, 32], strides = [1, 1]} : vector<8x128xf32> to vector<8x32xf32>
    %190 = math.tanh %188 : vector<8x32xf32>
    %191 = arith.mulf %189, %190 : vector<8x32xf32>
    %192 = arith.negf %172 : vector<8x128xf32>
    %193 = math.exp %192 : vector<8x128xf32>
    %cst_42 = arith.constant 1.000000e+00 : f32
    %194 = vector.broadcast %cst_42 : f32 to vector<8x128xf32>
    %195 = arith.addf %194, %193 : vector<8x128xf32>
    %196 = arith.divf %194, %195 : vector<8x128xf32>
    %cst_43 = arith.constant 2.000000e+00 : f32
    %197 = vector.broadcast %cst_43 : f32 to vector<8x128xf32>
    %198 = arith.mulf %197, %196 : vector<8x128xf32>
    %cst_44 = arith.constant 1.000000e+00 : f32
    %199 = vector.broadcast %cst_44 : f32 to vector<8x128xf32>
    %200 = arith.subf %198, %199 : vector<8x128xf32>
    %201 = arith.select %13, %200, %196 : vector<8x128xi1>, vector<8x128xf32>
    %202 = vector.extract_strided_slice %201 {offsets = [0, 32], sizes = [8, 32], strides = [1, 1]} : vector<8x128xf32> to vector<8x32xf32>
    %203 = arith.mulf %202, %159 : vector<8x32xf32>
    %204 = vector.extract_strided_slice %201 {offsets = [0, 0], sizes = [8, 32], strides = [1, 1]} : vector<8x128xf32> to vector<8x32xf32>
    %205 = vector.extract_strided_slice %201 {offsets = [0, 64], sizes = [8, 32], strides = [1, 1]} : vector<8x128xf32> to vector<8x32xf32>
    %206 = arith.mulf %204, %205 : vector<8x32xf32>
    %207 = arith.addf %203, %206 : vector<8x32xf32>
    %208 = vector.extract_strided_slice %201 {offsets = [0, 96], sizes = [8, 32], strides = [1, 1]} : vector<8x128xf32> to vector<8x32xf32>
    %209 = math.tanh %207 : vector<8x32xf32>
    %210 = arith.mulf %208, %209 : vector<8x32xf32>
    %c24 = arith.constant 24 : index
    %c0_45 = arith.constant 0 : index
    %211 = vector.load %arg13[%c24, %c0_45] : memref<128x64xf32, #tpu.memory_space<vmem>>, vector<8x32xf32>
    tpu.vector_store %arg13[%c24, %c0_45], %191 {strides = array<i32>} : memref<128x64xf32, #tpu.memory_space<vmem>>, vector<8x32xf32>,
    %c32_46 = arith.constant 32 : index
    %c32_47 = arith.constant 32 : index
    %212 = vector.load %arg13[%c32_46, %c32_47] : memref<128x64xf32, #tpu.memory_space<vmem>>, vector<8x32xf32>
    tpu.vector_store %arg13[%c32_46, %c32_47], %210 {strides = array<i32>} : memref<128x64xf32, #tpu.memory_space<vmem>>, vector<8x32xf32>,
    %213 = tpu.concatenate %191, %210 in 1 : vector<8x32xf32>, vector<8x32xf32> -> vector<8x64xf32>
    %cst_48 = arith.constant dense<0.000000e+00> : vector<8x256xf32>
    %214 = tpu.matmul %213, %19, %cst_48 {dimension_numbers = #tpu.dot_dimension_numbers<[1], [0], [0], [1], [0, 0, 1, 1], [], []>} : vector<8x64xf32>, vector<64x256xf32>, vector<8x256xf32> -> vector<8x256xf32>
    %215 = vector.extract_strided_slice %18 {offsets = [32, 0], sizes = [8, 128], strides = [1, 1]} : vector<64x256xf32> to vector<8x128xf32>
    %216 = vector.extract_strided_slice %214 {offsets = [0, 0], sizes = [8, 128], strides = [1, 1]} : vector<8x256xf32> to vector<8x128xf32>
    %217 = arith.addf %215, %216 : vector<8x128xf32>
    %218 = vector.extract_strided_slice %18 {offsets = [24, 128], sizes = [8, 128], strides = [1, 1]} : vector<64x256xf32> to vector<8x128xf32>
    %219 = vector.extract_strided_slice %214 {offsets = [0, 128], sizes = [8, 128], strides = [1, 1]} : vector<8x256xf32> to vector<8x128xf32>
    %220 = arith.addf %218, %219 : vector<8x128xf32>
    %221 = arith.negf %217 : vector<8x128xf32>
    %222 = math.exp %221 : vector<8x128xf32>
    %cst_49 = arith.constant 1.000000e+00 : f32
    %223 = vector.broadcast %cst_49 : f32 to vector<8x128xf32>
    %224 = arith.addf %223, %222 : vector<8x128xf32>
    %225 = arith.divf %223, %224 : vector<8x128xf32>
    %cst_50 = arith.constant 2.000000e+00 : f32
    %226 = vector.broadcast %cst_50 : f32 to vector<8x128xf32>
    %227 = arith.mulf %226, %225 : vector<8x128xf32>
    %cst_51 = arith.constant 1.000000e+00 : f32
    %228 = vector.broadcast %cst_51 : f32 to vector<8x128xf32>
    %229 = arith.subf %227, %228 : vector<8x128xf32>
    %230 = arith.select %13, %229, %225 : vector<8x128xi1>, vector<8x128xf32>
    %231 = vector.extract_strided_slice %230 {offsets = [0, 32], sizes = [8, 32], strides = [1, 1]} : vector<8x128xf32> to vector<8x32xf32>
    %232 = arith.mulf %231, %188 : vector<8x32xf32>
    %233 = vector.extract_strided_slice %230 {offsets = [0, 0], sizes = [8, 32], strides = [1, 1]} : vector<8x128xf32> to vector<8x32xf32>
    %234 = vector.extract_strided_slice %230 {offsets = [0, 64], sizes = [8, 32], strides = [1, 1]} : vector<8x128xf32> to vector<8x32xf32>
    %235 = arith.mulf %233, %234 : vector<8x32xf32>
    %236 = arith.addf %232, %235 : vector<8x32xf32>
    %237 = vector.extract_strided_slice %230 {offsets = [0, 96], sizes = [8, 32], strides = [1, 1]} : vector<8x128xf32> to vector<8x32xf32>
    %238 = math.tanh %236 : vector<8x32xf32>
    %239 = arith.mulf %237, %238 : vector<8x32xf32>
    %240 = arith.negf %220 : vector<8x128xf32>
    %241 = math.exp %240 : vector<8x128xf32>
    %cst_52 = arith.constant 1.000000e+00 : f32
    %242 = vector.broadcast %cst_52 : f32 to vector<8x128xf32>
    %243 = arith.addf %242, %241 : vector<8x128xf32>
    %244 = arith.divf %242, %243 : vector<8x128xf32>
    %cst_53 = arith.constant 2.000000e+00 : f32
    %245 = vector.broadcast %cst_53 : f32 to vector<8x128xf32>
    %246 = arith.mulf %245, %244 : vector<8x128xf32>
    %cst_54 = arith.constant 1.000000e+00 : f32
    %247 = vector.broadcast %cst_54 : f32 to vector<8x128xf32>
    %248 = arith.subf %246, %247 : vector<8x128xf32>
    %249 = arith.select %13, %248, %244 : vector<8x128xi1>, vector<8x128xf32>
    %250 = vector.extract_strided_slice %249 {offsets = [0, 32], sizes = [8, 32], strides = [1, 1]} : vector<8x128xf32> to vector<8x32xf32>
    %251 = arith.mulf %250, %207 : vector<8x32xf32>
    %252 = vector.extract_strided_slice %249 {offsets = [0, 0], sizes = [8, 32], strides = [1, 1]} : vector<8x128xf32> to vector<8x32xf32>
    %253 = vector.extract_strided_slice %249 {offsets = [0, 64], sizes = [8, 32], strides = [1, 1]} : vector<8x128xf32> to vector<8x32xf32>
    %254 = arith.mulf %252, %253 : vector<8x32xf32>
    %255 = arith.addf %251, %254 : vector<8x32xf32>
    %256 = vector.extract_strided_slice %249 {offsets = [0, 96], sizes = [8, 32], strides = [1, 1]} : vector<8x128xf32> to vector<8x32xf32>
    %257 = math.tanh %255 : vector<8x32xf32>
    %258 = arith.mulf %256, %257 : vector<8x32xf32>
    %c32_55 = arith.constant 32 : index
    %c0_56 = arith.constant 0 : index
    %259 = vector.load %arg13[%c32_55, %c0_56] : memref<128x64xf32, #tpu.memory_space<vmem>>, vector<8x32xf32>
    tpu.vector_store %arg13[%c32_55, %c0_56], %239 {strides = array<i32>} : memref<128x64xf32, #tpu.memory_space<vmem>>, vector<8x32xf32>,
    %c24_57 = arith.constant 24 : index
    %c32_58 = arith.constant 32 : index
    %260 = vector.load %arg13[%c24_57, %c32_58] : memref<128x64xf32, #tpu.memory_space<vmem>>, vector<8x32xf32>
    tpu.vector_store %arg13[%c24_57, %c32_58], %258 {strides = array<i32>} : memref<128x64xf32, #tpu.memory_space<vmem>>, vector<8x32xf32>,
    %261 = tpu.concatenate %239, %258 in 1 : vector<8x32xf32>, vector<8x32xf32> -> vector<8x64xf32>
    %cst_59 = arith.constant dense<0.000000e+00> : vector<8x256xf32>
    %262 = tpu.matmul %261, %19, %cst_59 {dimension_numbers = #tpu.dot_dimension_numbers<[1], [0], [0], [1], [0, 0, 1, 1], [], []>} : vector<8x64xf32>, vector<64x256xf32>, vector<8x256xf32> -> vector<8x256xf32>
    %263 = vector.extract_strided_slice %18 {offsets = [40, 0], sizes = [8, 128], strides = [1, 1]} : vector<64x256xf32> to vector<8x128xf32>
    %264 = vector.extract_strided_slice %262 {offsets = [0, 0], sizes = [8, 128], strides = [1, 1]} : vector<8x256xf32> to vector<8x128xf32>
    %265 = arith.addf %263, %264 : vector<8x128xf32>
    %266 = vector.extract_strided_slice %18 {offsets = [16, 128], sizes = [8, 128], strides = [1, 1]} : vector<64x256xf32> to vector<8x128xf32>
    %267 = vector.extract_strided_slice %262 {offsets = [0, 128], sizes = [8, 128], strides = [1, 1]} : vector<8x256xf32> to vector<8x128xf32>
    %268 = arith.addf %266, %267 : vector<8x128xf32>
    %269 = arith.negf %265 : vector<8x128xf32>
    %270 = math.exp %269 : vector<8x128xf32>
    %cst_60 = arith.constant 1.000000e+00 : f32
    %271 = vector.broadcast %cst_60 : f32 to vector<8x128xf32>
    %272 = arith.addf %271, %270 : vector<8x128xf32>
    %273 = arith.divf %271, %272 : vector<8x128xf32>
    %cst_61 = arith.constant 2.000000e+00 : f32
    %274 = vector.broadcast %cst_61 : f32 to vector<8x128xf32>
    %275 = arith.mulf %274, %273 : vector<8x128xf32>
    %cst_62 = arith.constant 1.000000e+00 : f32
    %276 = vector.broadcast %cst_62 : f32 to vector<8x128xf32>
    %277 = arith.subf %275, %276 : vector<8x128xf32>
    %278 = arith.select %13, %277, %273 : vector<8x128xi1>, vector<8x128xf32>
    %279 = vector.extract_strided_slice %278 {offsets = [0, 32], sizes = [8, 32], strides = [1, 1]} : vector<8x128xf32> to vector<8x32xf32>
    %280 = arith.mulf %279, %236 : vector<8x32xf32>
    %281 = vector.extract_strided_slice %278 {offsets = [0, 0], sizes = [8, 32], strides = [1, 1]} : vector<8x128xf32> to vector<8x32xf32>
    %282 = vector.extract_strided_slice %278 {offsets = [0, 64], sizes = [8, 32], strides = [1, 1]} : vector<8x128xf32> to vector<8x32xf32>
    %283 = arith.mulf %281, %282 : vector<8x32xf32>
    %284 = arith.addf %280, %283 : vector<8x32xf32>
    %285 = vector.extract_strided_slice %278 {offsets = [0, 96], sizes = [8, 32], strides = [1, 1]} : vector<8x128xf32> to vector<8x32xf32>
    %286 = math.tanh %284 : vector<8x32xf32>
    %287 = arith.mulf %285, %286 : vector<8x32xf32>
    %288 = arith.negf %268 : vector<8x128xf32>
    %289 = math.exp %288 : vector<8x128xf32>
    %cst_63 = arith.constant 1.000000e+00 : f32
    %290 = vector.broadcast %cst_63 : f32 to vector<8x128xf32>
    %291 = arith.addf %290, %289 : vector<8x128xf32>
    %292 = arith.divf %290, %291 : vector<8x128xf32>
    %cst_64 = arith.constant 2.000000e+00 : f32
    %293 = vector.broadcast %cst_64 : f32 to vector<8x128xf32>
    %294 = arith.mulf %293, %292 : vector<8x128xf32>
    %cst_65 = arith.constant 1.000000e+00 : f32
    %295 = vector.broadcast %cst_65 : f32 to vector<8x128xf32>
    %296 = arith.subf %294, %295 : vector<8x128xf32>
    %297 = arith.select %13, %296, %292 : vector<8x128xi1>, vector<8x128xf32>
    %298 = vector.extract_strided_slice %297 {offsets = [0, 32], sizes = [8, 32], strides = [1, 1]} : vector<8x128xf32> to vector<8x32xf32>
    %299 = arith.mulf %298, %255 : vector<8x32xf32>
    %300 = vector.extract_strided_slice %297 {offsets = [0, 0], sizes = [8, 32], strides = [1, 1]} : vector<8x128xf32> to vector<8x32xf32>
    %301 = vector.extract_strided_slice %297 {offsets = [0, 64], sizes = [8, 32], strides = [1, 1]} : vector<8x128xf32> to vector<8x32xf32>
    %302 = arith.mulf %300, %301 : vector<8x32xf32>
    %303 = arith.addf %299, %302 : vector<8x32xf32>
    %304 = vector.extract_strided_slice %297 {offsets = [0, 96], sizes = [8, 32], strides = [1, 1]} : vector<8x128xf32> to vector<8x32xf32>
    %305 = math.tanh %303 : vector<8x32xf32>
    %306 = arith.mulf %304, %305 : vector<8x32xf32>
    %c40_66 = arith.constant 40 : index
    %c0_67 = arith.constant 0 : index
    %307 = vector.load %arg13[%c40_66, %c0_67] : memref<128x64xf32, #tpu.memory_space<vmem>>, vector<8x32xf32>
    tpu.vector_store %arg13[%c40_66, %c0_67], %287 {strides = array<i32>} : memref<128x64xf32, #tpu.memory_space<vmem>>, vector<8x32xf32>,
    %c16_68 = arith.constant 16 : index
    %c32_69 = arith.constant 32 : index
    %308 = vector.load %arg13[%c16_68, %c32_69] : memref<128x64xf32, #tpu.memory_space<vmem>>, vector<8x32xf32>
    tpu.vector_store %arg13[%c16_68, %c32_69], %306 {strides = array<i32>} : memref<128x64xf32, #tpu.memory_space<vmem>>, vector<8x32xf32>,
    %309 = tpu.concatenate %287, %306 in 1 : vector<8x32xf32>, vector<8x32xf32> -> vector<8x64xf32>
    %cst_70 = arith.constant dense<0.000000e+00> : vector<8x256xf32>
    %310 = tpu.matmul %309, %19, %cst_70 {dimension_numbers = #tpu.dot_dimension_numbers<[1], [0], [0], [1], [0, 0, 1, 1], [], []>} : vector<8x64xf32>, vector<64x256xf32>, vector<8x256xf32> -> vector<8x256xf32>
    %311 = vector.extract_strided_slice %18 {offsets = [48, 0], sizes = [8, 128], strides = [1, 1]} : vector<64x256xf32> to vector<8x128xf32>
    %312 = vector.extract_strided_slice %310 {offsets = [0, 0], sizes = [8, 128], strides = [1, 1]} : vector<8x256xf32> to vector<8x128xf32>
    %313 = arith.addf %311, %312 : vector<8x128xf32>
    %314 = vector.extract_strided_slice %18 {offsets = [8, 128], sizes = [8, 128], strides = [1, 1]} : vector<64x256xf32> to vector<8x128xf32>
    %315 = vector.extract_strided_slice %310 {offsets = [0, 128], sizes = [8, 128], strides = [1, 1]} : vector<8x256xf32> to vector<8x128xf32>
    %316 = arith.addf %314, %315 : vector<8x128xf32>
    %317 = arith.negf %313 : vector<8x128xf32>
    %318 = math.exp %317 : vector<8x128xf32>
    %cst_71 = arith.constant 1.000000e+00 : f32
    %319 = vector.broadcast %cst_71 : f32 to vector<8x128xf32>
    %320 = arith.addf %319, %318 : vector<8x128xf32>
    %321 = arith.divf %319, %320 : vector<8x128xf32>
    %cst_72 = arith.constant 2.000000e+00 : f32
    %322 = vector.broadcast %cst_72 : f32 to vector<8x128xf32>
    %323 = arith.mulf %322, %321 : vector<8x128xf32>
    %cst_73 = arith.constant 1.000000e+00 : f32
    %324 = vector.broadcast %cst_73 : f32 to vector<8x128xf32>
    %325 = arith.subf %323, %324 : vector<8x128xf32>
    %326 = arith.select %13, %325, %321 : vector<8x128xi1>, vector<8x128xf32>
    %327 = vector.extract_strided_slice %326 {offsets = [0, 32], sizes = [8, 32], strides = [1, 1]} : vector<8x128xf32> to vector<8x32xf32>
    %328 = arith.mulf %327, %284 : vector<8x32xf32>
    %329 = vector.extract_strided_slice %326 {offsets = [0, 0], sizes = [8, 32], strides = [1, 1]} : vector<8x128xf32> to vector<8x32xf32>
    %330 = vector.extract_strided_slice %326 {offsets = [0, 64], sizes = [8, 32], strides = [1, 1]} : vector<8x128xf32> to vector<8x32xf32>
    %331 = arith.mulf %329, %330 : vector<8x32xf32>
    %332 = arith.addf %328, %331 : vector<8x32xf32>
    %333 = vector.extract_strided_slice %326 {offsets = [0, 96], sizes = [8, 32], strides = [1, 1]} : vector<8x128xf32> to vector<8x32xf32>
    %334 = math.tanh %332 : vector<8x32xf32>
    %335 = arith.mulf %333, %334 : vector<8x32xf32>
    %336 = arith.negf %316 : vector<8x128xf32>
    %337 = math.exp %336 : vector<8x128xf32>
    %cst_74 = arith.constant 1.000000e+00 : f32
    %338 = vector.broadcast %cst_74 : f32 to vector<8x128xf32>
    %339 = arith.addf %338, %337 : vector<8x128xf32>
    %340 = arith.divf %338, %339 : vector<8x128xf32>
    %cst_75 = arith.constant 2.000000e+00 : f32
    %341 = vector.broadcast %cst_75 : f32 to vector<8x128xf32>
    %342 = arith.mulf %341, %340 : vector<8x128xf32>
    %cst_76 = arith.constant 1.000000e+00 : f32
    %343 = vector.broadcast %cst_76 : f32 to vector<8x128xf32>
    %344 = arith.subf %342, %343 : vector<8x128xf32>
    %345 = arith.select %13, %344, %340 : vector<8x128xi1>, vector<8x128xf32>
    %346 = vector.extract_strided_slice %345 {offsets = [0, 32], sizes = [8, 32], strides = [1, 1]} : vector<8x128xf32> to vector<8x32xf32>
    %347 = arith.mulf %346, %303 : vector<8x32xf32>
    %348 = vector.extract_strided_slice %345 {offsets = [0, 0], sizes = [8, 32], strides = [1, 1]} : vector<8x128xf32> to vector<8x32xf32>
    %349 = vector.extract_strided_slice %345 {offsets = [0, 64], sizes = [8, 32], strides = [1, 1]} : vector<8x128xf32> to vector<8x32xf32>
    %350 = arith.mulf %348, %349 : vector<8x32xf32>
    %351 = arith.addf %347, %350 : vector<8x32xf32>
    %352 = vector.extract_strided_slice %345 {offsets = [0, 96], sizes = [8, 32], strides = [1, 1]} : vector<8x128xf32> to vector<8x32xf32>
    %353 = math.tanh %351 : vector<8x32xf32>
    %354 = arith.mulf %352, %353 : vector<8x32xf32>
    %c48_77 = arith.constant 48 : index
    %c0_78 = arith.constant 0 : index
    %355 = vector.load %arg13[%c48_77, %c0_78] : memref<128x64xf32, #tpu.memory_space<vmem>>, vector<8x32xf32>
    tpu.vector_store %arg13[%c48_77, %c0_78], %335 {strides = array<i32>} : memref<128x64xf32, #tpu.memory_space<vmem>>, vector<8x32xf32>,
    %c8_79 = arith.constant 8 : index
    %c32_80 = arith.constant 32 : index
    %356 = vector.load %arg13[%c8_79, %c32_80] : memref<128x64xf32, #tpu.memory_space<vmem>>, vector<8x32xf32>
    tpu.vector_store %arg13[%c8_79, %c32_80], %354 {strides = array<i32>} : memref<128x64xf32, #tpu.memory_space<vmem>>, vector<8x32xf32>,
    %357 = tpu.concatenate %335, %354 in 1 : vector<8x32xf32>, vector<8x32xf32> -> vector<8x64xf32>
    %cst_81 = arith.constant dense<0.000000e+00> : vector<8x256xf32>
    %358 = tpu.matmul %357, %19, %cst_81 {dimension_numbers = #tpu.dot_dimension_numbers<[1], [0], [0], [1], [0, 0, 1, 1], [], []>} : vector<8x64xf32>, vector<64x256xf32>, vector<8x256xf32> -> vector<8x256xf32>
    %359 = vector.extract_strided_slice %18 {offsets = [56, 0], sizes = [8, 128], strides = [1, 1]} : vector<64x256xf32> to vector<8x128xf32>
    %360 = vector.extract_strided_slice %358 {offsets = [0, 0], sizes = [8, 128], strides = [1, 1]} : vector<8x256xf32> to vector<8x128xf32>
    %361 = arith.addf %359, %360 : vector<8x128xf32>
    %362 = vector.extract_strided_slice %18 {offsets = [0, 128], sizes = [8, 128], strides = [1, 1]} : vector<64x256xf32> to vector<8x128xf32>
    %363 = vector.extract_strided_slice %358 {offsets = [0, 128], sizes = [8, 128], strides = [1, 1]} : vector<8x256xf32> to vector<8x128xf32>
    %364 = arith.addf %362, %363 : vector<8x128xf32>
    %365 = arith.negf %361 : vector<8x128xf32>
    %366 = math.exp %365 : vector<8x128xf32>
    %cst_82 = arith.constant 1.000000e+00 : f32
    %367 = vector.broadcast %cst_82 : f32 to vector<8x128xf32>
    %368 = arith.addf %367, %366 : vector<8x128xf32>
    %369 = arith.divf %367, %368 : vector<8x128xf32>
    %cst_83 = arith.constant 2.000000e+00 : f32
    %370 = vector.broadcast %cst_83 : f32 to vector<8x128xf32>
    %371 = arith.mulf %370, %369 : vector<8x128xf32>
    %cst_84 = arith.constant 1.000000e+00 : f32
    %372 = vector.broadcast %cst_84 : f32 to vector<8x128xf32>
    %373 = arith.subf %371, %372 : vector<8x128xf32>
    %374 = arith.select %13, %373, %369 : vector<8x128xi1>, vector<8x128xf32>
    %375 = vector.extract_strided_slice %374 {offsets = [0, 32], sizes = [8, 32], strides = [1, 1]} : vector<8x128xf32> to vector<8x32xf32>
    %376 = arith.mulf %375, %332 : vector<8x32xf32>
    %377 = vector.extract_strided_slice %374 {offsets = [0, 0], sizes = [8, 32], strides = [1, 1]} : vector<8x128xf32> to vector<8x32xf32>
    %378 = vector.extract_strided_slice %374 {offsets = [0, 64], sizes = [8, 32], strides = [1, 1]} : vector<8x128xf32> to vector<8x32xf32>
    %379 = arith.mulf %377, %378 : vector<8x32xf32>
    %380 = arith.addf %376, %379 : vector<8x32xf32>
    %381 = vector.extract_strided_slice %374 {offsets = [0, 96], sizes = [8, 32], strides = [1, 1]} : vector<8x128xf32> to vector<8x32xf32>
    %382 = math.tanh %380 : vector<8x32xf32>
    %383 = arith.mulf %381, %382 : vector<8x32xf32>
    %384 = arith.negf %364 : vector<8x128xf32>
    %385 = math.exp %384 : vector<8x128xf32>
    %cst_85 = arith.constant 1.000000e+00 : f32
    %386 = vector.broadcast %cst_85 : f32 to vector<8x128xf32>
    %387 = arith.addf %386, %385 : vector<8x128xf32>
    %388 = arith.divf %386, %387 : vector<8x128xf32>
    %cst_86 = arith.constant 2.000000e+00 : f32
    %389 = vector.broadcast %cst_86 : f32 to vector<8x128xf32>
    %390 = arith.mulf %389, %388 : vector<8x128xf32>
    %cst_87 = arith.constant 1.000000e+00 : f32
    %391 = vector.broadcast %cst_87 : f32 to vector<8x128xf32>
    %392 = arith.subf %390, %391 : vector<8x128xf32>
    %393 = arith.select %13, %392, %388 : vector<8x128xi1>, vector<8x128xf32>
    %394 = vector.extract_strided_slice %393 {offsets = [0, 32], sizes = [8, 32], strides = [1, 1]} : vector<8x128xf32> to vector<8x32xf32>
    %395 = arith.mulf %394, %351 : vector<8x32xf32>
    %396 = vector.extract_strided_slice %393 {offsets = [0, 0], sizes = [8, 32], strides = [1, 1]} : vector<8x128xf32> to vector<8x32xf32>
    %397 = vector.extract_strided_slice %393 {offsets = [0, 64], sizes = [8, 32], strides = [1, 1]} : vector<8x128xf32> to vector<8x32xf32>
    %398 = arith.mulf %396, %397 : vector<8x32xf32>
    %399 = arith.addf %395, %398 : vector<8x32xf32>
    %400 = vector.extract_strided_slice %393 {offsets = [0, 96], sizes = [8, 32], strides = [1, 1]} : vector<8x128xf32> to vector<8x32xf32>
    %401 = math.tanh %399 : vector<8x32xf32>
    %402 = arith.mulf %400, %401 : vector<8x32xf32>
    %c56_88 = arith.constant 56 : index
    %c0_89 = arith.constant 0 : index
    %403 = vector.load %arg13[%c56_88, %c0_89] : memref<128x64xf32, #tpu.memory_space<vmem>>, vector<8x32xf32>
    tpu.vector_store %arg13[%c56_88, %c0_89], %383 {strides = array<i32>} : memref<128x64xf32, #tpu.memory_space<vmem>>, vector<8x32xf32>,
    %c0_90 = arith.constant 0 : index
    %c32_91 = arith.constant 32 : index
    %404 = vector.load %arg13[%c0_90, %c32_91] : memref<128x64xf32, #tpu.memory_space<vmem>>, vector<8x32xf32>
    tpu.vector_store %arg13[%c0_90, %c32_91], %402 {strides = array<i32>} : memref<128x64xf32, #tpu.memory_space<vmem>>, vector<8x32xf32>,
    %c0_92 = arith.constant 0 : index
    %c0_93 = arith.constant 0 : index
    %405 = vector.load %arg13[%c0_92, %c0_93] : memref<128x64xf32, #tpu.memory_space<vmem>>, vector<64x64xf32>
    %c0_94 = arith.constant 0 : index
    %c0_95 = arith.constant 0 : index
    %406 = vector.load %arg5[%c0_94, %c0_95] : memref<64x256xf32, #tpu.memory_space<vmem>>, vector<64x256xf32>
    %cst_96 = arith.constant dense<0.000000e+00> : vector<64x256xf32>
    %407 = tpu.matmul %405, %406, %cst_96 {dimension_numbers = #tpu.dot_dimension_numbers<[1], [0], [0], [1], [0, 0, 1, 1], [], []>} : vector<64x64xf32>, vector<64x256xf32>, vector<64x256xf32> -> vector<64x256xf32>
    %c0_97 = arith.constant 0 : index
    %c0_98 = arith.constant 0 : index
    %408 = vector.load %arg7[%c0_97, %c0_98] : memref<1x256xf32, #tpu.memory_space<vmem>>, vector<1x256xf32>
    %409 = vector.broadcast %408 : vector<1x256xf32> to vector<64x256xf32>
    %410 = arith.addf %407, %409 : vector<64x256xf32>
    %c0_99 = arith.constant 0 : index
    %c0_100 = arith.constant 0 : index
    %411 = vector.load %arg6[%c0_99, %c0_100] : memref<64x256xf32, #tpu.memory_space<vmem>>, vector<64x256xf32>
    %cst_101 = arith.constant 0.000000e+00 : f32
    %412 = vector.broadcast %cst_101 : f32 to vector<8x32xf32>
    %413 = tpu.concatenate %412, %412 in 1 : vector<8x32xf32>, vector<8x32xf32> -> vector<8x64xf32>
    %cst_102 = arith.constant dense<0.000000e+00> : vector<8x256xf32>
    %414 = tpu.matmul %413, %411, %cst_102 {dimension_numbers = #tpu.dot_dimension_numbers<[1], [0], [0], [1], [0, 0, 1, 1], [], []>} : vector<8x64xf32>, vector<64x256xf32>, vector<8x256xf32> -> vector<8x256xf32>
    %415 = vector.extract_strided_slice %410 {offsets = [0, 0], sizes = [8, 128], strides = [1, 1]} : vector<64x256xf32> to vector<8x128xf32>
    %416 = vector.extract_strided_slice %414 {offsets = [0, 0], sizes = [8, 128], strides = [1, 1]} : vector<8x256xf32> to vector<8x128xf32>
    %417 = arith.addf %415, %416 : vector<8x128xf32>
    %418 = vector.extract_strided_slice %410 {offsets = [56, 128], sizes = [8, 128], strides = [1, 1]} : vector<64x256xf32> to vector<8x128xf32>
    %419 = vector.extract_strided_slice %414 {offsets = [0, 128], sizes = [8, 128], strides = [1, 1]} : vector<8x256xf32> to vector<8x128xf32>
    %420 = arith.addf %418, %419 : vector<8x128xf32>
    %421 = arith.negf %417 : vector<8x128xf32>
    %422 = math.exp %421 : vector<8x128xf32>
    %cst_103 = arith.constant 1.000000e+00 : f32
    %423 = vector.broadcast %cst_103 : f32 to vector<8x128xf32>
    %424 = arith.addf %423, %422 : vector<8x128xf32>
    %425 = arith.divf %423, %424 : vector<8x128xf32>
    %cst_104 = arith.constant 2.000000e+00 : f32
    %426 = vector.broadcast %cst_104 : f32 to vector<8x128xf32>
    %427 = arith.mulf %426, %425 : vector<8x128xf32>
    %cst_105 = arith.constant 1.000000e+00 : f32
    %428 = vector.broadcast %cst_105 : f32 to vector<8x128xf32>
    %429 = arith.subf %427, %428 : vector<8x128xf32>
    %430 = arith.select %13, %429, %425 : vector<8x128xi1>, vector<8x128xf32>
    %431 = vector.extract_strided_slice %430 {offsets = [0, 32], sizes = [8, 32], strides = [1, 1]} : vector<8x128xf32> to vector<8x32xf32>
    %432 = arith.mulf %431, %412 : vector<8x32xf32>
    %433 = vector.extract_strided_slice %430 {offsets = [0, 0], sizes = [8, 32], strides = [1, 1]} : vector<8x128xf32> to vector<8x32xf32>
    %434 = vector.extract_strided_slice %430 {offsets = [0, 64], sizes = [8, 32], strides = [1, 1]} : vector<8x128xf32> to vector<8x32xf32>
    %435 = arith.mulf %433, %434 : vector<8x32xf32>
    %436 = arith.addf %432, %435 : vector<8x32xf32>
    %437 = vector.extract_strided_slice %430 {offsets = [0, 96], sizes = [8, 32], strides = [1, 1]} : vector<8x128xf32> to vector<8x32xf32>
    %438 = math.tanh %436 : vector<8x32xf32>
    %439 = arith.mulf %437, %438 : vector<8x32xf32>
    %440 = arith.negf %420 : vector<8x128xf32>
    %441 = math.exp %440 : vector<8x128xf32>
    %cst_106 = arith.constant 1.000000e+00 : f32
    %442 = vector.broadcast %cst_106 : f32 to vector<8x128xf32>
    %443 = arith.addf %442, %441 : vector<8x128xf32>
    %444 = arith.divf %442, %443 : vector<8x128xf32>
    %cst_107 = arith.constant 2.000000e+00 : f32
    %445 = vector.broadcast %cst_107 : f32 to vector<8x128xf32>
    %446 = arith.mulf %445, %444 : vector<8x128xf32>
    %cst_108 = arith.constant 1.000000e+00 : f32
    %447 = vector.broadcast %cst_108 : f32 to vector<8x128xf32>
    %448 = arith.subf %446, %447 : vector<8x128xf32>
    %449 = arith.select %13, %448, %444 : vector<8x128xi1>, vector<8x128xf32>
    %450 = vector.extract_strided_slice %449 {offsets = [0, 32], sizes = [8, 32], strides = [1, 1]} : vector<8x128xf32> to vector<8x32xf32>
    %451 = arith.mulf %450, %412 : vector<8x32xf32>
    %452 = vector.extract_strided_slice %449 {offsets = [0, 0], sizes = [8, 32], strides = [1, 1]} : vector<8x128xf32> to vector<8x32xf32>
    %453 = vector.extract_strided_slice %449 {offsets = [0, 64], sizes = [8, 32], strides = [1, 1]} : vector<8x128xf32> to vector<8x32xf32>
    %454 = arith.mulf %452, %453 : vector<8x32xf32>
    %455 = arith.addf %451, %454 : vector<8x32xf32>
    %456 = vector.extract_strided_slice %449 {offsets = [0, 96], sizes = [8, 32], strides = [1, 1]} : vector<8x128xf32> to vector<8x32xf32>
    %457 = math.tanh %455 : vector<8x32xf32>
    %458 = arith.mulf %456, %457 : vector<8x32xf32>
    %c64 = arith.constant 64 : index
    %c0_109 = arith.constant 0 : index
    %459 = vector.load %arg13[%c64, %c0_109] : memref<128x64xf32, #tpu.memory_space<vmem>>, vector<8x32xf32>
    tpu.vector_store %arg13[%c64, %c0_109], %439 {strides = array<i32>} : memref<128x64xf32, #tpu.memory_space<vmem>>, vector<8x32xf32>,
    %c120 = arith.constant 120 : index
    %c32_110 = arith.constant 32 : index
    %460 = vector.load %arg13[%c120, %c32_110] : memref<128x64xf32, #tpu.memory_space<vmem>>, vector<8x32xf32>
    tpu.vector_store %arg13[%c120, %c32_110], %458 {strides = array<i32>} : memref<128x64xf32, #tpu.memory_space<vmem>>, vector<8x32xf32>,
    %461 = tpu.concatenate %439, %458 in 1 : vector<8x32xf32>, vector<8x32xf32> -> vector<8x64xf32>
    %cst_111 = arith.constant dense<0.000000e+00> : vector<8x256xf32>
    %462 = tpu.matmul %461, %411, %cst_111 {dimension_numbers = #tpu.dot_dimension_numbers<[1], [0], [0], [1], [0, 0, 1, 1], [], []>} : vector<8x64xf32>, vector<64x256xf32>, vector<8x256xf32> -> vector<8x256xf32>
    %463 = vector.extract_strided_slice %410 {offsets = [8, 0], sizes = [8, 128], strides = [1, 1]} : vector<64x256xf32> to vector<8x128xf32>
    %464 = vector.extract_strided_slice %462 {offsets = [0, 0], sizes = [8, 128], strides = [1, 1]} : vector<8x256xf32> to vector<8x128xf32>
    %465 = arith.addf %463, %464 : vector<8x128xf32>
    %466 = vector.extract_strided_slice %410 {offsets = [48, 128], sizes = [8, 128], strides = [1, 1]} : vector<64x256xf32> to vector<8x128xf32>
    %467 = vector.extract_strided_slice %462 {offsets = [0, 128], sizes = [8, 128], strides = [1, 1]} : vector<8x256xf32> to vector<8x128xf32>
    %468 = arith.addf %466, %467 : vector<8x128xf32>
    %469 = arith.negf %465 : vector<8x128xf32>
    %470 = math.exp %469 : vector<8x128xf32>
    %cst_112 = arith.constant 1.000000e+00 : f32
    %471 = vector.broadcast %cst_112 : f32 to vector<8x128xf32>
    %472 = arith.addf %471, %470 : vector<8x128xf32>
    %473 = arith.divf %471, %472 : vector<8x128xf32>
    %cst_113 = arith.constant 2.000000e+00 : f32
    %474 = vector.broadcast %cst_113 : f32 to vector<8x128xf32>
    %475 = arith.mulf %474, %473 : vector<8x128xf32>
    %cst_114 = arith.constant 1.000000e+00 : f32
    %476 = vector.broadcast %cst_114 : f32 to vector<8x128xf32>
    %477 = arith.subf %475, %476 : vector<8x128xf32>
    %478 = arith.select %13, %477, %473 : vector<8x128xi1>, vector<8x128xf32>
    %479 = vector.extract_strided_slice %478 {offsets = [0, 32], sizes = [8, 32], strides = [1, 1]} : vector<8x128xf32> to vector<8x32xf32>
    %480 = arith.mulf %479, %436 : vector<8x32xf32>
    %481 = vector.extract_strided_slice %478 {offsets = [0, 0], sizes = [8, 32], strides = [1, 1]} : vector<8x128xf32> to vector<8x32xf32>
    %482 = vector.extract_strided_slice %478 {offsets = [0, 64], sizes = [8, 32], strides = [1, 1]} : vector<8x128xf32> to vector<8x32xf32>
    %483 = arith.mulf %481, %482 : vector<8x32xf32>
    %484 = arith.addf %480, %483 : vector<8x32xf32>
    %485 = vector.extract_strided_slice %478 {offsets = [0, 96], sizes = [8, 32], strides = [1, 1]} : vector<8x128xf32> to vector<8x32xf32>
    %486 = math.tanh %484 : vector<8x32xf32>
    %487 = arith.mulf %485, %486 : vector<8x32xf32>
    %488 = arith.negf %468 : vector<8x128xf32>
    %489 = math.exp %488 : vector<8x128xf32>
    %cst_115 = arith.constant 1.000000e+00 : f32
    %490 = vector.broadcast %cst_115 : f32 to vector<8x128xf32>
    %491 = arith.addf %490, %489 : vector<8x128xf32>
    %492 = arith.divf %490, %491 : vector<8x128xf32>
    %cst_116 = arith.constant 2.000000e+00 : f32
    %493 = vector.broadcast %cst_116 : f32 to vector<8x128xf32>
    %494 = arith.mulf %493, %492 : vector<8x128xf32>
    %cst_117 = arith.constant 1.000000e+00 : f32
    %495 = vector.broadcast %cst_117 : f32 to vector<8x128xf32>
    %496 = arith.subf %494, %495 : vector<8x128xf32>
    %497 = arith.select %13, %496, %492 : vector<8x128xi1>, vector<8x128xf32>
    %498 = vector.extract_strided_slice %497 {offsets = [0, 32], sizes = [8, 32], strides = [1, 1]} : vector<8x128xf32> to vector<8x32xf32>
    %499 = arith.mulf %498, %455 : vector<8x32xf32>
    %500 = vector.extract_strided_slice %497 {offsets = [0, 0], sizes = [8, 32], strides = [1, 1]} : vector<8x128xf32> to vector<8x32xf32>
    %501 = vector.extract_strided_slice %497 {offsets = [0, 64], sizes = [8, 32], strides = [1, 1]} : vector<8x128xf32> to vector<8x32xf32>
    %502 = arith.mulf %500, %501 : vector<8x32xf32>
    %503 = arith.addf %499, %502 : vector<8x32xf32>
    %504 = vector.extract_strided_slice %497 {offsets = [0, 96], sizes = [8, 32], strides = [1, 1]} : vector<8x128xf32> to vector<8x32xf32>
    %505 = math.tanh %503 : vector<8x32xf32>
    %506 = arith.mulf %504, %505 : vector<8x32xf32>
    %c72 = arith.constant 72 : index
    %c0_118 = arith.constant 0 : index
    %507 = vector.load %arg13[%c72, %c0_118] : memref<128x64xf32, #tpu.memory_space<vmem>>, vector<8x32xf32>
    tpu.vector_store %arg13[%c72, %c0_118], %487 {strides = array<i32>} : memref<128x64xf32, #tpu.memory_space<vmem>>, vector<8x32xf32>,
    %c112 = arith.constant 112 : index
    %c32_119 = arith.constant 32 : index
    %508 = vector.load %arg13[%c112, %c32_119] : memref<128x64xf32, #tpu.memory_space<vmem>>, vector<8x32xf32>
    tpu.vector_store %arg13[%c112, %c32_119], %506 {strides = array<i32>} : memref<128x64xf32, #tpu.memory_space<vmem>>, vector<8x32xf32>,
    %509 = tpu.concatenate %487, %506 in 1 : vector<8x32xf32>, vector<8x32xf32> -> vector<8x64xf32>
    %cst_120 = arith.constant dense<0.000000e+00> : vector<8x256xf32>
    %510 = tpu.matmul %509, %411, %cst_120 {dimension_numbers = #tpu.dot_dimension_numbers<[1], [0], [0], [1], [0, 0, 1, 1], [], []>} : vector<8x64xf32>, vector<64x256xf32>, vector<8x256xf32> -> vector<8x256xf32>
    %511 = vector.extract_strided_slice %410 {offsets = [16, 0], sizes = [8, 128], strides = [1, 1]} : vector<64x256xf32> to vector<8x128xf32>
    %512 = vector.extract_strided_slice %510 {offsets = [0, 0], sizes = [8, 128], strides = [1, 1]} : vector<8x256xf32> to vector<8x128xf32>
    %513 = arith.addf %511, %512 : vector<8x128xf32>
    %514 = vector.extract_strided_slice %410 {offsets = [40, 128], sizes = [8, 128], strides = [1, 1]} : vector<64x256xf32> to vector<8x128xf32>
    %515 = vector.extract_strided_slice %510 {offsets = [0, 128], sizes = [8, 128], strides = [1, 1]} : vector<8x256xf32> to vector<8x128xf32>
    %516 = arith.addf %514, %515 : vector<8x128xf32>
    %517 = arith.negf %513 : vector<8x128xf32>
    %518 = math.exp %517 : vector<8x128xf32>
    %cst_121 = arith.constant 1.000000e+00 : f32
    %519 = vector.broadcast %cst_121 : f32 to vector<8x128xf32>
    %520 = arith.addf %519, %518 : vector<8x128xf32>
    %521 = arith.divf %519, %520 : vector<8x128xf32>
    %cst_122 = arith.constant 2.000000e+00 : f32
    %522 = vector.broadcast %cst_122 : f32 to vector<8x128xf32>
    %523 = arith.mulf %522, %521 : vector<8x128xf32>
    %cst_123 = arith.constant 1.000000e+00 : f32
    %524 = vector.broadcast %cst_123 : f32 to vector<8x128xf32>
    %525 = arith.subf %523, %524 : vector<8x128xf32>
    %526 = arith.select %13, %525, %521 : vector<8x128xi1>, vector<8x128xf32>
    %527 = vector.extract_strided_slice %526 {offsets = [0, 32], sizes = [8, 32], strides = [1, 1]} : vector<8x128xf32> to vector<8x32xf32>
    %528 = arith.mulf %527, %484 : vector<8x32xf32>
    %529 = vector.extract_strided_slice %526 {offsets = [0, 0], sizes = [8, 32], strides = [1, 1]} : vector<8x128xf32> to vector<8x32xf32>
    %530 = vector.extract_strided_slice %526 {offsets = [0, 64], sizes = [8, 32], strides = [1, 1]} : vector<8x128xf32> to vector<8x32xf32>
    %531 = arith.mulf %529, %530 : vector<8x32xf32>
    %532 = arith.addf %528, %531 : vector<8x32xf32>
    %533 = vector.extract_strided_slice %526 {offsets = [0, 96], sizes = [8, 32], strides = [1, 1]} : vector<8x128xf32> to vector<8x32xf32>
    %534 = math.tanh %532 : vector<8x32xf32>
    %535 = arith.mulf %533, %534 : vector<8x32xf32>
    %536 = arith.negf %516 : vector<8x128xf32>
    %537 = math.exp %536 : vector<8x128xf32>
    %cst_124 = arith.constant 1.000000e+00 : f32
    %538 = vector.broadcast %cst_124 : f32 to vector<8x128xf32>
    %539 = arith.addf %538, %537 : vector<8x128xf32>
    %540 = arith.divf %538, %539 : vector<8x128xf32>
    %cst_125 = arith.constant 2.000000e+00 : f32
    %541 = vector.broadcast %cst_125 : f32 to vector<8x128xf32>
    %542 = arith.mulf %541, %540 : vector<8x128xf32>
    %cst_126 = arith.constant 1.000000e+00 : f32
    %543 = vector.broadcast %cst_126 : f32 to vector<8x128xf32>
    %544 = arith.subf %542, %543 : vector<8x128xf32>
    %545 = arith.select %13, %544, %540 : vector<8x128xi1>, vector<8x128xf32>
    %546 = vector.extract_strided_slice %545 {offsets = [0, 32], sizes = [8, 32], strides = [1, 1]} : vector<8x128xf32> to vector<8x32xf32>
    %547 = arith.mulf %546, %503 : vector<8x32xf32>
    %548 = vector.extract_strided_slice %545 {offsets = [0, 0], sizes = [8, 32], strides = [1, 1]} : vector<8x128xf32> to vector<8x32xf32>
    %549 = vector.extract_strided_slice %545 {offsets = [0, 64], sizes = [8, 32], strides = [1, 1]} : vector<8x128xf32> to vector<8x32xf32>
    %550 = arith.mulf %548, %549 : vector<8x32xf32>
    %551 = arith.addf %547, %550 : vector<8x32xf32>
    %552 = vector.extract_strided_slice %545 {offsets = [0, 96], sizes = [8, 32], strides = [1, 1]} : vector<8x128xf32> to vector<8x32xf32>
    %553 = math.tanh %551 : vector<8x32xf32>
    %554 = arith.mulf %552, %553 : vector<8x32xf32>
    %c80 = arith.constant 80 : index
    %c0_127 = arith.constant 0 : index
    %555 = vector.load %arg13[%c80, %c0_127] : memref<128x64xf32, #tpu.memory_space<vmem>>, vector<8x32xf32>
    tpu.vector_store %arg13[%c80, %c0_127], %535 {strides = array<i32>} : memref<128x64xf32, #tpu.memory_space<vmem>>, vector<8x32xf32>,
    %c104 = arith.constant 104 : index
    %c32_128 = arith.constant 32 : index
    %556 = vector.load %arg13[%c104, %c32_128] : memref<128x64xf32, #tpu.memory_space<vmem>>, vector<8x32xf32>
    tpu.vector_store %arg13[%c104, %c32_128], %554 {strides = array<i32>} : memref<128x64xf32, #tpu.memory_space<vmem>>, vector<8x32xf32>,
    %557 = tpu.concatenate %535, %554 in 1 : vector<8x32xf32>, vector<8x32xf32> -> vector<8x64xf32>
    %cst_129 = arith.constant dense<0.000000e+00> : vector<8x256xf32>
    %558 = tpu.matmul %557, %411, %cst_129 {dimension_numbers = #tpu.dot_dimension_numbers<[1], [0], [0], [1], [0, 0, 1, 1], [], []>} : vector<8x64xf32>, vector<64x256xf32>, vector<8x256xf32> -> vector<8x256xf32>
    %559 = vector.extract_strided_slice %410 {offsets = [24, 0], sizes = [8, 128], strides = [1, 1]} : vector<64x256xf32> to vector<8x128xf32>
    %560 = vector.extract_strided_slice %558 {offsets = [0, 0], sizes = [8, 128], strides = [1, 1]} : vector<8x256xf32> to vector<8x128xf32>
    %561 = arith.addf %559, %560 : vector<8x128xf32>
    %562 = vector.extract_strided_slice %410 {offsets = [32, 128], sizes = [8, 128], strides = [1, 1]} : vector<64x256xf32> to vector<8x128xf32>
    %563 = vector.extract_strided_slice %558 {offsets = [0, 128], sizes = [8, 128], strides = [1, 1]} : vector<8x256xf32> to vector<8x128xf32>
    %564 = arith.addf %562, %563 : vector<8x128xf32>
    %565 = arith.negf %561 : vector<8x128xf32>
    %566 = math.exp %565 : vector<8x128xf32>
    %cst_130 = arith.constant 1.000000e+00 : f32
    %567 = vector.broadcast %cst_130 : f32 to vector<8x128xf32>
    %568 = arith.addf %567, %566 : vector<8x128xf32>
    %569 = arith.divf %567, %568 : vector<8x128xf32>
    %cst_131 = arith.constant 2.000000e+00 : f32
    %570 = vector.broadcast %cst_131 : f32 to vector<8x128xf32>
    %571 = arith.mulf %570, %569 : vector<8x128xf32>
    %cst_132 = arith.constant 1.000000e+00 : f32
    %572 = vector.broadcast %cst_132 : f32 to vector<8x128xf32>
    %573 = arith.subf %571, %572 : vector<8x128xf32>
    %574 = arith.select %13, %573, %569 : vector<8x128xi1>, vector<8x128xf32>
    %575 = vector.extract_strided_slice %574 {offsets = [0, 32], sizes = [8, 32], strides = [1, 1]} : vector<8x128xf32> to vector<8x32xf32>
    %576 = arith.mulf %575, %532 : vector<8x32xf32>
    %577 = vector.extract_strided_slice %574 {offsets = [0, 0], sizes = [8, 32], strides = [1, 1]} : vector<8x128xf32> to vector<8x32xf32>
    %578 = vector.extract_strided_slice %574 {offsets = [0, 64], sizes = [8, 32], strides = [1, 1]} : vector<8x128xf32> to vector<8x32xf32>
    %579 = arith.mulf %577, %578 : vector<8x32xf32>
    %580 = arith.addf %576, %579 : vector<8x32xf32>
    %581 = vector.extract_strided_slice %574 {offsets = [0, 96], sizes = [8, 32], strides = [1, 1]} : vector<8x128xf32> to vector<8x32xf32>
    %582 = math.tanh %580 : vector<8x32xf32>
    %583 = arith.mulf %581, %582 : vector<8x32xf32>
    %584 = arith.negf %564 : vector<8x128xf32>
    %585 = math.exp %584 : vector<8x128xf32>
    %cst_133 = arith.constant 1.000000e+00 : f32
    %586 = vector.broadcast %cst_133 : f32 to vector<8x128xf32>
    %587 = arith.addf %586, %585 : vector<8x128xf32>
    %588 = arith.divf %586, %587 : vector<8x128xf32>
    %cst_134 = arith.constant 2.000000e+00 : f32
    %589 = vector.broadcast %cst_134 : f32 to vector<8x128xf32>
    %590 = arith.mulf %589, %588 : vector<8x128xf32>
    %cst_135 = arith.constant 1.000000e+00 : f32
    %591 = vector.broadcast %cst_135 : f32 to vector<8x128xf32>
    %592 = arith.subf %590, %591 : vector<8x128xf32>
    %593 = arith.select %13, %592, %588 : vector<8x128xi1>, vector<8x128xf32>
    %594 = vector.extract_strided_slice %593 {offsets = [0, 32], sizes = [8, 32], strides = [1, 1]} : vector<8x128xf32> to vector<8x32xf32>
    %595 = arith.mulf %594, %551 : vector<8x32xf32>
    %596 = vector.extract_strided_slice %593 {offsets = [0, 0], sizes = [8, 32], strides = [1, 1]} : vector<8x128xf32> to vector<8x32xf32>
    %597 = vector.extract_strided_slice %593 {offsets = [0, 64], sizes = [8, 32], strides = [1, 1]} : vector<8x128xf32> to vector<8x32xf32>
    %598 = arith.mulf %596, %597 : vector<8x32xf32>
    %599 = arith.addf %595, %598 : vector<8x32xf32>
    %600 = vector.extract_strided_slice %593 {offsets = [0, 96], sizes = [8, 32], strides = [1, 1]} : vector<8x128xf32> to vector<8x32xf32>
    %601 = math.tanh %599 : vector<8x32xf32>
    %602 = arith.mulf %600, %601 : vector<8x32xf32>
    %c88 = arith.constant 88 : index
    %c0_136 = arith.constant 0 : index
    %603 = vector.load %arg13[%c88, %c0_136] : memref<128x64xf32, #tpu.memory_space<vmem>>, vector<8x32xf32>
    tpu.vector_store %arg13[%c88, %c0_136], %583 {strides = array<i32>} : memref<128x64xf32, #tpu.memory_space<vmem>>, vector<8x32xf32>,
    %c96 = arith.constant 96 : index
    %c32_137 = arith.constant 32 : index
    %604 = vector.load %arg13[%c96, %c32_137] : memref<128x64xf32, #tpu.memory_space<vmem>>, vector<8x32xf32>
    tpu.vector_store %arg13[%c96, %c32_137], %602 {strides = array<i32>} : memref<128x64xf32, #tpu.memory_space<vmem>>, vector<8x32xf32>,
    %605 = tpu.concatenate %583, %602 in 1 : vector<8x32xf32>, vector<8x32xf32> -> vector<8x64xf32>
    %cst_138 = arith.constant dense<0.000000e+00> : vector<8x256xf32>
    %606 = tpu.matmul %605, %411, %cst_138 {dimension_numbers = #tpu.dot_dimension_numbers<[1], [0], [0], [1], [0, 0, 1, 1], [], []>} : vector<8x64xf32>, vector<64x256xf32>, vector<8x256xf32> -> vector<8x256xf32>
    %607 = vector.extract_strided_slice %410 {offsets = [32, 0], sizes = [8, 128], strides = [1, 1]} : vector<64x256xf32> to vector<8x128xf32>
    %608 = vector.extract_strided_slice %606 {offsets = [0, 0], sizes = [8, 128], strides = [1, 1]} : vector<8x256xf32> to vector<8x128xf32>
    %609 = arith.addf %607, %608 : vector<8x128xf32>
    %610 = vector.extract_strided_slice %410 {offsets = [24, 128], sizes = [8, 128], strides = [1, 1]} : vector<64x256xf32> to vector<8x128xf32>
    %611 = vector.extract_strided_slice %606 {offsets = [0, 128], sizes = [8, 128], strides = [1, 1]} : vector<8x256xf32> to vector<8x128xf32>
    %612 = arith.addf %610, %611 : vector<8x128xf32>
    %613 = arith.negf %609 : vector<8x128xf32>
    %614 = math.exp %613 : vector<8x128xf32>
    %cst_139 = arith.constant 1.000000e+00 : f32
    %615 = vector.broadcast %cst_139 : f32 to vector<8x128xf32>
    %616 = arith.addf %615, %614 : vector<8x128xf32>
    %617 = arith.divf %615, %616 : vector<8x128xf32>
    %cst_140 = arith.constant 2.000000e+00 : f32
    %618 = vector.broadcast %cst_140 : f32 to vector<8x128xf32>
    %619 = arith.mulf %618, %617 : vector<8x128xf32>
    %cst_141 = arith.constant 1.000000e+00 : f32
    %620 = vector.broadcast %cst_141 : f32 to vector<8x128xf32>
    %621 = arith.subf %619, %620 : vector<8x128xf32>
    %622 = arith.select %13, %621, %617 : vector<8x128xi1>, vector<8x128xf32>
    %623 = vector.extract_strided_slice %622 {offsets = [0, 32], sizes = [8, 32], strides = [1, 1]} : vector<8x128xf32> to vector<8x32xf32>
    %624 = arith.mulf %623, %580 : vector<8x32xf32>
    %625 = vector.extract_strided_slice %622 {offsets = [0, 0], sizes = [8, 32], strides = [1, 1]} : vector<8x128xf32> to vector<8x32xf32>
    %626 = vector.extract_strided_slice %622 {offsets = [0, 64], sizes = [8, 32], strides = [1, 1]} : vector<8x128xf32> to vector<8x32xf32>
    %627 = arith.mulf %625, %626 : vector<8x32xf32>
    %628 = arith.addf %624, %627 : vector<8x32xf32>
    %629 = vector.extract_strided_slice %622 {offsets = [0, 96], sizes = [8, 32], strides = [1, 1]} : vector<8x128xf32> to vector<8x32xf32>
    %630 = math.tanh %628 : vector<8x32xf32>
    %631 = arith.mulf %629, %630 : vector<8x32xf32>
    %632 = arith.negf %612 : vector<8x128xf32>
    %633 = math.exp %632 : vector<8x128xf32>
    %cst_142 = arith.constant 1.000000e+00 : f32
    %634 = vector.broadcast %cst_142 : f32 to vector<8x128xf32>
    %635 = arith.addf %634, %633 : vector<8x128xf32>
    %636 = arith.divf %634, %635 : vector<8x128xf32>
    %cst_143 = arith.constant 2.000000e+00 : f32
    %637 = vector.broadcast %cst_143 : f32 to vector<8x128xf32>
    %638 = arith.mulf %637, %636 : vector<8x128xf32>
    %cst_144 = arith.constant 1.000000e+00 : f32
    %639 = vector.broadcast %cst_144 : f32 to vector<8x128xf32>
    %640 = arith.subf %638, %639 : vector<8x128xf32>
    %641 = arith.select %13, %640, %636 : vector<8x128xi1>, vector<8x128xf32>
    %642 = vector.extract_strided_slice %641 {offsets = [0, 32], sizes = [8, 32], strides = [1, 1]} : vector<8x128xf32> to vector<8x32xf32>
    %643 = arith.mulf %642, %599 : vector<8x32xf32>
    %644 = vector.extract_strided_slice %641 {offsets = [0, 0], sizes = [8, 32], strides = [1, 1]} : vector<8x128xf32> to vector<8x32xf32>
    %645 = vector.extract_strided_slice %641 {offsets = [0, 64], sizes = [8, 32], strides = [1, 1]} : vector<8x128xf32> to vector<8x32xf32>
    %646 = arith.mulf %644, %645 : vector<8x32xf32>
    %647 = arith.addf %643, %646 : vector<8x32xf32>
    %648 = vector.extract_strided_slice %641 {offsets = [0, 96], sizes = [8, 32], strides = [1, 1]} : vector<8x128xf32> to vector<8x32xf32>
    %649 = math.tanh %647 : vector<8x32xf32>
    %650 = arith.mulf %648, %649 : vector<8x32xf32>
    %c96_145 = arith.constant 96 : index
    %c0_146 = arith.constant 0 : index
    %651 = vector.load %arg13[%c96_145, %c0_146] : memref<128x64xf32, #tpu.memory_space<vmem>>, vector<8x32xf32>
    tpu.vector_store %arg13[%c96_145, %c0_146], %631 {strides = array<i32>} : memref<128x64xf32, #tpu.memory_space<vmem>>, vector<8x32xf32>,
    %c88_147 = arith.constant 88 : index
    %c32_148 = arith.constant 32 : index
    %652 = vector.load %arg13[%c88_147, %c32_148] : memref<128x64xf32, #tpu.memory_space<vmem>>, vector<8x32xf32>
    tpu.vector_store %arg13[%c88_147, %c32_148], %650 {strides = array<i32>} : memref<128x64xf32, #tpu.memory_space<vmem>>, vector<8x32xf32>,
    %653 = tpu.concatenate %631, %650 in 1 : vector<8x32xf32>, vector<8x32xf32> -> vector<8x64xf32>
    %cst_149 = arith.constant dense<0.000000e+00> : vector<8x256xf32>
    %654 = tpu.matmul %653, %411, %cst_149 {dimension_numbers = #tpu.dot_dimension_numbers<[1], [0], [0], [1], [0, 0, 1, 1], [], []>} : vector<8x64xf32>, vector<64x256xf32>, vector<8x256xf32> -> vector<8x256xf32>
    %655 = vector.extract_strided_slice %410 {offsets = [40, 0], sizes = [8, 128], strides = [1, 1]} : vector<64x256xf32> to vector<8x128xf32>
    %656 = vector.extract_strided_slice %654 {offsets = [0, 0], sizes = [8, 128], strides = [1, 1]} : vector<8x256xf32> to vector<8x128xf32>
    %657 = arith.addf %655, %656 : vector<8x128xf32>
    %658 = vector.extract_strided_slice %410 {offsets = [16, 128], sizes = [8, 128], strides = [1, 1]} : vector<64x256xf32> to vector<8x128xf32>
    %659 = vector.extract_strided_slice %654 {offsets = [0, 128], sizes = [8, 128], strides = [1, 1]} : vector<8x256xf32> to vector<8x128xf32>
    %660 = arith.addf %658, %659 : vector<8x128xf32>
    %661 = arith.negf %657 : vector<8x128xf32>
    %662 = math.exp %661 : vector<8x128xf32>
    %cst_150 = arith.constant 1.000000e+00 : f32
    %663 = vector.broadcast %cst_150 : f32 to vector<8x128xf32>
    %664 = arith.addf %663, %662 : vector<8x128xf32>
    %665 = arith.divf %663, %664 : vector<8x128xf32>
    %cst_151 = arith.constant 2.000000e+00 : f32
    %666 = vector.broadcast %cst_151 : f32 to vector<8x128xf32>
    %667 = arith.mulf %666, %665 : vector<8x128xf32>
    %cst_152 = arith.constant 1.000000e+00 : f32
    %668 = vector.broadcast %cst_152 : f32 to vector<8x128xf32>
    %669 = arith.subf %667, %668 : vector<8x128xf32>
    %670 = arith.select %13, %669, %665 : vector<8x128xi1>, vector<8x128xf32>
    %671 = vector.extract_strided_slice %670 {offsets = [0, 32], sizes = [8, 32], strides = [1, 1]} : vector<8x128xf32> to vector<8x32xf32>
    %672 = arith.mulf %671, %628 : vector<8x32xf32>
    %673 = vector.extract_strided_slice %670 {offsets = [0, 0], sizes = [8, 32], strides = [1, 1]} : vector<8x128xf32> to vector<8x32xf32>
    %674 = vector.extract_strided_slice %670 {offsets = [0, 64], sizes = [8, 32], strides = [1, 1]} : vector<8x128xf32> to vector<8x32xf32>
    %675 = arith.mulf %673, %674 : vector<8x32xf32>
    %676 = arith.addf %672, %675 : vector<8x32xf32>
    %677 = vector.extract_strided_slice %670 {offsets = [0, 96], sizes = [8, 32], strides = [1, 1]} : vector<8x128xf32> to vector<8x32xf32>
    %678 = math.tanh %676 : vector<8x32xf32>
    %679 = arith.mulf %677, %678 : vector<8x32xf32>
    %680 = arith.negf %660 : vector<8x128xf32>
    %681 = math.exp %680 : vector<8x128xf32>
    %cst_153 = arith.constant 1.000000e+00 : f32
    %682 = vector.broadcast %cst_153 : f32 to vector<8x128xf32>
    %683 = arith.addf %682, %681 : vector<8x128xf32>
    %684 = arith.divf %682, %683 : vector<8x128xf32>
    %cst_154 = arith.constant 2.000000e+00 : f32
    %685 = vector.broadcast %cst_154 : f32 to vector<8x128xf32>
    %686 = arith.mulf %685, %684 : vector<8x128xf32>
    %cst_155 = arith.constant 1.000000e+00 : f32
    %687 = vector.broadcast %cst_155 : f32 to vector<8x128xf32>
    %688 = arith.subf %686, %687 : vector<8x128xf32>
    %689 = arith.select %13, %688, %684 : vector<8x128xi1>, vector<8x128xf32>
    %690 = vector.extract_strided_slice %689 {offsets = [0, 32], sizes = [8, 32], strides = [1, 1]} : vector<8x128xf32> to vector<8x32xf32>
    %691 = arith.mulf %690, %647 : vector<8x32xf32>
    %692 = vector.extract_strided_slice %689 {offsets = [0, 0], sizes = [8, 32], strides = [1, 1]} : vector<8x128xf32> to vector<8x32xf32>
    %693 = vector.extract_strided_slice %689 {offsets = [0, 64], sizes = [8, 32], strides = [1, 1]} : vector<8x128xf32> to vector<8x32xf32>
    %694 = arith.mulf %692, %693 : vector<8x32xf32>
    %695 = arith.addf %691, %694 : vector<8x32xf32>
    %696 = vector.extract_strided_slice %689 {offsets = [0, 96], sizes = [8, 32], strides = [1, 1]} : vector<8x128xf32> to vector<8x32xf32>
    %697 = math.tanh %695 : vector<8x32xf32>
    %698 = arith.mulf %696, %697 : vector<8x32xf32>
    %c104_156 = arith.constant 104 : index
    %c0_157 = arith.constant 0 : index
    %699 = vector.load %arg13[%c104_156, %c0_157] : memref<128x64xf32, #tpu.memory_space<vmem>>, vector<8x32xf32>
    tpu.vector_store %arg13[%c104_156, %c0_157], %679 {strides = array<i32>} : memref<128x64xf32, #tpu.memory_space<vmem>>, vector<8x32xf32>,
    %c80_158 = arith.constant 80 : index
    %c32_159 = arith.constant 32 : index
    %700 = vector.load %arg13[%c80_158, %c32_159] : memref<128x64xf32, #tpu.memory_space<vmem>>, vector<8x32xf32>
    tpu.vector_store %arg13[%c80_158, %c32_159], %698 {strides = array<i32>} : memref<128x64xf32, #tpu.memory_space<vmem>>, vector<8x32xf32>,
    %701 = tpu.concatenate %679, %698 in 1 : vector<8x32xf32>, vector<8x32xf32> -> vector<8x64xf32>
    %cst_160 = arith.constant dense<0.000000e+00> : vector<8x256xf32>
    %702 = tpu.matmul %701, %411, %cst_160 {dimension_numbers = #tpu.dot_dimension_numbers<[1], [0], [0], [1], [0, 0, 1, 1], [], []>} : vector<8x64xf32>, vector<64x256xf32>, vector<8x256xf32> -> vector<8x256xf32>
    %703 = vector.extract_strided_slice %410 {offsets = [48, 0], sizes = [8, 128], strides = [1, 1]} : vector<64x256xf32> to vector<8x128xf32>
    %704 = vector.extract_strided_slice %702 {offsets = [0, 0], sizes = [8, 128], strides = [1, 1]} : vector<8x256xf32> to vector<8x128xf32>
    %705 = arith.addf %703, %704 : vector<8x128xf32>
    %706 = vector.extract_strided_slice %410 {offsets = [8, 128], sizes = [8, 128], strides = [1, 1]} : vector<64x256xf32> to vector<8x128xf32>
    %707 = vector.extract_strided_slice %702 {offsets = [0, 128], sizes = [8, 128], strides = [1, 1]} : vector<8x256xf32> to vector<8x128xf32>
    %708 = arith.addf %706, %707 : vector<8x128xf32>
    %709 = arith.negf %705 : vector<8x128xf32>
    %710 = math.exp %709 : vector<8x128xf32>
    %cst_161 = arith.constant 1.000000e+00 : f32
    %711 = vector.broadcast %cst_161 : f32 to vector<8x128xf32>
    %712 = arith.addf %711, %710 : vector<8x128xf32>
    %713 = arith.divf %711, %712 : vector<8x128xf32>
    %cst_162 = arith.constant 2.000000e+00 : f32
    %714 = vector.broadcast %cst_162 : f32 to vector<8x128xf32>
    %715 = arith.mulf %714, %713 : vector<8x128xf32>
    %cst_163 = arith.constant 1.000000e+00 : f32
    %716 = vector.broadcast %cst_163 : f32 to vector<8x128xf32>
    %717 = arith.subf %715, %716 : vector<8x128xf32>
    %718 = arith.select %13, %717, %713 : vector<8x128xi1>, vector<8x128xf32>
    %719 = vector.extract_strided_slice %718 {offsets = [0, 32], sizes = [8, 32], strides = [1, 1]} : vector<8x128xf32> to vector<8x32xf32>
    %720 = arith.mulf %719, %676 : vector<8x32xf32>
    %721 = vector.extract_strided_slice %718 {offsets = [0, 0], sizes = [8, 32], strides = [1, 1]} : vector<8x128xf32> to vector<8x32xf32>
    %722 = vector.extract_strided_slice %718 {offsets = [0, 64], sizes = [8, 32], strides = [1, 1]} : vector<8x128xf32> to vector<8x32xf32>
    %723 = arith.mulf %721, %722 : vector<8x32xf32>
    %724 = arith.addf %720, %723 : vector<8x32xf32>
    %725 = vector.extract_strided_slice %718 {offsets = [0, 96], sizes = [8, 32], strides = [1, 1]} : vector<8x128xf32> to vector<8x32xf32>
    %726 = math.tanh %724 : vector<8x32xf32>
    %727 = arith.mulf %725, %726 : vector<8x32xf32>
    %728 = arith.negf %708 : vector<8x128xf32>
    %729 = math.exp %728 : vector<8x128xf32>
    %cst_164 = arith.constant 1.000000e+00 : f32
    %730 = vector.broadcast %cst_164 : f32 to vector<8x128xf32>
    %731 = arith.addf %730, %729 : vector<8x128xf32>
    %732 = arith.divf %730, %731 : vector<8x128xf32>
    %cst_165 = arith.constant 2.000000e+00 : f32
    %733 = vector.broadcast %cst_165 : f32 to vector<8x128xf32>
    %734 = arith.mulf %733, %732 : vector<8x128xf32>
    %cst_166 = arith.constant 1.000000e+00 : f32
    %735 = vector.broadcast %cst_166 : f32 to vector<8x128xf32>
    %736 = arith.subf %734, %735 : vector<8x128xf32>
    %737 = arith.select %13, %736, %732 : vector<8x128xi1>, vector<8x128xf32>
    %738 = vector.extract_strided_slice %737 {offsets = [0, 32], sizes = [8, 32], strides = [1, 1]} : vector<8x128xf32> to vector<8x32xf32>
    %739 = arith.mulf %738, %695 : vector<8x32xf32>
    %740 = vector.extract_strided_slice %737 {offsets = [0, 0], sizes = [8, 32], strides = [1, 1]} : vector<8x128xf32> to vector<8x32xf32>
    %741 = vector.extract_strided_slice %737 {offsets = [0, 64], sizes = [8, 32], strides = [1, 1]} : vector<8x128xf32> to vector<8x32xf32>
    %742 = arith.mulf %740, %741 : vector<8x32xf32>
    %743 = arith.addf %739, %742 : vector<8x32xf32>
    %744 = vector.extract_strided_slice %737 {offsets = [0, 96], sizes = [8, 32], strides = [1, 1]} : vector<8x128xf32> to vector<8x32xf32>
    %745 = math.tanh %743 : vector<8x32xf32>
    %746 = arith.mulf %744, %745 : vector<8x32xf32>
    %c112_167 = arith.constant 112 : index
    %c0_168 = arith.constant 0 : index
    %747 = vector.load %arg13[%c112_167, %c0_168] : memref<128x64xf32, #tpu.memory_space<vmem>>, vector<8x32xf32>
    tpu.vector_store %arg13[%c112_167, %c0_168], %727 {strides = array<i32>} : memref<128x64xf32, #tpu.memory_space<vmem>>, vector<8x32xf32>,
    %c72_169 = arith.constant 72 : index
    %c32_170 = arith.constant 32 : index
    %748 = vector.load %arg13[%c72_169, %c32_170] : memref<128x64xf32, #tpu.memory_space<vmem>>, vector<8x32xf32>
    tpu.vector_store %arg13[%c72_169, %c32_170], %746 {strides = array<i32>} : memref<128x64xf32, #tpu.memory_space<vmem>>, vector<8x32xf32>,
    %749 = tpu.concatenate %727, %746 in 1 : vector<8x32xf32>, vector<8x32xf32> -> vector<8x64xf32>
    %cst_171 = arith.constant dense<0.000000e+00> : vector<8x256xf32>
    %750 = tpu.matmul %749, %411, %cst_171 {dimension_numbers = #tpu.dot_dimension_numbers<[1], [0], [0], [1], [0, 0, 1, 1], [], []>} : vector<8x64xf32>, vector<64x256xf32>, vector<8x256xf32> -> vector<8x256xf32>
    %751 = vector.extract_strided_slice %410 {offsets = [56, 0], sizes = [8, 128], strides = [1, 1]} : vector<64x256xf32> to vector<8x128xf32>
    %752 = vector.extract_strided_slice %750 {offsets = [0, 0], sizes = [8, 128], strides = [1, 1]} : vector<8x256xf32> to vector<8x128xf32>
    %753 = arith.addf %751, %752 : vector<8x128xf32>
    %754 = vector.extract_strided_slice %410 {offsets = [0, 128], sizes = [8, 128], strides = [1, 1]} : vector<64x256xf32> to vector<8x128xf32>
    %755 = vector.extract_strided_slice %750 {offsets = [0, 128], sizes = [8, 128], strides = [1, 1]} : vector<8x256xf32> to vector<8x128xf32>
    %756 = arith.addf %754, %755 : vector<8x128xf32>
    %757 = arith.negf %753 : vector<8x128xf32>
    %758 = math.exp %757 : vector<8x128xf32>
    %cst_172 = arith.constant 1.000000e+00 : f32
    %759 = vector.broadcast %cst_172 : f32 to vector<8x128xf32>
    %760 = arith.addf %759, %758 : vector<8x128xf32>
    %761 = arith.divf %759, %760 : vector<8x128xf32>
    %cst_173 = arith.constant 2.000000e+00 : f32
    %762 = vector.broadcast %cst_173 : f32 to vector<8x128xf32>
    %763 = arith.mulf %762, %761 : vector<8x128xf32>
    %cst_174 = arith.constant 1.000000e+00 : f32
    %764 = vector.broadcast %cst_174 : f32 to vector<8x128xf32>
    %765 = arith.subf %763, %764 : vector<8x128xf32>
    %766 = arith.select %13, %765, %761 : vector<8x128xi1>, vector<8x128xf32>
    %767 = vector.extract_strided_slice %766 {offsets = [0, 32], sizes = [8, 32], strides = [1, 1]} : vector<8x128xf32> to vector<8x32xf32>
    %768 = arith.mulf %767, %724 : vector<8x32xf32>
    %769 = vector.extract_strided_slice %766 {offsets = [0, 0], sizes = [8, 32], strides = [1, 1]} : vector<8x128xf32> to vector<8x32xf32>
    %770 = vector.extract_strided_slice %766 {offsets = [0, 64], sizes = [8, 32], strides = [1, 1]} : vector<8x128xf32> to vector<8x32xf32>
    %771 = arith.mulf %769, %770 : vector<8x32xf32>
    %772 = arith.addf %768, %771 : vector<8x32xf32>
    %773 = vector.extract_strided_slice %766 {offsets = [0, 96], sizes = [8, 32], strides = [1, 1]} : vector<8x128xf32> to vector<8x32xf32>
    %774 = math.tanh %772 : vector<8x32xf32>
    %775 = arith.mulf %773, %774 : vector<8x32xf32>
    %776 = arith.negf %756 : vector<8x128xf32>
    %777 = math.exp %776 : vector<8x128xf32>
    %cst_175 = arith.constant 1.000000e+00 : f32
    %778 = vector.broadcast %cst_175 : f32 to vector<8x128xf32>
    %779 = arith.addf %778, %777 : vector<8x128xf32>
    %780 = arith.divf %778, %779 : vector<8x128xf32>
    %cst_176 = arith.constant 2.000000e+00 : f32
    %781 = vector.broadcast %cst_176 : f32 to vector<8x128xf32>
    %782 = arith.mulf %781, %780 : vector<8x128xf32>
    %cst_177 = arith.constant 1.000000e+00 : f32
    %783 = vector.broadcast %cst_177 : f32 to vector<8x128xf32>
    %784 = arith.subf %782, %783 : vector<8x128xf32>
    %785 = arith.select %13, %784, %780 : vector<8x128xi1>, vector<8x128xf32>
    %786 = vector.extract_strided_slice %785 {offsets = [0, 32], sizes = [8, 32], strides = [1, 1]} : vector<8x128xf32> to vector<8x32xf32>
    %787 = arith.mulf %786, %743 : vector<8x32xf32>
    %788 = vector.extract_strided_slice %785 {offsets = [0, 0], sizes = [8, 32], strides = [1, 1]} : vector<8x128xf32> to vector<8x32xf32>
    %789 = vector.extract_strided_slice %785 {offsets = [0, 64], sizes = [8, 32], strides = [1, 1]} : vector<8x128xf32> to vector<8x32xf32>
    %790 = arith.mulf %788, %789 : vector<8x32xf32>
    %791 = arith.addf %787, %790 : vector<8x32xf32>
    %792 = vector.extract_strided_slice %785 {offsets = [0, 96], sizes = [8, 32], strides = [1, 1]} : vector<8x128xf32> to vector<8x32xf32>
    %793 = math.tanh %791 : vector<8x32xf32>
    %794 = arith.mulf %792, %793 : vector<8x32xf32>
    %c120_178 = arith.constant 120 : index
    %c0_179 = arith.constant 0 : index
    %795 = vector.load %arg13[%c120_178, %c0_179] : memref<128x64xf32, #tpu.memory_space<vmem>>, vector<8x32xf32>
    tpu.vector_store %arg13[%c120_178, %c0_179], %775 {strides = array<i32>} : memref<128x64xf32, #tpu.memory_space<vmem>>, vector<8x32xf32>,
    %c64_180 = arith.constant 64 : index
    %c32_181 = arith.constant 32 : index
    %796 = vector.load %arg13[%c64_180, %c32_181] : memref<128x64xf32, #tpu.memory_space<vmem>>, vector<8x32xf32>
    tpu.vector_store %arg13[%c64_180, %c32_181], %794 {strides = array<i32>} : memref<128x64xf32, #tpu.memory_space<vmem>>, vector<8x32xf32>,
    %c64_182 = arith.constant 64 : index
    %c0_183 = arith.constant 0 : index
    %797 = vector.load %arg13[%c64_182, %c0_183] : memref<128x64xf32, #tpu.memory_space<vmem>>, vector<64x64xf32>
    %c0_184 = arith.constant 0 : index
    %c0_185 = arith.constant 0 : index
    %798 = vector.load %arg8[%c0_184, %c0_185] : memref<96x64xf32, #tpu.memory_space<vmem>>, vector<64x64xf32>
    %cst_186 = arith.constant dense<0.000000e+00> : vector<64x64xf32>
    %799 = tpu.matmul %797, %798, %cst_186 {dimension_numbers = #tpu.dot_dimension_numbers<[1], [0], [0], [1], [0, 0, 1, 1], [], []>} : vector<64x64xf32>, vector<64x64xf32>, vector<64x64xf32> -> vector<64x64xf32>
    %c64_187 = arith.constant 64 : index
    %c0_188 = arith.constant 0 : index
    %800 = vector.load %arg8[%c64_187, %c0_188] : memref<96x64xf32, #tpu.memory_space<vmem>>, vector<32x64xf32>
    %cst_189 = arith.constant dense<0.000000e+00> : vector<64x64xf32>
    %801 = tpu.matmul %7, %800, %cst_189 {dimension_numbers = #tpu.dot_dimension_numbers<[1], [0], [0], [1], [0, 0, 1, 1], [], []>} : vector<64x32xf32>, vector<32x64xf32>, vector<64x64xf32> -> vector<64x64xf32>
    %802 = arith.addf %799, %801 : vector<64x64xf32>
    %c0_190 = arith.constant 0 : index
    %c0_191 = arith.constant 0 : index
    %803 = vector.load %arg9[%c0_190, %c0_191] : memref<1x64xf32, #tpu.memory_space<vmem>>, vector<1x64xf32>
    %804 = vector.broadcast %803 : vector<1x64xf32> to vector<64x64xf32>
    %805 = arith.addf %802, %804 : vector<64x64xf32>
    %806 = math.tanh %805 : vector<64x64xf32>
    %807 = vector.extract_strided_slice %806 {offsets = [0, 0], sizes = [8, 64], strides = [1, 1]} : vector<64x64xf32> to vector<8x64xf32>
    %808 = vector.extract_strided_slice %806 {offsets = [8, 0], sizes = [8, 64], strides = [1, 1]} : vector<64x64xf32> to vector<8x64xf32>
    %809 = arith.maximumf %807, %808 : vector<8x64xf32>
    %810 = vector.extract_strided_slice %806 {offsets = [16, 0], sizes = [8, 64], strides = [1, 1]} : vector<64x64xf32> to vector<8x64xf32>
    %811 = arith.maximumf %809, %810 : vector<8x64xf32>
    %812 = vector.extract_strided_slice %806 {offsets = [24, 0], sizes = [8, 64], strides = [1, 1]} : vector<64x64xf32> to vector<8x64xf32>
    %813 = arith.maximumf %811, %812 : vector<8x64xf32>
    %814 = vector.extract_strided_slice %806 {offsets = [32, 0], sizes = [8, 64], strides = [1, 1]} : vector<64x64xf32> to vector<8x64xf32>
    %815 = arith.maximumf %813, %814 : vector<8x64xf32>
    %816 = vector.extract_strided_slice %806 {offsets = [40, 0], sizes = [8, 64], strides = [1, 1]} : vector<64x64xf32> to vector<8x64xf32>
    %817 = arith.maximumf %815, %816 : vector<8x64xf32>
    %818 = vector.extract_strided_slice %806 {offsets = [48, 0], sizes = [8, 64], strides = [1, 1]} : vector<64x64xf32> to vector<8x64xf32>
    %819 = arith.maximumf %817, %818 : vector<8x64xf32>
    %820 = vector.extract_strided_slice %806 {offsets = [56, 0], sizes = [8, 64], strides = [1, 1]} : vector<64x64xf32> to vector<8x64xf32>
    %821 = arith.maximumf %819, %820 : vector<8x64xf32>
    %c0_192 = arith.constant 0 : index
    %c0_193 = arith.constant 0 : index
    %822 = vector.load %arg10[%c0_192, %c0_193] : memref<64x128xf32, #tpu.memory_space<vmem>>, vector<64x128xf32>
    %cst_194 = arith.constant dense<0.000000e+00> : vector<8x128xf32>
    %823 = tpu.matmul %821, %822, %cst_194 {dimension_numbers = #tpu.dot_dimension_numbers<[1], [0], [0], [1], [0, 0, 1, 1], [], []>} : vector<8x64xf32>, vector<64x128xf32>, vector<8x128xf32> -> vector<8x128xf32>
    %c0_195 = arith.constant 0 : index
    %c0_196 = arith.constant 0 : index
    %824 = vector.load %arg11[%c0_195, %c0_196] : memref<1x128xf32, #tpu.memory_space<vmem>>, vector<1x128xf32>
    %825 = vector.broadcast %824 : vector<1x128xf32> to vector<8x128xf32>
    %826 = arith.addf %823, %825 : vector<8x128xf32>
    %827 = tpu.iota {dimensions = array<i32: 1>} : vector<8x128xi32>
    %c4_i32 = arith.constant 4 : i32
    %828 = vector.broadcast %c4_i32 : i32 to vector<8x128xi32>
    %829 = arith.cmpi slt, %827, %828 : vector<8x128xi32>
    %cst_197 = arith.constant -1.000000e+30 : f32
    %830 = vector.broadcast %cst_197 : f32 to vector<8x128xf32>
    %831 = arith.select %829, %826, %830 : vector<8x128xi1>, vector<8x128xf32>
    %cst_198 = arith.constant dense<0xFF800000> : vector<8xf32>
    %832 = vector.multi_reduction <maximumf>, %831, %cst_198 [1] : vector<8x128xf32> to vector<8xf32>
    %833 = vector.shape_cast %832 : vector<8xf32> to vector<8x1xf32>
    %834 = vector.broadcast %833 : vector<8x1xf32> to vector<8x128xf32>
    %835 = arith.subf %831, %834 : vector<8x128xf32>
    %836 = math.exp %835 : vector<8x128xf32>
    %cst_199 = arith.constant dense<0.000000e+00> : vector<8xf32>
    %837 = vector.multi_reduction <add>, %836, %cst_199 [1] : vector<8x128xf32> to vector<8xf32>
    %838 = vector.shape_cast %837 : vector<8xf32> to vector<8x1xf32>
    %839 = tpu.reciprocal %838 : vector<8x1xf32> -> vector<8x1xf32>
    %840 = vector.broadcast %839 : vector<8x1xf32> to vector<8x128xf32>
    %841 = arith.mulf %836, %840 : vector<8x128xf32>
    %c0_200 = arith.constant 0 : index
    %c0_201 = arith.constant 0 : index
    %842 = vector.load %arg12[%c0_200, %c0_201] : memref<8x128xf32, #tpu.memory_space<vmem>>, vector<8x128xf32>
    tpu.vector_store %arg12[%c0_200, %c0_201], %841 {strides = array<i32>} : memref<8x128xf32, #tpu.memory_space<vmem>>, vector<8x128xf32>,
    return
  }
}

</mosaic_0001>

<llo_original>
// kernel: tpu_custom_call.1
$region0: #{tpu_custom_call.1}
  #allocation0 [shape = 'u32[]', space=smem, size = 0x4, offset = 0x4, fixed_abs, tag = 'smem constant byte address 0x4 - core index']
  #allocation1 [shape = 'u32[72,128]{1,0:T(1,128)}', space=vmem, size = 0x9000, scoped, tag = 'internal scratch']
  #allocation2 [shape = 'f32[128,64]{1,0:T(8,128)}', space=vmem, size = 0x10000, scoped, tag = 'scratch operand']
  %s0 = inlined_call_operand.vmem [shape: s32[64,1], index: 0, kind: input, shape index: {}]
  %s1 = inlined_call_operand.vmem [shape: f32[128,32], index: 1, kind: input, shape index: {}]
  %s2 = inlined_call_operand.hbm [shape: f32[32,256], index: 2, kind: input, shape index: {}]
  %s3 = inlined_call_operand.vmem [shape: f32[64,256], index: 3, kind: input, shape index: {}]
  %s4 = inlined_call_operand.vmem [shape: f32[1,256], index: 4, kind: input, shape index: {}]
  %s5 = inlined_call_operand.vmem [shape: f32[64,256], index: 5, kind: input, shape index: {}]
  %s6 = inlined_call_operand.hbm [shape: f32[64,256], index: 6, kind: input, shape index: {}]
  %s7 = inlined_call_operand.vmem [shape: f32[1,256], index: 7, kind: input, shape index: {}]
  %s8 = inlined_call_operand.vmem [shape: f32[96,64], index: 8, kind: input, shape index: {}]
  %s9 = inlined_call_operand.vmem [shape: f32[1,64], index: 9, kind: input, shape index: {}]
  %s10 = inlined_call_operand.hbm [shape: f32[64,128], index: 10, kind: input, shape index: {}]
  %s11 = inlined_call_operand.vmem [shape: f32[1,128], index: 11, kind: input, shape index: {}]
  %s12 = inlined_call_operand.hbm [shape: f32[8,128], index: 12, kind: output, shape index: {}]
  %s13 = sld [smem:[#allocation0]]
  $region70: #{tpu_custom_call.1} parent=0
    _
  %s15 = ssub.s32 1, %s13
  %s16 = scalar_select 0, %s15, %s13
  $region1: #{tpu_custom_call.1} parent=0
    #allocation3 [shape = 'u8[32768]{0}', space=vmem, size = 0x8000, scoped, tag = 'input window, operand 2, single buffered']
    #allocation4 [shape = 's32[1]{0}', space=sflag, size = 0x4, scoped, tag = 'scoped memory for tpu_custom_call.1']
    #allocation5 [shape = 's32[1]{0}', space=sflag, size = 0x4, scoped, tag = 'scoped memory for tpu_custom_call.1']
    #allocation6 [shape = 'u8[65536]{0}', space=vmem, size = 0x10000, scoped, tag = 'input window, operand 6, single buffered']
    #allocation7 [shape = 's32[1]{0}', space=sflag, size = 0x4, scoped, tag = 'scoped memory for tpu_custom_call.1']
    #allocation8 [shape = 'u8[32768]{0}', space=vmem, size = 0x8000, scoped, tag = 'input window, operand 10, single buffered']
    #allocation9 [shape = 'u8[4096]{0}', space=vmem, size = 0x1000, scoped, tag = 'output window, operand 0, single buffered']
    %17 = vsyncpa [#allocation4], 0
    %18 = vsyncpa [#allocation7], 0
    %19 = vsyncpa [#allocation5], 0
    // Predicated region
    $region2: #{tpu_custom_call.1} parent=1 // pred_check
      _
    $region3: #{tpu_custom_call.1} parent=1 // pred_check_branch
      %21 = sbr.rel (0) target = $region5
    $region4: #{tpu_custom_call.1} parent=1 // pred_region
      _
    $region5: #{tpu_custom_call.1} parent=1 // pred_fallthru
      _
    // Predicated region
    $region6: #{tpu_custom_call.1} parent=1 // pred_check
      _
    $region7: #{tpu_custom_call.1} parent=1 // pred_check_branch
      %23 = sbr.rel (0) target = $region9
    $region8: #{tpu_custom_call.1} parent=1 // pred_region
      _
    $region9: #{tpu_custom_call.1} parent=1 // pred_fallthru
      _
    // Predicated region
    $region10: #{tpu_custom_call.1} parent=1 // pred_check
      _
    $region11: #{tpu_custom_call.1} parent=1 // pred_check_branch
      %25 = sbr.rel (0) target = $region13
    $region12: #{tpu_custom_call.1} parent=1 // pred_region
      %27 = vsyncadd [#allocation4], 0
      %s28 = sshll.u32 %s2, 4
      %s29 = int_to_ptr.hbm [resolvable:$true] %s28
      %s30 = sshll.u32 [#allocation3], 4
      %s31 = int_to_ptr.vmem [resolvable:$true] %s30
      %36 = dma.hbm_to_vmem [thread:$0]  %s29, 1024, %s31, [#allocation4], 256, 256, 16
    $region13: #{tpu_custom_call.1} parent=1 // pred_fallthru
      _
    // Predicated region
    $region14: #{tpu_custom_call.1} parent=1 // pred_check
      _
    $region15: #{tpu_custom_call.1} parent=1 // pred_check_branch
      %38 = sbr.rel (0) target = $region17
    $region16: #{tpu_custom_call.1} parent=1 // pred_region
      _
    $region17: #{tpu_custom_call.1} parent=1 // pred_fallthru
      _
    // Predicated region
    $region18: #{tpu_custom_call.1} parent=1 // pred_check
      _
    $region19: #{tpu_custom_call.1} parent=1 // pred_check_branch
      %40 = sbr.rel (0) target = $region21
    $region20: #{tpu_custom_call.1} parent=1 // pred_region
      _
    $region21: #{tpu_custom_call.1} parent=1 // pred_fallthru
      _
    // Predicated region
    $region22: #{tpu_custom_call.1} parent=1 // pred_check
      _
    $region23: #{tpu_custom_call.1} parent=1 // pred_check_branch
      %42 = sbr.rel (0) target = $region25
    $region24: #{tpu_custom_call.1} parent=1 // pred_region
      _
    $region25: #{tpu_custom_call.1} parent=1 // pred_fallthru
      _
    // Predicated region
    $region26: #{tpu_custom_call.1} parent=1 // pred_check
      _
    $region27: #{tpu_custom_call.1} parent=1 // pred_check_branch
      %44 = sbr.rel (0) target = $region29
    $region28: #{tpu_custom_call.1} parent=1 // pred_region
      %46 = vsyncadd [#allocation7], 0
      %s47 = sshll.u32 %s6, 4
      %s48 = int_to_ptr.hbm [resolvable:$true] %s47
      %s49 = sshll.u32 [#allocation6], 4
      %s50 = int_to_ptr.vmem [resolvable:$true] %s49
      %55 = dma.hbm_to_vmem [thread:$0]  %s48, 2048, %s50, [#allocation7], 256, 256, 16
    $region29: #{tpu_custom_call.1} parent=1 // pred_fallthru
      _
    // Predicated region
    $region30: #{tpu_custom_call.1} parent=1 // pred_check
      _
    $region31: #{tpu_custom_call.1} parent=1 // pred_check_branch
      %57 = sbr.rel (0) target = $region33
    $region32: #{tpu_custom_call.1} parent=1 // pred_region
      _
    $region33: #{tpu_custom_call.1} parent=1 // pred_fallthru
      _
    // Predicated region
    $region34: #{tpu_custom_call.1} parent=1 // pred_check
      _
    $region35: #{tpu_custom_call.1} parent=1 // pred_check_branch
      %59 = sbr.rel (0) target = $region37
    $region36: #{tpu_custom_call.1} parent=1 // pred_region
      _
    $region37: #{tpu_custom_call.1} parent=1 // pred_fallthru
      _
    // Predicated region
    $region38: #{tpu_custom_call.1} parent=1 // pred_check
      _
    $region39: #{tpu_custom_call.1} parent=1 // pred_check_branch
      %61 = sbr.rel (0) target = $region41
    $region40: #{tpu_custom_call.1} parent=1 // pred_region
      _
    $region41: #{tpu_custom_call.1} parent=1 // pred_fallthru
      _
    // Predicated region
    $region42: #{tpu_custom_call.1} parent=1 // pred_check
      _
    $region43: #{tpu_custom_call.1} parent=1 // pred_check_branch
      %63 = sbr.rel (0) target = $region45
    $region44: #{tpu_custom_call.1} parent=1 // pred_region
      %65 = vsyncadd [#allocation7], 0
      %s66 = sshll.u32 %s10, 4
      %s67 = int_to_ptr.hbm [resolvable:$true] %s66
      %s68 = sshll.u32 [#allocation8], 4
      %s69 = int_to_ptr.vmem [resolvable:$true] %s68
      %74 = dma.hbm_to_vmem [thread:$0]  %s67, 1024, %s69, [#allocation7], 128, 128, 8
    $region45: #{tpu_custom_call.1} parent=1 // pred_fallthru
      _
    // Predicated region
    $region46: #{tpu_custom_call.1} parent=1 // pred_check
      _
    $region47: #{tpu_custom_call.1} parent=1 // pred_check_branch
      %76 = sbr.rel (0) target = $region49
    $region48: #{tpu_custom_call.1} parent=1 // pred_region
      _
    $region49: #{tpu_custom_call.1} parent=1 // pred_fallthru
      _
    // Predicated region
    $region50: #{tpu_custom_call.1} parent=1 // pred_check
      _
    $region51: #{tpu_custom_call.1} parent=1 // pred_check_branch
      %78 = sbr.rel (0) target = $region53
    $region52: #{tpu_custom_call.1} parent=1 // pred_region
      %80 = dma.done [#allocation4], 1024
    $region53: #{tpu_custom_call.1} parent=1 // pred_fallthru
      _
    // Predicated region
    $region54: #{tpu_custom_call.1} parent=1 // pred_check
      _
    $region55: #{tpu_custom_call.1} parent=1 // pred_check_branch
      %82 = sbr.rel (0) target = $region57
    $region56: #{tpu_custom_call.1} parent=1 // pred_region
      %84 = dma.done [#allocation7], 2048
    $region57: #{tpu_custom_call.1} parent=1 // pred_fallthru
      _
    // Predicated region
    $region58: #{tpu_custom_call.1} parent=1 // pred_check
      _
    $region59: #{tpu_custom_call.1} parent=1 // pred_check_branch
      %86 = sbr.rel (0) target = $region61
    $region60: #{tpu_custom_call.1} parent=1 // pred_region
      %88 = dma.done [#allocation7], 1024
    $region61: #{tpu_custom_call.1} parent=1 // pred_fallthru
      _
    %v89 = vld [vmem:[%s0] sm:$0xff]
    %v90 = vld [vmem:[%s0 + $0x8] sm:$0xff]
    %v91 = vld [vmem:[%s0 + $0x10] sm:$0xff]
    %v92 = vld [vmem:[%s0 + $0x18] sm:$0xff]
    %v93 = vld [vmem:[%s0 + $0x20] sm:$0xff]
    %v94 = vld [vmem:[%s0 + $0x28] sm:$0xff]
    %v95 = vld [vmem:[%s0 + $0x30] sm:$0xff]
    %v96 = vld [vmem:[%s0 + $0x38] sm:$0xff]
    %v97 = vlaneseq
    %v98 = vand.u32 %v97, 127
    %99 = vset.pattern.permute.xlu0 0
    %100 = vperm.xlu0 %99, %v89
    %v101 = vpop.permute.xlu0 %100
    %102 = vset.pattern.permute.xlu0 0
    %103 = vperm.xlu0 %102, %v90
    %v104 = vpop.permute.xlu0 %103
    %105 = vset.pattern.permute.xlu0 0
    %106 = vperm.xlu0 %105, %v91
    %v107 = vpop.permute.xlu0 %106
    %108 = vset.pattern.permute.xlu0 0
    %109 = vperm.xlu0 %108, %v92
    %v110 = vpop.permute.xlu0 %109
    %111 = vset.pattern.permute.xlu0 0
    %112 = vperm.xlu0 %111, %v93
    %v113 = vpop.permute.xlu0 %112
    %114 = vset.pattern.permute.xlu0 0
    %115 = vperm.xlu0 %114, %v94
    %v116 = vpop.permute.xlu0 %115
    %117 = vset.pattern.permute.xlu0 0
    %118 = vperm.xlu0 %117, %v95
    %v119 = vpop.permute.xlu0 %118
    %120 = vset.pattern.permute.xlu0 0
    %121 = vperm.xlu0 %120, %v96
    %v122 = vpop.permute.xlu0 %121
    %vm123 = vcmp.eq.s32.totalorder %v98, %v101
    %vm124 = vcmp.eq.s32.totalorder %v98, %v104
    %vm125 = vcmp.eq.s32.totalorder %v98, %v107
    %vm126 = vcmp.eq.s32.totalorder %v98, %v110
    %vm127 = vcmp.eq.s32.totalorder %v98, %v113
    %vm128 = vcmp.eq.s32.totalorder %v98, %v116
    %vm129 = vcmp.eq.s32.totalorder %v98, %v119
    %vm130 = vcmp.eq.s32.totalorder %v98, %v122
    %v131 = vsel %vm123, 1, 0
    %v132 = vsel %vm124, 1, 0
    %v133 = vsel %vm125, 1, 0
    %v134 = vsel %vm126, 1, 0
    %v135 = vsel %vm127, 1, 0
    %v136 = vsel %vm128, 1, 0
    %v137 = vsel %vm129, 1, 0
    %v138 = vsel %vm130, 1, 0
    %v139 = vcvt.s32.f32 %v131
    %v140 = vcvt.s32.f32 %v132
    %v141 = vcvt.s32.f32 %v133
    %v142 = vcvt.s32.f32 %v134
    %v143 = vcvt.s32.f32 %v135
    %v144 = vcvt.s32.f32 %v136
    %v145 = vcvt.s32.f32 %v137
    %v146 = vcvt.s32.f32 %v138
    %v147 = vld [vmem:[%s1] sm:$0xff]
    %v148 = vld [vmem:[%s1 + $0x8] sm:$0xff]
    %v149 = vld [vmem:[%s1 + $0x10] sm:$0xff]
    %v150 = vld [vmem:[%s1 + $0x18] sm:$0xff]
    %v151 = vld [vmem:[%s1 + $0x20] sm:$0xff]
    %v152 = vld [vmem:[%s1 + $0x28] sm:$0xff]
    %v153 = vld [vmem:[%s1 + $0x30] sm:$0xff]
    %v154 = vld [vmem:[%s1 + $0x38] sm:$0xff]
    %v155 = vld [vmem:[%s1 + $0x40] sm:$0xff]
    %v156 = vld [vmem:[%s1 + $0x48] sm:$0xff]
    %v157 = vld [vmem:[%s1 + $0x50] sm:$0xff]
    %v158 = vld [vmem:[%s1 + $0x58] sm:$0xff]
    %v159 = vld [vmem:[%s1 + $0x60] sm:$0xff]
    %v160 = vld [vmem:[%s1 + $0x68] sm:$0xff]
    %v161 = vld [vmem:[%s1 + $0x70] sm:$0xff]
    %v162 = vld [vmem:[%s1 + $0x78] sm:$0xff]
    %163 = vmatpush.msra.mxu0 %v162
    %164 = vmatpush.msra.mxu0 %v161
    %165 = vmatpush.msra.mxu0 %v160
    %166 = vmatpush.msra.mxu0 %v159
    %167 = vmatpush.msra.mxu0 %v158
    %168 = vmatpush.msra.mxu0 %v157
    %169 = vmatpush.msra.mxu0 %v156
    %170 = vmatpush.msra.mxu0 %v155
    %171 = vmatpush.msra.mxu0 %v154
    %172 = vmatpush.msra.mxu0 %v153
    %173 = vmatpush.msra.mxu0 %v152
    %174 = vmatpush.msra.mxu0 %v151
    %175 = vmatpush.msra.mxu0 %v150
    %176 = vmatpush.msra.mxu0 %v149
    %177 = vmatpush.msra.mxu0 %v148
    %178 = vmatpush.msra.mxu0 %v147
    %179 = vmatmul.f32.gmra.mxu0 %v139
    %v180 = vpop.f32.mrf.mxu0
    %v181 = vadd.f32 0.0, %v180
    %182 = vmatmul.f32.gmra.mxu0 %v140
    %v183 = vpop.f32.mrf.mxu0
    %v184 = vadd.f32 0.0, %v183
    %185 = vmatmul.f32.gmra.mxu0 %v141
    %v186 = vpop.f32.mrf.mxu0
    %v187 = vadd.f32 0.0, %v186
    %188 = vmatmul.f32.gmra.mxu0 %v142
    %v189 = vpop.f32.mrf.mxu0
    %v190 = vadd.f32 0.0, %v189
    %191 = vmatmul.f32.gmra.mxu0 %v143
    %v192 = vpop.f32.mrf.mxu0
    %v193 = vadd.f32 0.0, %v192
    %194 = vmatmul.f32.gmra.mxu0 %v144
    %v195 = vpop.f32.mrf.mxu0
    %v196 = vadd.f32 0.0, %v195
    %197 = vmatmul.f32.gmra.mxu0 %v145
    %v198 = vpop.f32.mrf.mxu0
    %v199 = vadd.f32 0.0, %v198
    %200 = vmatmul.f32.gmra.mxu0 %v146
    %v201 = vpop.f32.mrf.mxu0
    %v202 = vadd.f32 0.0, %v201
    %203 = vdwg.mxu0
    %vm204 = vcmp.ge.s32.totalorder %v98, 64
    %vm205 = vcmp.lt.s32.totalorder %v98, 96
    %vm206 = vmand %vm204, %vm205
    %v207 = vld [vmem:[#allocation3] sm:$0xff]
    %v208 = vld [vmem:[#allocation3 + $0x8] sm:$0xff]
    %v209 = vld [vmem:[#allocation3 + $0x10] sm:$0xff]
    %v210 = vld [vmem:[#allocation3 + $0x18] sm:$0xff]
    %v211 = vld [vmem:[#allocation3 + $0x20] sm:$0xff]
    %v212 = vld [vmem:[#allocation3 + $0x28] sm:$0xff]
    %v213 = vld [vmem:[#allocation3 + $0x30] sm:$0xff]
    %v214 = vld [vmem:[#allocation3 + $0x38] sm:$0xff]
    %v215 = vld [vmem:[%s4] sm:$0x3]
    %v217 = vperm.slane %v215, 0
    %v218 = vperm.slane %v215, 1
    %vm221 = vcmask 261120
    %v223 = vsel %vm221, %v181, 0
    %v226 = vsel %vm221, %v184, 0
    %v229 = vsel %vm221, %v187, 0
    %v232 = vsel %vm221, %v190, 0
    %v235 = vsel %vm221, %v193, 0
    %v238 = vsel %vm221, %v196, 0
    %v241 = vsel %vm221, %v199, 0
    %v244 = vsel %vm221, %v202, 0
    %246 = vmatpush.msra.mxu0 0.0
    %247 = vmatpush.msra.mxu0 0.0
    %248 = vmatpush.msra.mxu0 0.0
    %249 = vmatpush.msra.mxu0 0.0
    %250 = vmatpush.msra.mxu0 0.0
    %251 = vmatpush.msra.mxu0 0.0
    %252 = vmatpush.msra.mxu0 0.0
    %253 = vmatpush.msra.mxu0 0.0
    %254 = vmatpush.msra.mxu0 0.0
    %255 = vmatpush.msra.mxu0 0.0
    %256 = vmatpush.msra.mxu0 0.0
    %257 = vmatpush.msra.mxu0 0.0
    %258 = vmatpush.msra.mxu0 %v213
    %259 = vmatpush.msra.mxu0 %v211
    %260 = vmatpush.msra.mxu0 %v209
    %261 = vmatpush.msra.mxu0 %v207
    %262 = vmatmul.f32.gmra.mxu0 %v223
    %v263 = vpop.f32.mrf.mxu0
    %v264 = vadd.f32 %v217, %v263
    %265 = vmatmul.f32.gmra.mxu0 %v226
    %v266 = vpop.f32.mrf.mxu0
    %v267 = vadd.f32 %v217, %v266
    %268 = vmatmul.f32.gmra.mxu0 %v229
    %v269 = vpop.f32.mrf.mxu0
    %v270 = vadd.f32 %v217, %v269
    %271 = vmatmul.f32.gmra.mxu0 %v232
    %v272 = vpop.f32.mrf.mxu0
    %v273 = vadd.f32 %v217, %v272
    %274 = vmatmul.f32.gmra.mxu0 %v235
    %v275 = vpop.f32.mrf.mxu0
    %v276 = vadd.f32 %v217, %v275
    %277 = vmatmul.f32.gmra.mxu0 %v238
    %v278 = vpop.f32.mrf.mxu0
    %v279 = vadd.f32 %v217, %v278
    %280 = vmatmul.f32.gmra.mxu0 %v241
    %v281 = vpop.f32.mrf.mxu0
    %v282 = vadd.f32 %v217, %v281
    %283 = vmatmul.f32.gmra.mxu0 %v244
    %v284 = vpop.f32.mrf.mxu0
    %v285 = vadd.f32 %v217, %v284
    %286 = vdwg.mxu0
    %287 = vmatpush.msra.mxu0 0.0
    %288 = vmatpush.msra.mxu0 0.0
    %289 = vmatpush.msra.mxu0 0.0
    %290 = vmatpush.msra.mxu0 0.0
    %291 = vmatpush.msra.mxu0 0.0
    %292 = vmatpush.msra.mxu0 0.0
    %293 = vmatpush.msra.mxu0 0.0
    %294 = vmatpush.msra.mxu0 0.0
    %295 = vmatpush.msra.mxu0 0.0
    %296 = vmatpush.msra.mxu0 0.0
    %297 = vmatpush.msra.mxu0 0.0
    %298 = vmatpush.msra.mxu0 0.0
    %299 = vmatpush.msra.mxu0 %v214
    %300 = vmatpush.msra.mxu0 %v212
    %301 = vmatpush.msra.mxu0 %v210
    %302 = vmatpush.msra.mxu0 %v208
    %303 = vmatmul.f32.gmra.mxu0 %v223
    %v304 = vpop.f32.mrf.mxu0
    %v305 = vadd.f32 %v218, %v304
    %306 = vmatmul.f32.gmra.mxu0 %v226
    %v307 = vpop.f32.mrf.mxu0
    %v308 = vadd.f32 %v218, %v307
    %309 = vmatmul.f32.gmra.mxu0 %v229
    %v310 = vpop.f32.mrf.mxu0
    %v311 = vadd.f32 %v218, %v310
    %312 = vmatmul.f32.gmra.mxu0 %v232
    %v313 = vpop.f32.mrf.mxu0
    %v314 = vadd.f32 %v218, %v313
    %315 = vmatmul.f32.gmra.mxu0 %v235
    %v316 = vpop.f32.mrf.mxu0
    %v317 = vadd.f32 %v218, %v316
    %318 = vmatmul.f32.gmra.mxu0 %v238
    %v319 = vpop.f32.mrf.mxu0
    %v320 = vadd.f32 %v218, %v319
    %321 = vmatmul.f32.gmra.mxu0 %v241
    %v322 = vpop.f32.mrf.mxu0
    %v323 = vadd.f32 %v218, %v322
    %324 = vmatmul.f32.gmra.mxu0 %v244
    %v325 = vpop.f32.mrf.mxu0
    %v326 = vadd.f32 %v218, %v325
    %327 = vdwg.mxu0
    %v328 = vld [vmem:[%s3] sm:$0xff]
    %v329 = vld [vmem:[%s3 + $0x8] sm:$0xff]
    %v330 = vld [vmem:[%s3 + $0x10] sm:$0xff]
    %v331 = vld [vmem:[%s3 + $0x18] sm:$0xff]
    %v332 = vld [vmem:[%s3 + $0x20] sm:$0xff]
    %v333 = vld [vmem:[%s3 + $0x28] sm:$0xff]
    %v334 = vld [vmem:[%s3 + $0x30] sm:$0xff]
    %v335 = vld [vmem:[%s3 + $0x38] sm:$0xff]
    %v336 = vld [vmem:[%s3 + $0x40] sm:$0xff]
    %v337 = vld [vmem:[%s3 + $0x48] sm:$0xff]
    %v338 = vld [vmem:[%s3 + $0x50] sm:$0xff]
    %v339 = vld [vmem:[%s3 + $0x58] sm:$0xff]
    %v340 = vld [vmem:[%s3 + $0x60] sm:$0xff]
    %v341 = vld [vmem:[%s3 + $0x68] sm:$0xff]
    %v342 = vld [vmem:[%s3 + $0x70] sm:$0xff]
    %v343 = vld [vmem:[%s3 + $0x78] sm:$0xff]
    %vm344 = vcmask 523264
    %v346 = vsel %vm344, 0.0, 0
    %348 = vmatpush.msra.mxu0 0.0
    %349 = vmatpush.msra.mxu0 0.0
    %350 = vmatpush.msra.mxu0 0.0
    %351 = vmatpush.msra.mxu0 0.0
    %352 = vmatpush.msra.mxu0 0.0
    %353 = vmatpush.msra.mxu0 0.0
    %354 = vmatpush.msra.mxu0 0.0
    %355 = vmatpush.msra.mxu0 0.0
    %356 = vmatpush.msra.mxu0 %v342
    %357 = vmatpush.msra.mxu0 %v340
    %358 = vmatpush.msra.mxu0 %v338
    %359 = vmatpush.msra.mxu0 %v336
    %360 = vmatpush.msra.mxu0 %v334
    %361 = vmatpush.msra.mxu0 %v332
    %362 = vmatpush.msra.mxu0 %v330
    %363 = vmatpush.msra.mxu0 %v328
    %364 = vmatmul.f32.gmra.mxu0 %v346
    %v365 = vpop.f32.mrf.mxu0
    %v366 = vadd.f32 0.0, %v365
    %367 = vdwg.mxu0
    %368 = vmatpush.msra.mxu0 0.0
    %369 = vmatpush.msra.mxu0 0.0
    %370 = vmatpush.msra.mxu0 0.0
    %371 = vmatpush.msra.mxu0 0.0
    %372 = vmatpush.msra.mxu0 0.0
    %373 = vmatpush.msra.mxu0 0.0
    %374 = vmatpush.msra.mxu0 0.0
    %375 = vmatpush.msra.mxu0 0.0
    %376 = vmatpush.msra.mxu0 %v343
    %377 = vmatpush.msra.mxu0 %v341
    %378 = vmatpush.msra.mxu0 %v339
    %379 = vmatpush.msra.mxu0 %v337
    %380 = vmatpush.msra.mxu0 %v335
    %381 = vmatpush.msra.mxu0 %v333
    %382 = vmatpush.msra.mxu0 %v331
    %383 = vmatpush.msra.mxu0 %v329
    %384 = vmatmul.f32.gmra.mxu0 %v346
    %v385 = vpop.f32.mrf.mxu0
    %v386 = vadd.f32 0.0, %v385
    %387 = vdwg.mxu0
    %v388 = vadd.f32 %v264, %v366
    %v389 = vadd.f32 %v326, %v386
    %v390 = vxor.u32 %v388, 2147483648
    %v391 = vmul.f32 %v390, 1.442695
    %v392 = vpow.pop %v391
    %v393 = vadd.f32 %v392, 1.0
    %v394 = vrcp.pop %v393
    %v395 = vmul.f32 %v393, %v394
    %v396 = vsub.f32 1.0, %v395
    %v397 = vmul.f32 %v394, %v396
    %v398 = vadd.f32 %v394, %v397
    %vm399 = vweird.f32 %v393
    %vm400 = vweird.f32 %v394
    %vm401 = vmor %vm399, %vm400
    %v402 = vsel %vm401, %v394, %v398
    %v403 = vand.u32 2147483647, %v393
    %vm404 = vcmp.eq.f32.partialorder %v403, 8.507059e+37
    %v405 = vand.u32 %v393, 2147483648
    %v406 = vor.u32 1.1754944e-38, %v405
    %v407 = vsel %vm404, %v406, %v402
    %v408 = vmul.f32 1.0, %v407
    %v409 = vmul.f32 %v408, 2.0
    %v410 = vsub.f32 %v409, 1.0
    %v411 = vsel %vm206, %v410, %v408
    %v412 = vmul.f32 %v411, 0.0
    %414 = vrot.lane.b32.xlu0 %v411, 64
    %v415 = vpop.permute.xlu0 %414
    %v417 = vmul.f32 %v411, %v415
    %419 = vrot.lane.b32.xlu0 %v417, 32
    %v420 = vpop.permute.xlu0 %419
    %v422 = vadd.f32 %v412, %v420
    %v423 = vtanh.pop %v422
    %425 = vrot.lane.b32.xlu0 %v423, 64
    %v426 = vpop.permute.xlu0 %425
    %v428 = vmul.f32 %v411, %v426
    %v429 = vxor.u32 %v389, 2147483648
    %v430 = vmul.f32 %v429, 1.442695
    %v431 = vpow.pop %v430
    %v432 = vadd.f32 %v431, 1.0
    %v433 = vrcp.pop %v432
    %v434 = vmul.f32 %v432, %v433
    %v435 = vsub.f32 1.0, %v434
    %v436 = vmul.f32 %v433, %v435
    %v437 = vadd.f32 %v433, %v436
    %vm438 = vweird.f32 %v432
    %vm439 = vweird.f32 %v433
    %vm440 = vmor %vm438, %vm439
    %v441 = vsel %vm440, %v433, %v437
    %v442 = vand.u32 2147483647, %v432
    %vm443 = vcmp.eq.f32.partialorder %v442, 8.507059e+37
    %v444 = vand.u32 %v432, 2147483648
    %v445 = vor.u32 1.1754944e-38, %v444
    %v446 = vsel %vm443, %v445, %v441
    %v447 = vmul.f32 1.0, %v446
    %v448 = vmul.f32 %v447, 2.0
    %v449 = vsub.f32 %v448, 1.0
    %v450 = vsel %vm206, %v449, %v447
    %v451 = vmul.f32 %v450, 0.0
    %453 = vrot.lane.b32.xlu0 %v450, 64
    %v454 = vpop.permute.xlu0 %453
    %v456 = vmul.f32 %v450, %v454
    %458 = vrot.lane.b32.xlu0 %v456, 32
    %v459 = vpop.permute.xlu0 %458
    %v461 = vadd.f32 %v451, %v459
    %v462 = vtanh.pop %v461
    %464 = vrot.lane.b32.xlu0 %v462, 64
    %v465 = vpop.permute.xlu0 %464
    %v467 = vmul.f32 %v450, %v465
    %469 = vrot.lane.b32.xlu0 %v428, 32
    %v470 = vpop.permute.xlu0 %469
    %472 = vst.msk [vmem:[#allocation2] sm:$0xff] %vm221, %v470
    %474 = vrot.lane.b32.xlu0 %v467, 64
    %v475 = vpop.permute.xlu0 %474
    %vm477 = vcmask 523520
    %478 = vst.msk [vmem:[#allocation2 + $0x38] sm:$0xff] %vm477, %v475
    %v479 = vsel %vm221, %v470, %v475
    %v481 = vsel %vm344, %v479, 0
    %483 = vmatpush.msra.mxu0 0.0
    %484 = vmatpush.msra.mxu0 0.0
    %485 = vmatpush.msra.mxu0 0.0
    %486 = vmatpush.msra.mxu0 0.0
    %487 = vmatpush.msra.mxu0 0.0
    %488 = vmatpush.msra.mxu0 0.0
    %489 = vmatpush.msra.mxu0 0.0
    %490 = vmatpush.msra.mxu0 0.0
    %491 = vmatpush.msra.mxu0 %v342
    %492 = vmatpush.msra.mxu0 %v340
    %493 = vmatpush.msra.mxu0 %v338
    %494 = vmatpush.msra.mxu0 %v336
    %495 = vmatpush.msra.mxu0 %v334
    %496 = vmatpush.msra.mxu0 %v332
    %497 = vmatpush.msra.mxu0 %v330
    %498 = vmatpush.msra.mxu0 %v328
    %499 = vmatmul.f32.gmra.mxu0 %v481
    %v500 = vpop.f32.mrf.mxu0
    %v501 = vadd.f32 0.0, %v500
    %502 = vdwg.mxu0
    %503 = vmatpush.msra.mxu0 0.0
    %504 = vmatpush.msra.mxu0 0.0
    %505 = vmatpush.msra.mxu0 0.0
    %506 = vmatpush.msra.mxu0 0.0
    %507 = vmatpush.msra.mxu0 0.0
    %508 = vmatpush.msra.mxu0 0.0
    %509 = vmatpush.msra.mxu0 0.0
    %510 = vmatpush.msra.mxu0 0.0
    %511 = vmatpush.msra.mxu0 %v343
    %512 = vmatpush.msra.mxu0 %v341
    %513 = vmatpush.msra.mxu0 %v339
    %514 = vmatpush.msra.mxu0 %v337
    %515 = vmatpush.msra.mxu0 %v335
    %516 = vmatpush.msra.mxu0 %v333
    %517 = vmatpush.msra.mxu0 %v331
    %518 = vmatpush.msra.mxu0 %v329
    %519 = vmatmul.f32.gmra.mxu0 %v481
    %v520 = vpop.f32.mrf.mxu0
    %v521 = vadd.f32 0.0, %v520
    %522 = vdwg.mxu0
    %v523 = vadd.f32 %v267, %v501
    %v524 = vadd.f32 %v323, %v521
    %v525 = vxor.u32 %v523, 2147483648
    %v526 = vmul.f32 %v525, 1.442695
    %v527 = vpow.pop %v526
    %v528 = vadd.f32 %v527, 1.0
    %v529 = vrcp.pop %v528
    %v530 = vmul.f32 %v528, %v529
    %v531 = vsub.f32 1.0, %v530
    %v532 = vmul.f32 %v529, %v531
    %v533 = vadd.f32 %v529, %v532
    %vm534 = vweird.f32 %v528
    %vm535 = vweird.f32 %v529
    %vm536 = vmor %vm534, %vm535
    %v537 = vsel %vm536, %v529, %v533
    %v538 = vand.u32 2147483647, %v528
    %vm539 = vcmp.eq.f32.partialorder %v538, 8.507059e+37
    %v540 = vand.u32 %v528, 2147483648
    %v541 = vor.u32 1.1754944e-38, %v540
    %v542 = vsel %vm539, %v541, %v537
    %v543 = vmul.f32 1.0, %v542
    %v544 = vmul.f32 %v543, 2.0
    %v545 = vsub.f32 %v544, 1.0
    %v546 = vsel %vm206, %v545, %v543
    %v547 = vmul.f32 %v546, %v422
    %549 = vrot.lane.b32.xlu0 %v546, 64
    %v550 = vpop.permute.xlu0 %549
    %v552 = vmul.f32 %v546, %v550
    %554 = vrot.lane.b32.xlu0 %v552, 32
    %v555 = vpop.permute.xlu0 %554
    %v557 = vadd.f32 %v547, %v555
    %v558 = vtanh.pop %v557
    %560 = vrot.lane.b32.xlu0 %v558, 64
    %v561 = vpop.permute.xlu0 %560
    %v563 = vmul.f32 %v546, %v561
    %v564 = vxor.u32 %v524, 2147483648
    %v565 = vmul.f32 %v564, 1.442695
    %v566 = vpow.pop %v565
    %v567 = vadd.f32 %v566, 1.0
    %v568 = vrcp.pop %v567
    %v569 = vmul.f32 %v567, %v568
    %v570 = vsub.f32 1.0, %v569
    %v571 = vmul.f32 %v568, %v570
    %v572 = vadd.f32 %v568, %v571
    %vm573 = vweird.f32 %v567
    %vm574 = vweird.f32 %v568
    %vm575 = vmor %vm573, %vm574
    %v576 = vsel %vm575, %v568, %v572
    %v577 = vand.u32 2147483647, %v567
    %vm578 = vcmp.eq.f32.partialorder %v577, 8.507059e+37
    %v579 = vand.u32 %v567, 2147483648
    %v580 = vor.u32 1.1754944e-38, %v579
    %v581 = vsel %vm578, %v580, %v576
    %v582 = vmul.f32 1.0, %v581
    %v583 = vmul.f32 %v582, 2.0
    %v584 = vsub.f32 %v583, 1.0
    %v585 = vsel %vm206, %v584, %v582
    %v586 = vmul.f32 %v585, %v461
    %588 = vrot.lane.b32.xlu0 %v585, 64
    %v589 = vpop.permute.xlu0 %588
    %v591 = vmul.f32 %v585, %v589
    %593 = vrot.lane.b32.xlu0 %v591, 32
    %v594 = vpop.permute.xlu0 %593
    %v596 = vadd.f32 %v586, %v594
    %v597 = vtanh.pop %v596
    %599 = vrot.lane.b32.xlu0 %v597, 64
    %v600 = vpop.permute.xlu0 %599
    %v602 = vmul.f32 %v585, %v600
    %604 = vrot.lane.b32.xlu0 %v563, 32
    %v605 = vpop.permute.xlu0 %604
    %607 = vst.msk [vmem:[#allocation2 + $0x8] sm:$0xff] %vm221, %v605
    %609 = vrot.lane.b32.xlu0 %v602, 64
    %v610 = vpop.permute.xlu0 %609
    %612 = vst.msk [vmem:[#allocation2 + $0x30] sm:$0xff] %vm477, %v610
    %v613 = vsel %vm221, %v605, %v610
    %v615 = vsel %vm344, %v613, 0
    %617 = vmatpush.msra.mxu0 0.0
    %618 = vmatpush.msra.mxu0 0.0
    %619 = vmatpush.msra.mxu0 0.0
    %620 = vmatpush.msra.mxu0 0.0
    %621 = vmatpush.msra.mxu0 0.0
    %622 = vmatpush.msra.mxu0 0.0
    %623 = vmatpush.msra.mxu0 0.0
    %624 = vmatpush.msra.mxu0 0.0
    %625 = vmatpush.msra.mxu0 %v342
    %626 = vmatpush.msra.mxu0 %v340
    %627 = vmatpush.msra.mxu0 %v338
    %628 = vmatpush.msra.mxu0 %v336
    %629 = vmatpush.msra.mxu0 %v334
    %630 = vmatpush.msra.mxu0 %v332
    %631 = vmatpush.msra.mxu0 %v330
    %632 = vmatpush.msra.mxu0 %v328
    %633 = vmatmul.f32.gmra.mxu0 %v615
    %v634 = vpop.f32.mrf.mxu0
    %v635 = vadd.f32 0.0, %v634
    %636 = vdwg.mxu0
    %637 = vmatpush.msra.mxu0 0.0
    %638 = vmatpush.msra.mxu0 0.0
    %639 = vmatpush.msra.mxu0 0.0
    %640 = vmatpush.msra.mxu0 0.0
    %641 = vmatpush.msra.mxu0 0.0
    %642 = vmatpush.msra.mxu0 0.0
    %643 = vmatpush.msra.mxu0 0.0
    %644 = vmatpush.msra.mxu0 0.0
    %645 = vmatpush.msra.mxu0 %v343
    %646 = vmatpush.msra.mxu0 %v341
    %647 = vmatpush.msra.mxu0 %v339
    %648 = vmatpush.msra.mxu0 %v337
    %649 = vmatpush.msra.mxu0 %v335
    %650 = vmatpush.msra.mxu0 %v333
    %651 = vmatpush.msra.mxu0 %v331
    %652 = vmatpush.msra.mxu0 %v329
    %653 = vmatmul.f32.gmra.mxu0 %v615
    %v654 = vpop.f32.mrf.mxu0
    %v655 = vadd.f32 0.0, %v654
    %656 = vdwg.mxu0
    %v657 = vadd.f32 %v270, %v635
    %v658 = vadd.f32 %v320, %v655
    %v659 = vxor.u32 %v657, 2147483648
    %v660 = vmul.f32 %v659, 1.442695
    %v661 = vpow.pop %v660
    %v662 = vadd.f32 %v661, 1.0
    %v663 = vrcp.pop %v662
    %v664 = vmul.f32 %v662, %v663
    %v665 = vsub.f32 1.0, %v664
    %v666 = vmul.f32 %v663, %v665
    %v667 = vadd.f32 %v663, %v666
    %vm668 = vweird.f32 %v662
    %vm669 = vweird.f32 %v663
    %vm670 = vmor %vm668, %vm669
    %v671 = vsel %vm670, %v663, %v667
    %v672 = vand.u32 2147483647, %v662
    %vm673 = vcmp.eq.f32.partialorder %v672, 8.507059e+37
    %v674 = vand.u32 %v662, 2147483648
    %v675 = vor.u32 1.1754944e-38, %v674
    %v676 = vsel %vm673, %v675, %v671
    %v677 = vmul.f32 1.0, %v676
    %v678 = vmul.f32 %v677, 2.0
    %v679 = vsub.f32 %v678, 1.0
    %v680 = vsel %vm206, %v679, %v677
    %v681 = vmul.f32 %v680, %v557
    %683 = vrot.lane.b32.xlu0 %v680, 64
    %v684 = vpop.permute.xlu0 %683
    %v686 = vmul.f32 %v680, %v684
    %688 = vrot.lane.b32.xlu0 %v686, 32
    %v689 = vpop.permute.xlu0 %688
    %v691 = vadd.f32 %v681, %v689
    %v692 = vtanh.pop %v691
    %694 = vrot.lane.b32.xlu0 %v692, 64
    %v695 = vpop.permute.xlu0 %694
    %v697 = vmul.f32 %v680, %v695
    %v698 = vxor.u32 %v658, 2147483648
    %v699 = vmul.f32 %v698, 1.442695
    %v700 = vpow.pop %v699
    %v701 = vadd.f32 %v700, 1.0
    %v702 = vrcp.pop %v701
    %v703 = vmul.f32 %v701, %v702
    %v704 = vsub.f32 1.0, %v703
    %v705 = vmul.f32 %v702, %v704
    %v706 = vadd.f32 %v702, %v705
    %vm707 = vweird.f32 %v701
    %vm708 = vweird.f32 %v702
    %vm709 = vmor %vm707, %vm708
    %v710 = vsel %vm709, %v702, %v706
    %v711 = vand.u32 2147483647, %v701
    %vm712 = vcmp.eq.f32.partialorder %v711, 8.507059e+37
    %v713 = vand.u32 %v701, 2147483648
    %v714 = vor.u32 1.1754944e-38, %v713
    %v715 = vsel %vm712, %v714, %v710
    %v716 = vmul.f32 1.0, %v715
    %v717 = vmul.f32 %v716, 2.0
    %v718 = vsub.f32 %v717, 1.0
    %v719 = vsel %vm206, %v718, %v716
    %v720 = vmul.f32 %v719, %v596
    %722 = vrot.lane.b32.xlu0 %v719, 64
    %v723 = vpop.permute.xlu0 %722
    %v725 = vmul.f32 %v719, %v723
    %727 = vrot.lane.b32.xlu0 %v725, 32
    %v728 = vpop.permute.xlu0 %727
    %v730 = vadd.f32 %v720, %v728
    %v731 = vtanh.pop %v730
    %733 = vrot.lane.b32.xlu0 %v731, 64
    %v734 = vpop.permute.xlu0 %733
    %v736 = vmul.f32 %v719, %v734
    %738 = vrot.lane.b32.xlu0 %v697, 32
    %v739 = vpop.permute.xlu0 %738
    %741 = vst.msk [vmem:[#allocation2 + $0x10] sm:$0xff] %vm221, %v739
    %743 = vrot.lane.b32.xlu0 %v736, 64
    %v744 = vpop.permute.xlu0 %743
    %746 = vst.msk [vmem:[#allocation2 + $0x28] sm:$0xff] %vm477, %v744
    %v747 = vsel %vm221, %v739, %v744
    %v749 = vsel %vm344, %v747, 0
    %751 = vmatpush.msra.mxu0 0.0
    %752 = vmatpush.msra.mxu0 0.0
    %753 = vmatpush.msra.mxu0 0.0
    %754 = vmatpush.msra.mxu0 0.0
    %755 = vmatpush.msra.mxu0 0.0
    %756 = vmatpush.msra.mxu0 0.0
    %757 = vmatpush.msra.mxu0 0.0
    %758 = vmatpush.msra.mxu0 0.0
    %759 = vmatpush.msra.mxu0 %v342
    %760 = vmatpush.msra.mxu0 %v340
    %761 = vmatpush.msra.mxu0 %v338
    %762 = vmatpush.msra.mxu0 %v336
    %763 = vmatpush.msra.mxu0 %v334
    %764 = vmatpush.msra.mxu0 %v332
    %765 = vmatpush.msra.mxu0 %v330
    %766 = vmatpush.msra.mxu0 %v328
    %767 = vmatmul.f32.gmra.mxu0 %v749
    %v768 = vpop.f32.mrf.mxu0
    %v769 = vadd.f32 0.0, %v768
    %770 = vdwg.mxu0
    %771 = vmatpush.msra.mxu0 0.0
    %772 = vmatpush.msra.mxu0 0.0
    %773 = vmatpush.msra.mxu0 0.0
    %774 = vmatpush.msra.mxu0 0.0
    %775 = vmatpush.msra.mxu0 0.0
    %776 = vmatpush.msra.mxu0 0.0
    %777 = vmatpush.msra.mxu0 0.0
    %778 = vmatpush.msra.mxu0 0.0
    %779 = vmatpush.msra.mxu0 %v343
    %780 = vmatpush.msra.mxu0 %v341
    %781 = vmatpush.msra.mxu0 %v339
    %782 = vmatpush.msra.mxu0 %v337
    %783 = vmatpush.msra.mxu0 %v335
    %784 = vmatpush.msra.mxu0 %v333
    %785 = vmatpush.msra.mxu0 %v331
    %786 = vmatpush.msra.mxu0 %v329
    %787 = vmatmul.f32.gmra.mxu0 %v749
    %v788 = vpop.f32.mrf.mxu0
    %v789 = vadd.f32 0.0, %v788
    %790 = vdwg.mxu0
    %v791 = vadd.f32 %v273, %v769
    %v792 = vadd.f32 %v317, %v789
    %v793 = vxor.u32 %v791, 2147483648
    %v794 = vmul.f32 %v793, 1.442695
    %v795 = vpow.pop %v794
    %v796 = vadd.f32 %v795, 1.0
    %v797 = vrcp.pop %v796
    %v798 = vmul.f32 %v796, %v797
    %v799 = vsub.f32 1.0, %v798
    %v800 = vmul.f32 %v797, %v799
    %v801 = vadd.f32 %v797, %v800
    %vm802 = vweird.f32 %v796
    %vm803 = vweird.f32 %v797
    %vm804 = vmor %vm802, %vm803
    %v805 = vsel %vm804, %v797, %v801
    %v806 = vand.u32 2147483647, %v796
    %vm807 = vcmp.eq.f32.partialorder %v806, 8.507059e+37
    %v808 = vand.u32 %v796, 2147483648
    %v809 = vor.u32 1.1754944e-38, %v808
    %v810 = vsel %vm807, %v809, %v805
    %v811 = vmul.f32 1.0, %v810
    %v812 = vmul.f32 %v811, 2.0
    %v813 = vsub.f32 %v812, 1.0
    %v814 = vsel %vm206, %v813, %v811
    %v815 = vmul.f32 %v814, %v691
    %817 = vrot.lane.b32.xlu0 %v814, 64
    %v818 = vpop.permute.xlu0 %817
    %v820 = vmul.f32 %v814, %v818
    %822 = vrot.lane.b32.xlu0 %v820, 32
    %v823 = vpop.permute.xlu0 %822
    %v825 = vadd.f32 %v815, %v823
    %v826 = vtanh.pop %v825
    %828 = vrot.lane.b32.xlu0 %v826, 64
    %v829 = vpop.permute.xlu0 %828
    %v831 = vmul.f32 %v814, %v829
    %v832 = vxor.u32 %v792, 2147483648
    %v833 = vmul.f32 %v832, 1.442695
    %v834 = vpow.pop %v833
    %v835 = vadd.f32 %v834, 1.0
    %v836 = vrcp.pop %v835
    %v837 = vmul.f32 %v835, %v836
    %v838 = vsub.f32 1.0, %v837
    %v839 = vmul.f32 %v836, %v838
    %v840 = vadd.f32 %v836, %v839
    %vm841 = vweird.f32 %v835
    %vm842 = vweird.f32 %v836
    %vm843 = vmor %vm841, %vm842
    %v844 = vsel %vm843, %v836, %v840
    %v845 = vand.u32 2147483647, %v835
    %vm846 = vcmp.eq.f32.partialorder %v845, 8.507059e+37
    %v847 = vand.u32 %v835, 2147483648
    %v848 = vor.u32 1.1754944e-38, %v847
    %v849 = vsel %vm846, %v848, %v844
    %v850 = vmul.f32 1.0, %v849
    %v851 = vmul.f32 %v850, 2.0
    %v852 = vsub.f32 %v851, 1.0
    %v853 = vsel %vm206, %v852, %v850
    %v854 = vmul.f32 %v853, %v730
    %856 = vrot.lane.b32.xlu0 %v853, 64
    %v857 = vpop.permute.xlu0 %856
    %v859 = vmul.f32 %v853, %v857
    %861 = vrot.lane.b32.xlu0 %v859, 32
    %v862 = vpop.permute.xlu0 %861
    %v864 = vadd.f32 %v854, %v862
    %v865 = vtanh.pop %v864
    %867 = vrot.lane.b32.xlu0 %v865, 64
    %v868 = vpop.permute.xlu0 %867
    %v870 = vmul.f32 %v853, %v868
    %872 = vrot.lane.b32.xlu0 %v831, 32
    %v873 = vpop.permute.xlu0 %872
    %875 = vst.msk [vmem:[#allocation2 + $0x18] sm:$0xff] %vm221, %v873
    %877 = vrot.lane.b32.xlu0 %v870, 64
    %v878 = vpop.permute.xlu0 %877
    %880 = vst.msk [vmem:[#allocation2 + $0x20] sm:$0xff] %vm477, %v878
    %v881 = vsel %vm221, %v873, %v878
    %v883 = vsel %vm344, %v881, 0
    %885 = vmatpush.msra.mxu0 0.0
    %886 = vmatpush.msra.mxu0 0.0
    %887 = vmatpush.msra.mxu0 0.0
    %888 = vmatpush.msra.mxu0 0.0
    %889 = vmatpush.msra.mxu0 0.0
    %890 = vmatpush.msra.mxu0 0.0
    %891 = vmatpush.msra.mxu0 0.0
    %892 = vmatpush.msra.mxu0 0.0
    %893 = vmatpush.msra.mxu0 %v342
    %894 = vmatpush.msra.mxu0 %v340
    %895 = vmatpush.msra.mxu0 %v338
    %896 = vmatpush.msra.mxu0 %v336
    %897 = vmatpush.msra.mxu0 %v334
    %898 = vmatpush.msra.mxu0 %v332
    %899 = vmatpush.msra.mxu0 %v330
    %900 = vmatpush.msra.mxu0 %v328
    %901 = vmatmul.f32.gmra.mxu0 %v883
    %v902 = vpop.f32.mrf.mxu0
    %v903 = vadd.f32 0.0, %v902
    %904 = vdwg.mxu0
    %905 = vmatpush.msra.mxu0 0.0
    %906 = vmatpush.msra.mxu0 0.0
    %907 = vmatpush.msra.mxu0 0.0
    %908 = vmatpush.msra.mxu0 0.0
    %909 = vmatpush.msra.mxu0 0.0
    %910 = vmatpush.msra.mxu0 0.0
    %911 = vmatpush.msra.mxu0 0.0
    %912 = vmatpush.msra.mxu0 0.0
    %913 = vmatpush.msra.mxu0 %v343
    %914 = vmatpush.msra.mxu0 %v341
    %915 = vmatpush.msra.mxu0 %v339
    %916 = vmatpush.msra.mxu0 %v337
    %917 = vmatpush.msra.mxu0 %v335
    %918 = vmatpush.msra.mxu0 %v333
    %919 = vmatpush.msra.mxu0 %v331
    %920 = vmatpush.msra.mxu0 %v329
    %921 = vmatmul.f32.gmra.mxu0 %v883
    %v922 = vpop.f32.mrf.mxu0
    %v923 = vadd.f32 0.0, %v922
    %924 = vdwg.mxu0
    %v925 = vadd.f32 %v276, %v903
    %v926 = vadd.f32 %v314, %v923
    %v927 = vxor.u32 %v925, 2147483648
    %v928 = vmul.f32 %v927, 1.442695
    %v929 = vpow.pop %v928
    %v930 = vadd.f32 %v929, 1.0
    %v931 = vrcp.pop %v930
    %v932 = vmul.f32 %v930, %v931
    %v933 = vsub.f32 1.0, %v932
    %v934 = vmul.f32 %v931, %v933
    %v935 = vadd.f32 %v931, %v934
    %vm936 = vweird.f32 %v930
    %vm937 = vweird.f32 %v931
    %vm938 = vmor %vm936, %vm937
    %v939 = vsel %vm938, %v931, %v935
    %v940 = vand.u32 2147483647, %v930
    %vm941 = vcmp.eq.f32.partialorder %v940, 8.507059e+37
    %v942 = vand.u32 %v930, 2147483648
    %v943 = vor.u32 1.1754944e-38, %v942
    %v944 = vsel %vm941, %v943, %v939
    %v945 = vmul.f32 1.0, %v944
    %v946 = vmul.f32 %v945, 2.0
    %v947 = vsub.f32 %v946, 1.0
    %v948 = vsel %vm206, %v947, %v945
    %v949 = vmul.f32 %v948, %v825
    %951 = vrot.lane.b32.xlu0 %v948, 64
    %v952 = vpop.permute.xlu0 %951
    %v954 = vmul.f32 %v948, %v952
    %956 = vrot.lane.b32.xlu0 %v954, 32
    %v957 = vpop.permute.xlu0 %956
    %v959 = vadd.f32 %v949, %v957
    %v960 = vtanh.pop %v959
    %962 = vrot.lane.b32.xlu0 %v960, 64
    %v963 = vpop.permute.xlu0 %962
    %v965 = vmul.f32 %v948, %v963
    %v966 = vxor.u32 %v926, 2147483648
    %v967 = vmul.f32 %v966, 1.442695
    %v968 = vpow.pop %v967
    %v969 = vadd.f32 %v968, 1.0
    %v970 = vrcp.pop %v969
    %v971 = vmul.f32 %v969, %v970
    %v972 = vsub.f32 1.0, %v971
    %v973 = vmul.f32 %v970, %v972
    %v974 = vadd.f32 %v970, %v973
    %vm975 = vweird.f32 %v969
    %vm976 = vweird.f32 %v970
    %vm977 = vmor %vm975, %vm976
    %v978 = vsel %vm977, %v970, %v974
    %v979 = vand.u32 2147483647, %v969
    %vm980 = vcmp.eq.f32.partialorder %v979, 8.507059e+37
    %v981 = vand.u32 %v969, 2147483648
    %v982 = vor.u32 1.1754944e-38, %v981
    %v983 = vsel %vm980, %v982, %v978
    %v984 = vmul.f32 1.0, %v983
    %v985 = vmul.f32 %v984, 2.0
    %v986 = vsub.f32 %v985, 1.0
    %v987 = vsel %vm206, %v986, %v984
    %v988 = vmul.f32 %v987, %v864
    %990 = vrot.lane.b32.xlu0 %v987, 64
    %v991 = vpop.permute.xlu0 %990
    %v993 = vmul.f32 %v987, %v991
    %995 = vrot.lane.b32.xlu0 %v993, 32
    %v996 = vpop.permute.xlu0 %995
    %v998 = vadd.f32 %v988, %v996
    %v999 = vtanh.pop %v998
    %1001 = vrot.lane.b32.xlu0 %v999, 64
    %v1002 = vpop.permute.xlu0 %1001
    %v1004 = vmul.f32 %v987, %v1002
    %1006 = vrot.lane.b32.xlu0 %v965, 32
    %v1007 = vpop.permute.xlu0 %1006
    %1009 = vst.msk [vmem:[#allocation2 + $0x20] sm:$0xff] %vm221, %v1007
    %1011 = vrot.lane.b32.xlu0 %v1004, 64
    %v1012 = vpop.permute.xlu0 %1011
    %1014 = vst.msk [vmem:[#allocation2 + $0x18] sm:$0xff] %vm477, %v1012
    %v1015 = vsel %vm221, %v1007, %v1012
    %v1017 = vsel %vm344, %v1015, 0
    %1019 = vmatpush.msra.mxu0 0.0
    %1020 = vmatpush.msra.mxu0 0.0
    %1021 = vmatpush.msra.mxu0 0.0
    %1022 = vmatpush.msra.mxu0 0.0
    %1023 = vmatpush.msra.mxu0 0.0
    %1024 = vmatpush.msra.mxu0 0.0
    %1025 = vmatpush.msra.mxu0 0.0
    %1026 = vmatpush.msra.mxu0 0.0
    %1027 = vmatpush.msra.mxu0 %v342
    %1028 = vmatpush.msra.mxu0 %v340
    %1029 = vmatpush.msra.mxu0 %v338
    %1030 = vmatpush.msra.mxu0 %v336
    %1031 = vmatpush.msra.mxu0 %v334
    %1032 = vmatpush.msra.mxu0 %v332
    %1033 = vmatpush.msra.mxu0 %v330
    %1034 = vmatpush.msra.mxu0 %v328
    %1035 = vmatmul.f32.gmra.mxu0 %v1017
    %v1036 = vpop.f32.mrf.mxu0
    %v1037 = vadd.f32 0.0, %v1036
    %1038 = vdwg.mxu0
    %1039 = vmatpush.msra.mxu0 0.0
    %1040 = vmatpush.msra.mxu0 0.0
    %1041 = vmatpush.msra.mxu0 0.0
    %1042 = vmatpush.msra.mxu0 0.0
    %1043 = vmatpush.msra.mxu0 0.0
    %1044 = vmatpush.msra.mxu0 0.0
    %1045 = vmatpush.msra.mxu0 0.0
    %1046 = vmatpush.msra.mxu0 0.0
    %1047 = vmatpush.msra.mxu0 %v343
    %1048 = vmatpush.msra.mxu0 %v341
    %1049 = vmatpush.msra.mxu0 %v339
    %1050 = vmatpush.msra.mxu0 %v337
    %1051 = vmatpush.msra.mxu0 %v335
    %1052 = vmatpush.msra.mxu0 %v333
    %1053 = vmatpush.msra.mxu0 %v331
    %1054 = vmatpush.msra.mxu0 %v329
    %1055 = vmatmul.f32.gmra.mxu0 %v1017
    %v1056 = vpop.f32.mrf.mxu0
    %v1057 = vadd.f32 0.0, %v1056
    %1058 = vdwg.mxu0
    %v1059 = vadd.f32 %v279, %v1037
    %v1060 = vadd.f32 %v311, %v1057
    %v1061 = vxor.u32 %v1059, 2147483648
    %v1062 = vmul.f32 %v1061, 1.442695
    %v1063 = vpow.pop %v1062
    %v1064 = vadd.f32 %v1063, 1.0
    %v1065 = vrcp.pop %v1064
    %v1066 = vmul.f32 %v1064, %v1065
    %v1067 = vsub.f32 1.0, %v1066
    %v1068 = vmul.f32 %v1065, %v1067
    %v1069 = vadd.f32 %v1065, %v1068
    %vm1070 = vweird.f32 %v1064
    %vm1071 = vweird.f32 %v1065
    %vm1072 = vmor %vm1070, %vm1071
    %v1073 = vsel %vm1072, %v1065, %v1069
    %v1074 = vand.u32 2147483647, %v1064
    %vm1075 = vcmp.eq.f32.partialorder %v1074, 8.507059e+37
    %v1076 = vand.u32 %v1064, 2147483648
    %v1077 = vor.u32 1.1754944e-38, %v1076
    %v1078 = vsel %vm1075, %v1077, %v1073
    %v1079 = vmul.f32 1.0, %v1078
    %v1080 = vmul.f32 %v1079, 2.0
    %v1081 = vsub.f32 %v1080, 1.0
    %v1082 = vsel %vm206, %v1081, %v1079
    %v1083 = vmul.f32 %v1082, %v959
    %1085 = vrot.lane.b32.xlu0 %v1082, 64
    %v1086 = vpop.permute.xlu0 %1085
    %v1088 = vmul.f32 %v1082, %v1086
    %1090 = vrot.lane.b32.xlu0 %v1088, 32
    %v1091 = vpop.permute.xlu0 %1090
    %v1093 = vadd.f32 %v1083, %v1091
    %v1094 = vtanh.pop %v1093
    %1096 = vrot.lane.b32.xlu0 %v1094, 64
    %v1097 = vpop.permute.xlu0 %1096
    %v1099 = vmul.f32 %v1082, %v1097
    %v1100 = vxor.u32 %v1060, 2147483648
    %v1101 = vmul.f32 %v1100, 1.442695
    %v1102 = vpow.pop %v1101
    %v1103 = vadd.f32 %v1102, 1.0
    %v1104 = vrcp.pop %v1103
    %v1105 = vmul.f32 %v1103, %v1104
    %v1106 = vsub.f32 1.0, %v1105
    %v1107 = vmul.f32 %v1104, %v1106
    %v1108 = vadd.f32 %v1104, %v1107
    %vm1109 = vweird.f32 %v1103
    %vm1110 = vweird.f32 %v1104
    %vm1111 = vmor %vm1109, %vm1110
    %v1112 = vsel %vm1111, %v1104, %v1108
    %v1113 = vand.u32 2147483647, %v1103
    %vm1114 = vcmp.eq.f32.partialorder %v1113, 8.507059e+37
    %v1115 = vand.u32 %v1103, 2147483648
    %v1116 = vor.u32 1.1754944e-38, %v1115
    %v1117 = vsel %vm1114, %v1116, %v1112
    %v1118 = vmul.f32 1.0, %v1117
    %v1119 = vmul.f32 %v1118, 2.0
    %v1120 = vsub.f32 %v1119, 1.0
    %v1121 = vsel %vm206, %v1120, %v1118
    %v1122 = vmul.f32 %v1121, %v998
    %1124 = vrot.lane.b32.xlu0 %v1121, 64
    %v1125 = vpop.permute.xlu0 %1124
    %v1127 = vmul.f32 %v1121, %v1125
    %1129 = vrot.lane.b32.xlu0 %v1127, 32
    %v1130 = vpop.permute.xlu0 %1129
    %v1132 = vadd.f32 %v1122, %v1130
    %v1133 = vtanh.pop %v1132
    %1135 = vrot.lane.b32.xlu0 %v1133, 64
    %v1136 = vpop.permute.xlu0 %1135
    %v1138 = vmul.f32 %v1121, %v1136
    %1140 = vrot.lane.b32.xlu0 %v1099, 32
    %v1141 = vpop.permute.xlu0 %1140
    %1143 = vst.msk [vmem:[#allocation2 + $0x28] sm:$0xff] %vm221, %v1141
    %1145 = vrot.lane.b32.xlu0 %v1138, 64
    %v1146 = vpop.permute.xlu0 %1145
    %1148 = vst.msk [vmem:[#allocation2 + $0x10] sm:$0xff] %vm477, %v1146
    %v1149 = vsel %vm221, %v1141, %v1146
    %v1151 = vsel %vm344, %v1149, 0
    %1153 = vmatpush.msra.mxu0 0.0
    %1154 = vmatpush.msra.mxu0 0.0
    %1155 = vmatpush.msra.mxu0 0.0
    %1156 = vmatpush.msra.mxu0 0.0
    %1157 = vmatpush.msra.mxu0 0.0
    %1158 = vmatpush.msra.mxu0 0.0
    %1159 = vmatpush.msra.mxu0 0.0
    %1160 = vmatpush.msra.mxu0 0.0
    %1161 = vmatpush.msra.mxu0 %v342
    %1162 = vmatpush.msra.mxu0 %v340
    %1163 = vmatpush.msra.mxu0 %v338
    %1164 = vmatpush.msra.mxu0 %v336
    %1165 = vmatpush.msra.mxu0 %v334
    %1166 = vmatpush.msra.mxu0 %v332
    %1167 = vmatpush.msra.mxu0 %v330
    %1168 = vmatpush.msra.mxu0 %v328
    %1169 = vmatmul.f32.gmra.mxu0 %v1151
    %v1170 = vpop.f32.mrf.mxu0
    %v1171 = vadd.f32 0.0, %v1170
    %1172 = vdwg.mxu0
    %1173 = vmatpush.msra.mxu0 0.0
    %1174 = vmatpush.msra.mxu0 0.0
    %1175 = vmatpush.msra.mxu0 0.0
    %1176 = vmatpush.msra.mxu0 0.0
    %1177 = vmatpush.msra.mxu0 0.0
    %1178 = vmatpush.msra.mxu0 0.0
    %1179 = vmatpush.msra.mxu0 0.0
    %1180 = vmatpush.msra.mxu0 0.0
    %1181 = vmatpush.msra.mxu0 %v343
    %1182 = vmatpush.msra.mxu0 %v341
    %1183 = vmatpush.msra.mxu0 %v339
    %1184 = vmatpush.msra.mxu0 %v337
    %1185 = vmatpush.msra.mxu0 %v335
    %1186 = vmatpush.msra.mxu0 %v333
    %1187 = vmatpush.msra.mxu0 %v331
    %1188 = vmatpush.msra.mxu0 %v329
    %1189 = vmatmul.f32.gmra.mxu0 %v1151
    %v1190 = vpop.f32.mrf.mxu0
    %v1191 = vadd.f32 0.0, %v1190
    %1192 = vdwg.mxu0
    %v1193 = vadd.f32 %v282, %v1171
    %v1194 = vadd.f32 %v308, %v1191
    %v1195 = vxor.u32 %v1193, 2147483648
    %v1196 = vmul.f32 %v1195, 1.442695
    %v1197 = vpow.pop %v1196
    %v1198 = vadd.f32 %v1197, 1.0
    %v1199 = vrcp.pop %v1198
    %v1200 = vmul.f32 %v1198, %v1199
    %v1201 = vsub.f32 1.0, %v1200
    %v1202 = vmul.f32 %v1199, %v1201
    %v1203 = vadd.f32 %v1199, %v1202
    %vm1204 = vweird.f32 %v1198
    %vm1205 = vweird.f32 %v1199
    %vm1206 = vmor %vm1204, %vm1205
    %v1207 = vsel %vm1206, %v1199, %v1203
    %v1208 = vand.u32 2147483647, %v1198
    %vm1209 = vcmp.eq.f32.partialorder %v1208, 8.507059e+37
    %v1210 = vand.u32 %v1198, 2147483648
    %v1211 = vor.u32 1.1754944e-38, %v1210
    %v1212 = vsel %vm1209, %v1211, %v1207
    %v1213 = vmul.f32 1.0, %v1212
    %v1214 = vmul.f32 %v1213, 2.0
    %v1215 = vsub.f32 %v1214, 1.0
    %v1216 = vsel %vm206, %v1215, %v1213
    %v1217 = vmul.f32 %v1216, %v1093
    %1219 = vrot.lane.b32.xlu0 %v1216, 64
    %v1220 = vpop.permute.xlu0 %1219
    %v1222 = vmul.f32 %v1216, %v1220
    %1224 = vrot.lane.b32.xlu0 %v1222, 32
    %v1225 = vpop.permute.xlu0 %1224
    %v1227 = vadd.f32 %v1217, %v1225
    %v1228 = vtanh.pop %v1227
    %1230 = vrot.lane.b32.xlu0 %v1228, 64
    %v1231 = vpop.permute.xlu0 %1230
    %v1233 = vmul.f32 %v1216, %v1231
    %v1234 = vxor.u32 %v1194, 2147483648
    %v1235 = vmul.f32 %v1234, 1.442695
    %v1236 = vpow.pop %v1235
    %v1237 = vadd.f32 %v1236, 1.0
    %v1238 = vrcp.pop %v1237
    %v1239 = vmul.f32 %v1237, %v1238
    %v1240 = vsub.f32 1.0, %v1239
    %v1241 = vmul.f32 %v1238, %v1240
    %v1242 = vadd.f32 %v1238, %v1241
    %vm1243 = vweird.f32 %v1237
    %vm1244 = vweird.f32 %v1238
    %vm1245 = vmor %vm1243, %vm1244
    %v1246 = vsel %vm1245, %v1238, %v1242
    %v1247 = vand.u32 2147483647, %v1237
    %vm1248 = vcmp.eq.f32.partialorder %v1247, 8.507059e+37
    %v1249 = vand.u32 %v1237, 2147483648
    %v1250 = vor.u32 1.1754944e-38, %v1249
    %v1251 = vsel %vm1248, %v1250, %v1246
    %v1252 = vmul.f32 1.0, %v1251
    %v1253 = vmul.f32 %v1252, 2.0
    %v1254 = vsub.f32 %v1253, 1.0
    %v1255 = vsel %vm206, %v1254, %v1252
    %v1256 = vmul.f32 %v1255, %v1132
    %1258 = vrot.lane.b32.xlu0 %v1255, 64
    %v1259 = vpop.permute.xlu0 %1258
    %v1261 = vmul.f32 %v1255, %v1259
    %1263 = vrot.lane.b32.xlu0 %v1261, 32
    %v1264 = vpop.permute.xlu0 %1263
    %v1266 = vadd.f32 %v1256, %v1264
    %v1267 = vtanh.pop %v1266
    %1269 = vrot.lane.b32.xlu0 %v1267, 64
    %v1270 = vpop.permute.xlu0 %1269
    %v1272 = vmul.f32 %v1255, %v1270
    %1274 = vrot.lane.b32.xlu0 %v1233, 32
    %v1275 = vpop.permute.xlu0 %1274
    %1277 = vst.msk [vmem:[#allocation2 + $0x30] sm:$0xff] %vm221, %v1275
    %1279 = vrot.lane.b32.xlu0 %v1272, 64
    %v1280 = vpop.permute.xlu0 %1279
    %1282 = vst.msk [vmem:[#allocation2 + $0x8] sm:$0xff] %vm477, %v1280
    %v1283 = vsel %vm221, %v1275, %v1280
    %v1285 = vsel %vm344, %v1283, 0
    %1287 = vmatpush.msra.mxu0 0.0
    %1288 = vmatpush.msra.mxu0 0.0
    %1289 = vmatpush.msra.mxu0 0.0
    %1290 = vmatpush.msra.mxu0 0.0
    %1291 = vmatpush.msra.mxu0 0.0
    %1292 = vmatpush.msra.mxu0 0.0
    %1293 = vmatpush.msra.mxu0 0.0
    %1294 = vmatpush.msra.mxu0 0.0
    %1295 = vmatpush.msra.mxu0 %v342
    %1296 = vmatpush.msra.mxu0 %v340
    %1297 = vmatpush.msra.mxu0 %v338
    %1298 = vmatpush.msra.mxu0 %v336
    %1299 = vmatpush.msra.mxu0 %v334
    %1300 = vmatpush.msra.mxu0 %v332
    %1301 = vmatpush.msra.mxu0 %v330
    %1302 = vmatpush.msra.mxu0 %v328
    %1303 = vmatmul.f32.gmra.mxu0 %v1285
    %v1304 = vpop.f32.mrf.mxu0
    %v1305 = vadd.f32 0.0, %v1304
    %1306 = vdwg.mxu0
    %1307 = vmatpush.msra.mxu0 0.0
    %1308 = vmatpush.msra.mxu0 0.0
    %1309 = vmatpush.msra.mxu0 0.0
    %1310 = vmatpush.msra.mxu0 0.0
    %1311 = vmatpush.msra.mxu0 0.0
    %1312 = vmatpush.msra.mxu0 0.0
    %1313 = vmatpush.msra.mxu0 0.0
    %1314 = vmatpush.msra.mxu0 0.0
    %1315 = vmatpush.msra.mxu0 %v343
    %1316 = vmatpush.msra.mxu0 %v341
    %1317 = vmatpush.msra.mxu0 %v339
    %1318 = vmatpush.msra.mxu0 %v337
    %1319 = vmatpush.msra.mxu0 %v335
    %1320 = vmatpush.msra.mxu0 %v333
    %1321 = vmatpush.msra.mxu0 %v331
    %1322 = vmatpush.msra.mxu0 %v329
    %1323 = vmatmul.f32.gmra.mxu0 %v1285
    %v1324 = vpop.f32.mrf.mxu0
    %v1325 = vadd.f32 0.0, %v1324
    %1326 = vdwg.mxu0
    %v1327 = vadd.f32 %v285, %v1305
    %v1328 = vadd.f32 %v305, %v1325
    %v1329 = vxor.u32 %v1327, 2147483648
    %v1330 = vmul.f32 %v1329, 1.442695
    %v1331 = vpow.pop %v1330
    %v1332 = vadd.f32 %v1331, 1.0
    %v1333 = vrcp.pop %v1332
    %v1334 = vmul.f32 %v1332, %v1333
    %v1335 = vsub.f32 1.0, %v1334
    %v1336 = vmul.f32 %v1333, %v1335
    %v1337 = vadd.f32 %v1333, %v1336
    %vm1338 = vweird.f32 %v1332
    %vm1339 = vweird.f32 %v1333
    %vm1340 = vmor %vm1338, %vm1339
    %v1341 = vsel %vm1340, %v1333, %v1337
    %v1342 = vand.u32 2147483647, %v1332
    %vm1343 = vcmp.eq.f32.partialorder %v1342, 8.507059e+37
    %v1344 = vand.u32 %v1332, 2147483648
    %v1345 = vor.u32 1.1754944e-38, %v1344
    %v1346 = vsel %vm1343, %v1345, %v1341
    %v1347 = vmul.f32 1.0, %v1346
    %v1348 = vmul.f32 %v1347, 2.0
    %v1349 = vsub.f32 %v1348, 1.0
    %v1350 = vsel %vm206, %v1349, %v1347
    %v1351 = vmul.f32 %v1350, %v1227
    %1353 = vrot.lane.b32.xlu0 %v1350, 64
    %v1354 = vpop.permute.xlu0 %1353
    %v1356 = vmul.f32 %v1350, %v1354
    %1358 = vrot.lane.b32.xlu0 %v1356, 32
    %v1359 = vpop.permute.xlu0 %1358
    %v1361 = vadd.f32 %v1351, %v1359
    %v1362 = vtanh.pop %v1361
    %1364 = vrot.lane.b32.xlu0 %v1362, 64
    %v1365 = vpop.permute.xlu0 %1364
    %v1367 = vmul.f32 %v1350, %v1365
    %v1368 = vxor.u32 %v1328, 2147483648
    %v1369 = vmul.f32 %v1368, 1.442695
    %v1370 = vpow.pop %v1369
    %v1371 = vadd.f32 %v1370, 1.0
    %v1372 = vrcp.pop %v1371
    %v1373 = vmul.f32 %v1371, %v1372
    %v1374 = vsub.f32 1.0, %v1373
    %v1375 = vmul.f32 %v1372, %v1374
    %v1376 = vadd.f32 %v1372, %v1375
    %vm1377 = vweird.f32 %v1371
    %vm1378 = vweird.f32 %v1372
    %vm1379 = vmor %vm1377, %vm1378
    %v1380 = vsel %vm1379, %v1372, %v1376
    %v1381 = vand.u32 2147483647, %v1371
    %vm1382 = vcmp.eq.f32.partialorder %v1381, 8.507059e+37
    %v1383 = vand.u32 %v1371, 2147483648
    %v1384 = vor.u32 1.1754944e-38, %v1383
    %v1385 = vsel %vm1382, %v1384, %v1380
    %v1386 = vmul.f32 1.0, %v1385
    %v1387 = vmul.f32 %v1386, 2.0
    %v1388 = vsub.f32 %v1387, 1.0
    %v1389 = vsel %vm206, %v1388, %v1386
    %v1390 = vmul.f32 %v1389, %v1266
    %1392 = vrot.lane.b32.xlu0 %v1389, 64
    %v1393 = vpop.permute.xlu0 %1392
    %v1395 = vmul.f32 %v1389, %v1393
    %1397 = vrot.lane.b32.xlu0 %v1395, 32
    %v1398 = vpop.permute.xlu0 %1397
    %v1400 = vadd.f32 %v1390, %v1398
    %v1401 = vtanh.pop %v1400
    %1403 = vrot.lane.b32.xlu0 %v1401, 64
    %v1404 = vpop.permute.xlu0 %1403
    %v1406 = vmul.f32 %v1389, %v1404
    %1408 = vrot.lane.b32.xlu0 %v1367, 32
    %v1409 = vpop.permute.xlu0 %1408
    %1411 = vst.msk [vmem:[#allocation2 + $0x38] sm:$0xff] %vm221, %v1409
    %1413 = vrot.lane.b32.xlu0 %v1406, 64
    %v1414 = vpop.permute.xlu0 %1413
    %1416 = vst.msk [vmem:[#allocation2] sm:$0xff] %vm477, %v1414
    %v1417 = vld [vmem:[#allocation2] sm:$0xff]
    %v1418 = vld [vmem:[#allocation2 + $0x8] sm:$0xff]
    %v1419 = vld [vmem:[#allocation2 + $0x10] sm:$0xff]
    %v1420 = vld [vmem:[#allocation2 + $0x18] sm:$0xff]
    %v1421 = vld [vmem:[#allocation2 + $0x20] sm:$0xff]
    %v1422 = vld [vmem:[#allocation2 + $0x28] sm:$0xff]
    %v1423 = vld [vmem:[#allocation2 + $0x30] sm:$0xff]
    %v1424 = vld [vmem:[#allocation2 + $0x38] sm:$0xff]
    %v1425 = vld [vmem:[%s5] sm:$0xff]
    %v1426 = vld [vmem:[%s5 + $0x8] sm:$0xff]
    %v1427 = vld [vmem:[%s5 + $0x10] sm:$0xff]
    %v1428 = vld [vmem:[%s5 + $0x18] sm:$0xff]
    %v1429 = vld [vmem:[%s5 + $0x20] sm:$0xff]
    %v1430 = vld [vmem:[%s5 + $0x28] sm:$0xff]
    %v1431 = vld [vmem:[%s5 + $0x30] sm:$0xff]
    %v1432 = vld [vmem:[%s5 + $0x38] sm:$0xff]
    %v1433 = vld [vmem:[%s5 + $0x40] sm:$0xff]
    %v1434 = vld [vmem:[%s5 + $0x48] sm:$0xff]
    %v1435 = vld [vmem:[%s5 + $0x50] sm:$0xff]
    %v1436 = vld [vmem:[%s5 + $0x58] sm:$0xff]
    %v1437 = vld [vmem:[%s5 + $0x60] sm:$0xff]
    %v1438 = vld [vmem:[%s5 + $0x68] sm:$0xff]
    %v1439 = vld [vmem:[%s5 + $0x70] sm:$0xff]
    %v1440 = vld [vmem:[%s5 + $0x78] sm:$0xff]
    %v1441 = vld [vmem:[%s7] sm:$0x3]
    %v1443 = vperm.slane %v1441, 0
    %v1444 = vperm.slane %v1441, 1
    %v1448 = vsel %vm344, %v1417, 0
    %v1451 = vsel %vm344, %v1418, 0
    %v1454 = vsel %vm344, %v1419, 0
    %v1457 = vsel %vm344, %v1420, 0
    %v1460 = vsel %vm344, %v1421, 0
    %v1463 = vsel %vm344, %v1422, 0
    %v1466 = vsel %vm344, %v1423, 0
    %v1469 = vsel %vm344, %v1424, 0
    %1471 = vmatpush.msra.mxu0 0.0
    %1472 = vmatpush.msra.mxu0 0.0
    %1473 = vmatpush.msra.mxu0 0.0
    %1474 = vmatpush.msra.mxu0 0.0
    %1475 = vmatpush.msra.mxu0 0.0
    %1476 = vmatpush.msra.mxu0 0.0
    %1477 = vmatpush.msra.mxu0 0.0
    %1478 = vmatpush.msra.mxu0 0.0
    %1479 = vmatpush.msra.mxu0 %v1439
    %1480 = vmatpush.msra.mxu0 %v1437
    %1481 = vmatpush.msra.mxu0 %v1435
    %1482 = vmatpush.msra.mxu0 %v1433
    %1483 = vmatpush.msra.mxu0 %v1431
    %1484 = vmatpush.msra.mxu0 %v1429
    %1485 = vmatpush.msra.mxu0 %v1427
    %1486 = vmatpush.msra.mxu0 %v1425
    %1487 = vmatmul.f32.gmra.mxu0 %v1448
    %v1488 = vpop.f32.mrf.mxu0
    %v1489 = vadd.f32 %v1443, %v1488
    %1490 = vmatmul.f32.gmra.mxu0 %v1451
    %v1491 = vpop.f32.mrf.mxu0
    %v1492 = vadd.f32 %v1443, %v1491
    %1493 = vmatmul.f32.gmra.mxu0 %v1454
    %v1494 = vpop.f32.mrf.mxu0
    %v1495 = vadd.f32 %v1443, %v1494
    %1496 = vmatmul.f32.gmra.mxu0 %v1457
    %v1497 = vpop.f32.mrf.mxu0
    %v1498 = vadd.f32 %v1443, %v1497
    %1499 = vmatmul.f32.gmra.mxu0 %v1460
    %v1500 = vpop.f32.mrf.mxu0
    %v1501 = vadd.f32 %v1443, %v1500
    %1502 = vmatmul.f32.gmra.mxu0 %v1463
    %v1503 = vpop.f32.mrf.mxu0
    %v1504 = vadd.f32 %v1443, %v1503
    %1505 = vmatmul.f32.gmra.mxu0 %v1466
    %v1506 = vpop.f32.mrf.mxu0
    %v1507 = vadd.f32 %v1443, %v1506
    %1508 = vmatmul.f32.gmra.mxu0 %v1469
    %v1509 = vpop.f32.mrf.mxu0
    %v1510 = vadd.f32 %v1443, %v1509
    %1511 = vdwg.mxu0
    %1512 = vmatpush.msra.mxu0 0.0
    %1513 = vmatpush.msra.mxu0 0.0
    %1514 = vmatpush.msra.mxu0 0.0
    %1515 = vmatpush.msra.mxu0 0.0
    %1516 = vmatpush.msra.mxu0 0.0
    %1517 = vmatpush.msra.mxu0 0.0
    %1518 = vmatpush.msra.mxu0 0.0
    %1519 = vmatpush.msra.mxu0 0.0
    %1520 = vmatpush.msra.mxu0 %v1440
    %1521 = vmatpush.msra.mxu0 %v1438
    %1522 = vmatpush.msra.mxu0 %v1436
    %1523 = vmatpush.msra.mxu0 %v1434
    %1524 = vmatpush.msra.mxu0 %v1432
    %1525 = vmatpush.msra.mxu0 %v1430
    %1526 = vmatpush.msra.mxu0 %v1428
    %1527 = vmatpush.msra.mxu0 %v1426
    %1528 = vmatmul.f32.gmra.mxu0 %v1448
    %v1529 = vpop.f32.mrf.mxu0
    %v1530 = vadd.f32 %v1444, %v1529
    %1531 = vmatmul.f32.gmra.mxu0 %v1451
    %v1532 = vpop.f32.mrf.mxu0
    %v1533 = vadd.f32 %v1444, %v1532
    %1534 = vmatmul.f32.gmra.mxu0 %v1454
    %v1535 = vpop.f32.mrf.mxu0
    %v1536 = vadd.f32 %v1444, %v1535
    %1537 = vmatmul.f32.gmra.mxu0 %v1457
    %v1538 = vpop.f32.mrf.mxu0
    %v1539 = vadd.f32 %v1444, %v1538
    %1540 = vmatmul.f32.gmra.mxu0 %v1460
    %v1541 = vpop.f32.mrf.mxu0
    %v1542 = vadd.f32 %v1444, %v1541
    %1543 = vmatmul.f32.gmra.mxu0 %v1463
    %v1544 = vpop.f32.mrf.mxu0
    %v1545 = vadd.f32 %v1444, %v1544
    %1546 = vmatmul.f32.gmra.mxu0 %v1466
    %v1547 = vpop.f32.mrf.mxu0
    %v1548 = vadd.f32 %v1444, %v1547
    %1549 = vmatmul.f32.gmra.mxu0 %v1469
    %v1550 = vpop.f32.mrf.mxu0
    %v1551 = vadd.f32 %v1444, %v1550
    %1552 = vdwg.mxu0
    %v1553 = vld [vmem:[#allocation6] sm:$0xff]
    %v1554 = vld [vmem:[#allocation6 + $0x8] sm:$0xff]
    %v1555 = vld [vmem:[#allocation6 + $0x10] sm:$0xff]
    %v1556 = vld [vmem:[#allocation6 + $0x18] sm:$0xff]
    %v1557 = vld [vmem:[#allocation6 + $0x20] sm:$0xff]
    %v1558 = vld [vmem:[#allocation6 + $0x28] sm:$0xff]
    %v1559 = vld [vmem:[#allocation6 + $0x30] sm:$0xff]
    %v1560 = vld [vmem:[#allocation6 + $0x38] sm:$0xff]
    %v1561 = vld [vmem:[#allocation6 + $0x40] sm:$0xff]
    %v1562 = vld [vmem:[#allocation6 + $0x48] sm:$0xff]
    %v1563 = vld [vmem:[#allocation6 + $0x50] sm:$0xff]
    %v1564 = vld [vmem:[#allocation6 + $0x58] sm:$0xff]
    %v1565 = vld [vmem:[#allocation6 + $0x60] sm:$0xff]
    %v1566 = vld [vmem:[#allocation6 + $0x68] sm:$0xff]
    %v1567 = vld [vmem:[#allocation6 + $0x70] sm:$0xff]
    %v1568 = vld [vmem:[#allocation6 + $0x78] sm:$0xff]
    %1569 = vmatpush.msra.mxu0 0.0
    %1570 = vmatpush.msra.mxu0 0.0
    %1571 = vmatpush.msra.mxu0 0.0
    %1572 = vmatpush.msra.mxu0 0.0
    %1573 = vmatpush.msra.mxu0 0.0
    %1574 = vmatpush.msra.mxu0 0.0
    %1575 = vmatpush.msra.mxu0 0.0
    %1576 = vmatpush.msra.mxu0 0.0
    %1577 = vmatpush.msra.mxu0 %v1567
    %1578 = vmatpush.msra.mxu0 %v1565
    %1579 = vmatpush.msra.mxu0 %v1563
    %1580 = vmatpush.msra.mxu0 %v1561
    %1581 = vmatpush.msra.mxu0 %v1559
    %1582 = vmatpush.msra.mxu0 %v1557
    %1583 = vmatpush.msra.mxu0 %v1555
    %1584 = vmatpush.msra.mxu0 %v1553
    %1585 = vmatmul.f32.gmra.mxu0 %v346
    %v1586 = vpop.f32.mrf.mxu0
    %v1587 = vadd.f32 0.0, %v1586
    %1588 = vdwg.mxu0
    %1589 = vmatpush.msra.mxu0 0.0
    %1590 = vmatpush.msra.mxu0 0.0
    %1591 = vmatpush.msra.mxu0 0.0
    %1592 = vmatpush.msra.mxu0 0.0
    %1593 = vmatpush.msra.mxu0 0.0
    %1594 = vmatpush.msra.mxu0 0.0
    %1595 = vmatpush.msra.mxu0 0.0
    %1596 = vmatpush.msra.mxu0 0.0
    %1597 = vmatpush.msra.mxu0 %v1568
    %1598 = vmatpush.msra.mxu0 %v1566
    %1599 = vmatpush.msra.mxu0 %v1564
    %1600 = vmatpush.msra.mxu0 %v1562
    %1601 = vmatpush.msra.mxu0 %v1560
    %1602 = vmatpush.msra.mxu0 %v1558
    %1603 = vmatpush.msra.mxu0 %v1556
    %1604 = vmatpush.msra.mxu0 %v1554
    %1605 = vmatmul.f32.gmra.mxu0 %v346
    %v1606 = vpop.f32.mrf.mxu0
    %v1607 = vadd.f32 0.0, %v1606
    %1608 = vdwg.mxu0
    %v1609 = vadd.f32 %v1489, %v1587
    %v1610 = vadd.f32 %v1551, %v1607
    %v1611 = vxor.u32 %v1609, 2147483648
    %v1612 = vmul.f32 %v1611, 1.442695
    %v1613 = vpow.pop %v1612
    %v1614 = vadd.f32 %v1613, 1.0
    %v1615 = vrcp.pop %v1614
    %v1616 = vmul.f32 %v1614, %v1615
    %v1617 = vsub.f32 1.0, %v1616
    %v1618 = vmul.f32 %v1615, %v1617
    %v1619 = vadd.f32 %v1615, %v1618
    %vm1620 = vweird.f32 %v1614
    %vm1621 = vweird.f32 %v1615
    %vm1622 = vmor %vm1620, %vm1621
    %v1623 = vsel %vm1622, %v1615, %v1619
    %v1624 = vand.u32 2147483647, %v1614
    %vm1625 = vcmp.eq.f32.partialorder %v1624, 8.507059e+37
    %v1626 = vand.u32 %v1614, 2147483648
    %v1627 = vor.u32 1.1754944e-38, %v1626
    %v1628 = vsel %vm1625, %v1627, %v1623
    %v1629 = vmul.f32 1.0, %v1628
    %v1630 = vmul.f32 %v1629, 2.0
    %v1631 = vsub.f32 %v1630, 1.0
    %v1632 = vsel %vm206, %v1631, %v1629
    %v1633 = vmul.f32 %v1632, 0.0
    %1635 = vrot.lane.b32.xlu0 %v1632, 64
    %v1636 = vpop.permute.xlu0 %1635
    %v1638 = vmul.f32 %v1632, %v1636
    %1640 = vrot.lane.b32.xlu0 %v1638, 32
    %v1641 = vpop.permute.xlu0 %1640
    %v1643 = vadd.f32 %v1633, %v1641
    %v1644 = vtanh.pop %v1643
    %1646 = vrot.lane.b32.xlu0 %v1644, 64
    %v1647 = vpop.permute.xlu0 %1646
    %v1649 = vmul.f32 %v1632, %v1647
    %v1650 = vxor.u32 %v1610, 2147483648
    %v1651 = vmul.f32 %v1650, 1.442695
    %v1652 = vpow.pop %v1651
    %v1653 = vadd.f32 %v1652, 1.0
    %v1654 = vrcp.pop %v1653
    %v1655 = vmul.f32 %v1653, %v1654
    %v1656 = vsub.f32 1.0, %v1655
    %v1657 = vmul.f32 %v1654, %v1656
    %v1658 = vadd.f32 %v1654, %v1657
    %vm1659 = vweird.f32 %v1653
    %vm1660 = vweird.f32 %v1654
    %vm1661 = vmor %vm1659, %vm1660
    %v1662 = vsel %vm1661, %v1654, %v1658
    %v1663 = vand.u32 2147483647, %v1653
    %vm1664 = vcmp.eq.f32.partialorder %v1663, 8.507059e+37
    %v1665 = vand.u32 %v1653, 2147483648
    %v1666 = vor.u32 1.1754944e-38, %v1665
    %v1667 = vsel %vm1664, %v1666, %v1662
    %v1668 = vmul.f32 1.0, %v1667
    %v1669 = vmul.f32 %v1668, 2.0
    %v1670 = vsub.f32 %v1669, 1.0
    %v1671 = vsel %vm206, %v1670, %v1668
    %v1672 = vmul.f32 %v1671, 0.0
    %1674 = vrot.lane.b32.xlu0 %v1671, 64
    %v1675 = vpop.permute.xlu0 %1674
    %v1677 = vmul.f32 %v1671, %v1675
    %1679 = vrot.lane.b32.xlu0 %v1677, 32
    %v1680 = vpop.permute.xlu0 %1679
    %v1682 = vadd.f32 %v1672, %v1680
    %v1683 = vtanh.pop %v1682
    %1685 = vrot.lane.b32.xlu0 %v1683, 64
    %v1686 = vpop.permute.xlu0 %1685
    %v1688 = vmul.f32 %v1671, %v1686
    %1690 = vrot.lane.b32.xlu0 %v1649, 32
    %v1691 = vpop.permute.xlu0 %1690
    %1693 = vst.msk [vmem:[#allocation2 + $0x40] sm:$0xff] %vm221, %v1691
    %1695 = vrot.lane.b32.xlu0 %v1688, 64
    %v1696 = vpop.permute.xlu0 %1695
    %1698 = vst.msk [vmem:[#allocation2 + $0x78] sm:$0xff] %vm477, %v1696
    %v1699 = vsel %vm221, %v1691, %v1696
    %v1701 = vsel %vm344, %v1699, 0
    %1703 = vmatpush.msra.mxu0 0.0
    %1704 = vmatpush.msra.mxu0 0.0
    %1705 = vmatpush.msra.mxu0 0.0
    %1706 = vmatpush.msra.mxu0 0.0
    %1707 = vmatpush.msra.mxu0 0.0
    %1708 = vmatpush.msra.mxu0 0.0
    %1709 = vmatpush.msra.mxu0 0.0
    %1710 = vmatpush.msra.mxu0 0.0
    %1711 = vmatpush.msra.mxu0 %v1567
    %1712 = vmatpush.msra.mxu0 %v1565
    %1713 = vmatpush.msra.mxu0 %v1563
    %1714 = vmatpush.msra.mxu0 %v1561
    %1715 = vmatpush.msra.mxu0 %v1559
    %1716 = vmatpush.msra.mxu0 %v1557
    %1717 = vmatpush.msra.mxu0 %v1555
    %1718 = vmatpush.msra.mxu0 %v1553
    %1719 = vmatmul.f32.gmra.mxu0 %v1701
    %v1720 = vpop.f32.mrf.mxu0
    %v1721 = vadd.f32 0.0, %v1720
    %1722 = vdwg.mxu0
    %1723 = vmatpush.msra.mxu0 0.0
    %1724 = vmatpush.msra.mxu0 0.0
    %1725 = vmatpush.msra.mxu0 0.0
    %1726 = vmatpush.msra.mxu0 0.0
    %1727 = vmatpush.msra.mxu0 0.0
    %1728 = vmatpush.msra.mxu0 0.0
    %1729 = vmatpush.msra.mxu0 0.0
    %1730 = vmatpush.msra.mxu0 0.0
    %1731 = vmatpush.msra.mxu0 %v1568
    %1732 = vmatpush.msra.mxu0 %v1566
    %1733 = vmatpush.msra.mxu0 %v1564
    %1734 = vmatpush.msra.mxu0 %v1562
    %1735 = vmatpush.msra.mxu0 %v1560
    %1736 = vmatpush.msra.mxu0 %v1558
    %1737 = vmatpush.msra.mxu0 %v1556
    %1738 = vmatpush.msra.mxu0 %v1554
    %1739 = vmatmul.f32.gmra.mxu0 %v1701
    %v1740 = vpop.f32.mrf.mxu0
    %v1741 = vadd.f32 0.0, %v1740
    %1742 = vdwg.mxu0
    %v1743 = vadd.f32 %v1492, %v1721
    %v1744 = vadd.f32 %v1548, %v1741
    %v1745 = vxor.u32 %v1743, 2147483648
    %v1746 = vmul.f32 %v1745, 1.442695
    %v1747 = vpow.pop %v1746
    %v1748 = vadd.f32 %v1747, 1.0
    %v1749 = vrcp.pop %v1748
    %v1750 = vmul.f32 %v1748, %v1749
    %v1751 = vsub.f32 1.0, %v1750
    %v1752 = vmul.f32 %v1749, %v1751
    %v1753 = vadd.f32 %v1749, %v1752
    %vm1754 = vweird.f32 %v1748
    %vm1755 = vweird.f32 %v1749
    %vm1756 = vmor %vm1754, %vm1755
    %v1757 = vsel %vm1756, %v1749, %v1753
    %v1758 = vand.u32 2147483647, %v1748
    %vm1759 = vcmp.eq.f32.partialorder %v1758, 8.507059e+37
    %v1760 = vand.u32 %v1748, 2147483648
    %v1761 = vor.u32 1.1754944e-38, %v1760
    %v1762 = vsel %vm1759, %v1761, %v1757
    %v1763 = vmul.f32 1.0, %v1762
    %v1764 = vmul.f32 %v1763, 2.0
    %v1765 = vsub.f32 %v1764, 1.0
    %v1766 = vsel %vm206, %v1765, %v1763
    %v1767 = vmul.f32 %v1766, %v1643
    %1769 = vrot.lane.b32.xlu0 %v1766, 64
    %v1770 = vpop.permute.xlu0 %1769
    %v1772 = vmul.f32 %v1766, %v1770
    %1774 = vrot.lane.b32.xlu0 %v1772, 32
    %v1775 = vpop.permute.xlu0 %1774
    %v1777 = vadd.f32 %v1767, %v1775
    %v1778 = vtanh.pop %v1777
    %1780 = vrot.lane.b32.xlu0 %v1778, 64
    %v1781 = vpop.permute.xlu0 %1780
    %v1783 = vmul.f32 %v1766, %v1781
    %v1784 = vxor.u32 %v1744, 2147483648
    %v1785 = vmul.f32 %v1784, 1.442695
    %v1786 = vpow.pop %v1785
    %v1787 = vadd.f32 %v1786, 1.0
    %v1788 = vrcp.pop %v1787
    %v1789 = vmul.f32 %v1787, %v1788
    %v1790 = vsub.f32 1.0, %v1789
    %v1791 = vmul.f32 %v1788, %v1790
    %v1792 = vadd.f32 %v1788, %v1791
    %vm1793 = vweird.f32 %v1787
    %vm1794 = vweird.f32 %v1788
    %vm1795 = vmor %vm1793, %vm1794
    %v1796 = vsel %vm1795, %v1788, %v1792
    %v1797 = vand.u32 2147483647, %v1787
    %vm1798 = vcmp.eq.f32.partialorder %v1797, 8.507059e+37
    %v1799 = vand.u32 %v1787, 2147483648
    %v1800 = vor.u32 1.1754944e-38, %v1799
    %v1801 = vsel %vm1798, %v1800, %v1796
    %v1802 = vmul.f32 1.0, %v1801
    %v1803 = vmul.f32 %v1802, 2.0
    %v1804 = vsub.f32 %v1803, 1.0
    %v1805 = vsel %vm206, %v1804, %v1802
    %v1806 = vmul.f32 %v1805, %v1682
    %1808 = vrot.lane.b32.xlu0 %v1805, 64
    %v1809 = vpop.permute.xlu0 %1808
    %v1811 = vmul.f32 %v1805, %v1809
    %1813 = vrot.lane.b32.xlu0 %v1811, 32
    %v1814 = vpop.permute.xlu0 %1813
    %v1816 = vadd.f32 %v1806, %v1814
    %v1817 = vtanh.pop %v1816
    %1819 = vrot.lane.b32.xlu0 %v1817, 64
    %v1820 = vpop.permute.xlu0 %1819
    %v1822 = vmul.f32 %v1805, %v1820
    %1824 = vrot.lane.b32.xlu0 %v1783, 32
    %v1825 = vpop.permute.xlu0 %1824
    %1827 = vst.msk [vmem:[#allocation2 + $0x48] sm:$0xff] %vm221, %v1825
    %1829 = vrot.lane.b32.xlu0 %v1822, 64
    %v1830 = vpop.permute.xlu0 %1829
    %1832 = vst.msk [vmem:[#allocation2 + $0x70] sm:$0xff] %vm477, %v1830
    %v1833 = vsel %vm221, %v1825, %v1830
    %v1835 = vsel %vm344, %v1833, 0
    %1837 = vmatpush.msra.mxu0 0.0
    %1838 = vmatpush.msra.mxu0 0.0
    %1839 = vmatpush.msra.mxu0 0.0
    %1840 = vmatpush.msra.mxu0 0.0
    %1841 = vmatpush.msra.mxu0 0.0
    %1842 = vmatpush.msra.mxu0 0.0
    %1843 = vmatpush.msra.mxu0 0.0
    %1844 = vmatpush.msra.mxu0 0.0
    %1845 = vmatpush.msra.mxu0 %v1567
    %1846 = vmatpush.msra.mxu0 %v1565
    %1847 = vmatpush.msra.mxu0 %v1563
    %1848 = vmatpush.msra.mxu0 %v1561
    %1849 = vmatpush.msra.mxu0 %v1559
    %1850 = vmatpush.msra.mxu0 %v1557
    %1851 = vmatpush.msra.mxu0 %v1555
    %1852 = vmatpush.msra.mxu0 %v1553
    %1853 = vmatmul.f32.gmra.mxu0 %v1835
    %v1854 = vpop.f32.mrf.mxu0
    %v1855 = vadd.f32 0.0, %v1854
    %1856 = vdwg.mxu0
    %1857 = vmatpush.msra.mxu0 0.0
    %1858 = vmatpush.msra.mxu0 0.0
    %1859 = vmatpush.msra.mxu0 0.0
    %1860 = vmatpush.msra.mxu0 0.0
    %1861 = vmatpush.msra.mxu0 0.0
    %1862 = vmatpush.msra.mxu0 0.0
    %1863 = vmatpush.msra.mxu0 0.0
    %1864 = vmatpush.msra.mxu0 0.0
    %1865 = vmatpush.msra.mxu0 %v1568
    %1866 = vmatpush.msra.mxu0 %v1566
    %1867 = vmatpush.msra.mxu0 %v1564
    %1868 = vmatpush.msra.mxu0 %v1562
    %1869 = vmatpush.msra.mxu0 %v1560
    %1870 = vmatpush.msra.mxu0 %v1558
    %1871 = vmatpush.msra.mxu0 %v1556
    %1872 = vmatpush.msra.mxu0 %v1554
    %1873 = vmatmul.f32.gmra.mxu0 %v1835
    %v1874 = vpop.f32.mrf.mxu0
    %v1875 = vadd.f32 0.0, %v1874
    %1876 = vdwg.mxu0
    %v1877 = vadd.f32 %v1495, %v1855
    %v1878 = vadd.f32 %v1545, %v1875
    %v1879 = vxor.u32 %v1877, 2147483648
    %v1880 = vmul.f32 %v1879, 1.442695
    %v1881 = vpow.pop %v1880
    %v1882 = vadd.f32 %v1881, 1.0
    %v1883 = vrcp.pop %v1882
    %v1884 = vmul.f32 %v1882, %v1883
    %v1885 = vsub.f32 1.0, %v1884
    %v1886 = vmul.f32 %v1883, %v1885
    %v1887 = vadd.f32 %v1883, %v1886
    %vm1888 = vweird.f32 %v1882
    %vm1889 = vweird.f32 %v1883
    %vm1890 = vmor %vm1888, %vm1889
    %v1891 = vsel %vm1890, %v1883, %v1887
    %v1892 = vand.u32 2147483647, %v1882
    %vm1893 = vcmp.eq.f32.partialorder %v1892, 8.507059e+37
    %v1894 = vand.u32 %v1882, 2147483648
    %v1895 = vor.u32 1.1754944e-38, %v1894
    %v1896 = vsel %vm1893, %v1895, %v1891
    %v1897 = vmul.f32 1.0, %v1896
    %v1898 = vmul.f32 %v1897, 2.0
    %v1899 = vsub.f32 %v1898, 1.0
    %v1900 = vsel %vm206, %v1899, %v1897
    %v1901 = vmul.f32 %v1900, %v1777
    %1903 = vrot.lane.b32.xlu0 %v1900, 64
    %v1904 = vpop.permute.xlu0 %1903
    %v1906 = vmul.f32 %v1900, %v1904
    %1908 = vrot.lane.b32.xlu0 %v1906, 32
    %v1909 = vpop.permute.xlu0 %1908
    %v1911 = vadd.f32 %v1901, %v1909
    %v1912 = vtanh.pop %v1911
    %1914 = vrot.lane.b32.xlu0 %v1912, 64
    %v1915 = vpop.permute.xlu0 %1914
    %v1917 = vmul.f32 %v1900, %v1915
    %v1918 = vxor.u32 %v1878, 2147483648
    %v1919 = vmul.f32 %v1918, 1.442695
    %v1920 = vpow.pop %v1919
    %v1921 = vadd.f32 %v1920, 1.0
    %v1922 = vrcp.pop %v1921
    %v1923 = vmul.f32 %v1921, %v1922
    %v1924 = vsub.f32 1.0, %v1923
    %v1925 = vmul.f32 %v1922, %v1924
    %v1926 = vadd.f32 %v1922, %v1925
    %vm1927 = vweird.f32 %v1921
    %vm1928 = vweird.f32 %v1922
    %vm1929 = vmor %vm1927, %vm1928
    %v1930 = vsel %vm1929, %v1922, %v1926
    %v1931 = vand.u32 2147483647, %v1921
    %vm1932 = vcmp.eq.f32.partialorder %v1931, 8.507059e+37
    %v1933 = vand.u32 %v1921, 2147483648
    %v1934 = vor.u32 1.1754944e-38, %v1933
    %v1935 = vsel %vm1932, %v1934, %v1930
    %v1936 = vmul.f32 1.0, %v1935
    %v1937 = vmul.f32 %v1936, 2.0
    %v1938 = vsub.f32 %v1937, 1.0
    %v1939 = vsel %vm206, %v1938, %v1936
    %v1940 = vmul.f32 %v1939, %v1816
    %1942 = vrot.lane.b32.xlu0 %v1939, 64
    %v1943 = vpop.permute.xlu0 %1942
    %v1945 = vmul.f32 %v1939, %v1943
    %1947 = vrot.lane.b32.xlu0 %v1945, 32
    %v1948 = vpop.permute.xlu0 %1947
    %v1950 = vadd.f32 %v1940, %v1948
    %v1951 = vtanh.pop %v1950
    %1953 = vrot.lane.b32.xlu0 %v1951, 64
    %v1954 = vpop.permute.xlu0 %1953
    %v1956 = vmul.f32 %v1939, %v1954
    %1958 = vrot.lane.b32.xlu0 %v1917, 32
    %v1959 = vpop.permute.xlu0 %1958
    %1961 = vst.msk [vmem:[#allocation2 + $0x50] sm:$0xff] %vm221, %v1959
    %1963 = vrot.lane.b32.xlu0 %v1956, 64
    %v1964 = vpop.permute.xlu0 %1963
    %1966 = vst.msk [vmem:[#allocation2 + $0x68] sm:$0xff] %vm477, %v1964
    %v1967 = vsel %vm221, %v1959, %v1964
    %v1969 = vsel %vm344, %v1967, 0
    %1971 = vmatpush.msra.mxu0 0.0
    %1972 = vmatpush.msra.mxu0 0.0
    %1973 = vmatpush.msra.mxu0 0.0
    %1974 = vmatpush.msra.mxu0 0.0
    %1975 = vmatpush.msra.mxu0 0.0
    %1976 = vmatpush.msra.mxu0 0.0
    %1977 = vmatpush.msra.mxu0 0.0
    %1978 = vmatpush.msra.mxu0 0.0
    %1979 = vmatpush.msra.mxu0 %v1567
    %1980 = vmatpush.msra.mxu0 %v1565
    %1981 = vmatpush.msra.mxu0 %v1563
    %1982 = vmatpush.msra.mxu0 %v1561
    %1983 = vmatpush.msra.mxu0 %v1559
    %1984 = vmatpush.msra.mxu0 %v1557
    %1985 = vmatpush.msra.mxu0 %v1555
    %1986 = vmatpush.msra.mxu0 %v1553
    %1987 = vmatmul.f32.gmra.mxu0 %v1969
    %v1988 = vpop.f32.mrf.mxu0
    %v1989 = vadd.f32 0.0, %v1988
    %1990 = vdwg.mxu0
    %1991 = vmatpush.msra.mxu0 0.0
    %1992 = vmatpush.msra.mxu0 0.0
    %1993 = vmatpush.msra.mxu0 0.0
    %1994 = vmatpush.msra.mxu0 0.0
    %1995 = vmatpush.msra.mxu0 0.0
    %1996 = vmatpush.msra.mxu0 0.0
    %1997 = vmatpush.msra.mxu0 0.0
    %1998 = vmatpush.msra.mxu0 0.0
    %1999 = vmatpush.msra.mxu0 %v1568
    %2000 = vmatpush.msra.mxu0 %v1566
    %2001 = vmatpush.msra.mxu0 %v1564
    %2002 = vmatpush.msra.mxu0 %v1562
    %2003 = vmatpush.msra.mxu0 %v1560
    %2004 = vmatpush.msra.mxu0 %v1558
    %2005 = vmatpush.msra.mxu0 %v1556
    %2006 = vmatpush.msra.mxu0 %v1554
    %2007 = vmatmul.f32.gmra.mxu0 %v1969
    %v2008 = vpop.f32.mrf.mxu0
    %v2009 = vadd.f32 0.0, %v2008
    %2010 = vdwg.mxu0
    %v2011 = vadd.f32 %v1498, %v1989
    %v2012 = vadd.f32 %v1542, %v2009
    %v2013 = vxor.u32 %v2011, 2147483648
    %v2014 = vmul.f32 %v2013, 1.442695
    %v2015 = vpow.pop %v2014
    %v2016 = vadd.f32 %v2015, 1.0
    %v2017 = vrcp.pop %v2016
    %v2018 = vmul.f32 %v2016, %v2017
    %v2019 = vsub.f32 1.0, %v2018
    %v2020 = vmul.f32 %v2017, %v2019
    %v2021 = vadd.f32 %v2017, %v2020
    %vm2022 = vweird.f32 %v2016
    %vm2023 = vweird.f32 %v2017
    %vm2024 = vmor %vm2022, %vm2023
    %v2025 = vsel %vm2024, %v2017, %v2021
    %v2026 = vand.u32 2147483647, %v2016
    %vm2027 = vcmp.eq.f32.partialorder %v2026, 8.507059e+37
    %v2028 = vand.u32 %v2016, 2147483648
    %v2029 = vor.u32 1.1754944e-38, %v2028
    %v2030 = vsel %vm2027, %v2029, %v2025
    %v2031 = vmul.f32 1.0, %v2030
    %v2032 = vmul.f32 %v2031, 2.0
    %v2033 = vsub.f32 %v2032, 1.0
    %v2034 = vsel %vm206, %v2033, %v2031
    %v2035 = vmul.f32 %v2034, %v1911
    %2037 = vrot.lane.b32.xlu0 %v2034, 64
    %v2038 = vpop.permute.xlu0 %2037
    %v2040 = vmul.f32 %v2034, %v2038
    %2042 = vrot.lane.b32.xlu0 %v2040, 32
    %v2043 = vpop.permute.xlu0 %2042
    %v2045 = vadd.f32 %v2035, %v2043
    %v2046 = vtanh.pop %v2045
    %2048 = vrot.lane.b32.xlu0 %v2046, 64
    %v2049 = vpop.permute.xlu0 %2048
    %v2051 = vmul.f32 %v2034, %v2049
    %v2052 = vxor.u32 %v2012, 2147483648
    %v2053 = vmul.f32 %v2052, 1.442695
    %v2054 = vpow.pop %v2053
    %v2055 = vadd.f32 %v2054, 1.0
    %v2056 = vrcp.pop %v2055
    %v2057 = vmul.f32 %v2055, %v2056
    %v2058 = vsub.f32 1.0, %v2057
    %v2059 = vmul.f32 %v2056, %v2058
    %v2060 = vadd.f32 %v2056, %v2059
    %vm2061 = vweird.f32 %v2055
    %vm2062 = vweird.f32 %v2056
    %vm2063 = vmor %vm2061, %vm2062
    %v2064 = vsel %vm2063, %v2056, %v2060
    %v2065 = vand.u32 2147483647, %v2055
    %vm2066 = vcmp.eq.f32.partialorder %v2065, 8.507059e+37
    %v2067 = vand.u32 %v2055, 2147483648
    %v2068 = vor.u32 1.1754944e-38, %v2067
    %v2069 = vsel %vm2066, %v2068, %v2064
    %v2070 = vmul.f32 1.0, %v2069
    %v2071 = vmul.f32 %v2070, 2.0
    %v2072 = vsub.f32 %v2071, 1.0
    %v2073 = vsel %vm206, %v2072, %v2070
    %v2074 = vmul.f32 %v2073, %v1950
    %2076 = vrot.lane.b32.xlu0 %v2073, 64
    %v2077 = vpop.permute.xlu0 %2076
    %v2079 = vmul.f32 %v2073, %v2077
    %2081 = vrot.lane.b32.xlu0 %v2079, 32
    %v2082 = vpop.permute.xlu0 %2081
    %v2084 = vadd.f32 %v2074, %v2082
    %v2085 = vtanh.pop %v2084
    %2087 = vrot.lane.b32.xlu0 %v2085, 64
    %v2088 = vpop.permute.xlu0 %2087
    %v2090 = vmul.f32 %v2073, %v2088
    %2092 = vrot.lane.b32.xlu0 %v2051, 32
    %v2093 = vpop.permute.xlu0 %2092
    %2095 = vst.msk [vmem:[#allocation2 + $0x58] sm:$0xff] %vm221, %v2093
    %2097 = vrot.lane.b32.xlu0 %v2090, 64
    %v2098 = vpop.permute.xlu0 %2097
    %2100 = vst.msk [vmem:[#allocation2 + $0x60] sm:$0xff] %vm477, %v2098
    %v2101 = vsel %vm221, %v2093, %v2098
    %v2103 = vsel %vm344, %v2101, 0
    %2105 = vmatpush.msra.mxu0 0.0
    %2106 = vmatpush.msra.mxu0 0.0
    %2107 = vmatpush.msra.mxu0 0.0
    %2108 = vmatpush.msra.mxu0 0.0
    %2109 = vmatpush.msra.mxu0 0.0
    %2110 = vmatpush.msra.mxu0 0.0
    %2111 = vmatpush.msra.mxu0 0.0
    %2112 = vmatpush.msra.mxu0 0.0
    %2113 = vmatpush.msra.mxu0 %v1567
    %2114 = vmatpush.msra.mxu0 %v1565
    %2115 = vmatpush.msra.mxu0 %v1563
    %2116 = vmatpush.msra.mxu0 %v1561
    %2117 = vmatpush.msra.mxu0 %v1559
    %2118 = vmatpush.msra.mxu0 %v1557
    %2119 = vmatpush.msra.mxu0 %v1555
    %2120 = vmatpush.msra.mxu0 %v1553
    %2121 = vmatmul.f32.gmra.mxu0 %v2103
    %v2122 = vpop.f32.mrf.mxu0
    %v2123 = vadd.f32 0.0, %v2122
    %2124 = vdwg.mxu0
    %2125 = vmatpush.msra.mxu0 0.0
    %2126 = vmatpush.msra.mxu0 0.0
    %2127 = vmatpush.msra.mxu0 0.0
    %2128 = vmatpush.msra.mxu0 0.0
    %2129 = vmatpush.msra.mxu0 0.0
    %2130 = vmatpush.msra.mxu0 0.0
    %2131 = vmatpush.msra.mxu0 0.0
    %2132 = vmatpush.msra.mxu0 0.0
    %2133 = vmatpush.msra.mxu0 %v1568
    %2134 = vmatpush.msra.mxu0 %v1566
    %2135 = vmatpush.msra.mxu0 %v1564
    %2136 = vmatpush.msra.mxu0 %v1562
    %2137 = vmatpush.msra.mxu0 %v1560
    %2138 = vmatpush.msra.mxu0 %v1558
    %2139 = vmatpush.msra.mxu0 %v1556
    %2140 = vmatpush.msra.mxu0 %v1554
    %2141 = vmatmul.f32.gmra.mxu0 %v2103
    %v2142 = vpop.f32.mrf.mxu0
    %v2143 = vadd.f32 0.0, %v2142
    %2144 = vdwg.mxu0
    %v2145 = vadd.f32 %v1501, %v2123
    %v2146 = vadd.f32 %v1539, %v2143
    %v2147 = vxor.u32 %v2145, 2147483648
    %v2148 = vmul.f32 %v2147, 1.442695
    %v2149 = vpow.pop %v2148
    %v2150 = vadd.f32 %v2149, 1.0
    %v2151 = vrcp.pop %v2150
    %v2152 = vmul.f32 %v2150, %v2151
    %v2153 = vsub.f32 1.0, %v2152
    %v2154 = vmul.f32 %v2151, %v2153
    %v2155 = vadd.f32 %v2151, %v2154
    %vm2156 = vweird.f32 %v2150
    %vm2157 = vweird.f32 %v2151
    %vm2158 = vmor %vm2156, %vm2157
    %v2159 = vsel %vm2158, %v2151, %v2155
    %v2160 = vand.u32 2147483647, %v2150
    %vm2161 = vcmp.eq.f32.partialorder %v2160, 8.507059e+37
    %v2162 = vand.u32 %v2150, 2147483648
    %v2163 = vor.u32 1.1754944e-38, %v2162
    %v2164 = vsel %vm2161, %v2163, %v2159
    %v2165 = vmul.f32 1.0, %v2164
    %v2166 = vmul.f32 %v2165, 2.0
    %v2167 = vsub.f32 %v2166, 1.0
    %v2168 = vsel %vm206, %v2167, %v2165
    %v2169 = vmul.f32 %v2168, %v2045
    %2171 = vrot.lane.b32.xlu0 %v2168, 64
    %v2172 = vpop.permute.xlu0 %2171
    %v2174 = vmul.f32 %v2168, %v2172
    %2176 = vrot.lane.b32.xlu0 %v2174, 32
    %v2177 = vpop.permute.xlu0 %2176
    %v2179 = vadd.f32 %v2169, %v2177
    %v2180 = vtanh.pop %v2179
    %2182 = vrot.lane.b32.xlu0 %v2180, 64
    %v2183 = vpop.permute.xlu0 %2182
    %v2185 = vmul.f32 %v2168, %v2183
    %v2186 = vxor.u32 %v2146, 2147483648
    %v2187 = vmul.f32 %v2186, 1.442695
    %v2188 = vpow.pop %v2187
    %v2189 = vadd.f32 %v2188, 1.0
    %v2190 = vrcp.pop %v2189
    %v2191 = vmul.f32 %v2189, %v2190
    %v2192 = vsub.f32 1.0, %v2191
    %v2193 = vmul.f32 %v2190, %v2192
    %v2194 = vadd.f32 %v2190, %v2193
    %vm2195 = vweird.f32 %v2189
    %vm2196 = vweird.f32 %v2190
    %vm2197 = vmor %vm2195, %vm2196
    %v2198 = vsel %vm2197, %v2190, %v2194
    %v2199 = vand.u32 2147483647, %v2189
    %vm2200 = vcmp.eq.f32.partialorder %v2199, 8.507059e+37
    %v2201 = vand.u32 %v2189, 2147483648
    %v2202 = vor.u32 1.1754944e-38, %v2201
    %v2203 = vsel %vm2200, %v2202, %v2198
    %v2204 = vmul.f32 1.0, %v2203
    %v2205 = vmul.f32 %v2204, 2.0
    %v2206 = vsub.f32 %v2205, 1.0
    %v2207 = vsel %vm206, %v2206, %v2204
    %v2208 = vmul.f32 %v2207, %v2084
    %2210 = vrot.lane.b32.xlu0 %v2207, 64
    %v2211 = vpop.permute.xlu0 %2210
    %v2213 = vmul.f32 %v2207, %v2211
    %2215 = vrot.lane.b32.xlu0 %v2213, 32
    %v2216 = vpop.permute.xlu0 %2215
    %v2218 = vadd.f32 %v2208, %v2216
    %v2219 = vtanh.pop %v2218
    %2221 = vrot.lane.b32.xlu0 %v2219, 64
    %v2222 = vpop.permute.xlu0 %2221
    %v2224 = vmul.f32 %v2207, %v2222
    %2226 = vrot.lane.b32.xlu0 %v2185, 32
    %v2227 = vpop.permute.xlu0 %2226
    %2229 = vst.msk [vmem:[#allocation2 + $0x60] sm:$0xff] %vm221, %v2227
    %2231 = vrot.lane.b32.xlu0 %v2224, 64
    %v2232 = vpop.permute.xlu0 %2231
    %2234 = vst.msk [vmem:[#allocation2 + $0x58] sm:$0xff] %vm477, %v2232
    %v2235 = vsel %vm221, %v2227, %v2232
    %v2237 = vsel %vm344, %v2235, 0
    %2239 = vmatpush.msra.mxu0 0.0
    %2240 = vmatpush.msra.mxu0 0.0
    %2241 = vmatpush.msra.mxu0 0.0
    %2242 = vmatpush.msra.mxu0 0.0
    %2243 = vmatpush.msra.mxu0 0.0
    %2244 = vmatpush.msra.mxu0 0.0
    %2245 = vmatpush.msra.mxu0 0.0
    %2246 = vmatpush.msra.mxu0 0.0
    %2247 = vmatpush.msra.mxu0 %v1567
    %2248 = vmatpush.msra.mxu0 %v1565
    %2249 = vmatpush.msra.mxu0 %v1563
    %2250 = vmatpush.msra.mxu0 %v1561
    %2251 = vmatpush.msra.mxu0 %v1559
    %2252 = vmatpush.msra.mxu0 %v1557
    %2253 = vmatpush.msra.mxu0 %v1555
    %2254 = vmatpush.msra.mxu0 %v1553
    %2255 = vmatmul.f32.gmra.mxu0 %v2237
    %v2256 = vpop.f32.mrf.mxu0
    %v2257 = vadd.f32 0.0, %v2256
    %2258 = vdwg.mxu0
    %2259 = vmatpush.msra.mxu0 0.0
    %2260 = vmatpush.msra.mxu0 0.0
    %2261 = vmatpush.msra.mxu0 0.0
    %2262 = vmatpush.msra.mxu0 0.0
    %2263 = vmatpush.msra.mxu0 0.0
    %2264 = vmatpush.msra.mxu0 0.0
    %2265 = vmatpush.msra.mxu0 0.0
    %2266 = vmatpush.msra.mxu0 0.0
    %2267 = vmatpush.msra.mxu0 %v1568
    %2268 = vmatpush.msra.mxu0 %v1566
    %2269 = vmatpush.msra.mxu0 %v1564
    %2270 = vmatpush.msra.mxu0 %v1562
    %2271 = vmatpush.msra.mxu0 %v1560
    %2272 = vmatpush.msra.mxu0 %v1558
    %2273 = vmatpush.msra.mxu0 %v1556
    %2274 = vmatpush.msra.mxu0 %v1554
    %2275 = vmatmul.f32.gmra.mxu0 %v2237
    %v2276 = vpop.f32.mrf.mxu0
    %v2277 = vadd.f32 0.0, %v2276
    %2278 = vdwg.mxu0
    %v2279 = vadd.f32 %v1504, %v2257
    %v2280 = vadd.f32 %v1536, %v2277
    %v2281 = vxor.u32 %v2279, 2147483648
    %v2282 = vmul.f32 %v2281, 1.442695
    %v2283 = vpow.pop %v2282
    %v2284 = vadd.f32 %v2283, 1.0
    %v2285 = vrcp.pop %v2284
    %v2286 = vmul.f32 %v2284, %v2285
    %v2287 = vsub.f32 1.0, %v2286
    %v2288 = vmul.f32 %v2285, %v2287
    %v2289 = vadd.f32 %v2285, %v2288
    %vm2290 = vweird.f32 %v2284
    %vm2291 = vweird.f32 %v2285
    %vm2292 = vmor %vm2290, %vm2291
    %v2293 = vsel %vm2292, %v2285, %v2289
    %v2294 = vand.u32 2147483647, %v2284
    %vm2295 = vcmp.eq.f32.partialorder %v2294, 8.507059e+37
    %v2296 = vand.u32 %v2284, 2147483648
    %v2297 = vor.u32 1.1754944e-38, %v2296
    %v2298 = vsel %vm2295, %v2297, %v2293
    %v2299 = vmul.f32 1.0, %v2298
    %v2300 = vmul.f32 %v2299, 2.0
    %v2301 = vsub.f32 %v2300, 1.0
    %v2302 = vsel %vm206, %v2301, %v2299
    %v2303 = vmul.f32 %v2302, %v2179
    %2305 = vrot.lane.b32.xlu0 %v2302, 64
    %v2306 = vpop.permute.xlu0 %2305
    %v2308 = vmul.f32 %v2302, %v2306
    %2310 = vrot.lane.b32.xlu0 %v2308, 32
    %v2311 = vpop.permute.xlu0 %2310
    %v2313 = vadd.f32 %v2303, %v2311
    %v2314 = vtanh.pop %v2313
    %2316 = vrot.lane.b32.xlu0 %v2314, 64
    %v2317 = vpop.permute.xlu0 %2316
    %v2319 = vmul.f32 %v2302, %v2317
    %v2320 = vxor.u32 %v2280, 2147483648
    %v2321 = vmul.f32 %v2320, 1.442695
    %v2322 = vpow.pop %v2321
    %v2323 = vadd.f32 %v2322, 1.0
    %v2324 = vrcp.pop %v2323
    %v2325 = vmul.f32 %v2323, %v2324
    %v2326 = vsub.f32 1.0, %v2325
    %v2327 = vmul.f32 %v2324, %v2326
    %v2328 = vadd.f32 %v2324, %v2327
    %vm2329 = vweird.f32 %v2323
    %vm2330 = vweird.f32 %v2324
    %vm2331 = vmor %vm2329, %vm2330
    %v2332 = vsel %vm2331, %v2324, %v2328
    %v2333 = vand.u32 2147483647, %v2323
    %vm2334 = vcmp.eq.f32.partialorder %v2333, 8.507059e+37
    %v2335 = vand.u32 %v2323, 2147483648
    %v2336 = vor.u32 1.1754944e-38, %v2335
    %v2337 = vsel %vm2334, %v2336, %v2332
    %v2338 = vmul.f32 1.0, %v2337
    %v2339 = vmul.f32 %v2338, 2.0
    %v2340 = vsub.f32 %v2339, 1.0
    %v2341 = vsel %vm206, %v2340, %v2338
    %v2342 = vmul.f32 %v2341, %v2218
    %2344 = vrot.lane.b32.xlu0 %v2341, 64
    %v2345 = vpop.permute.xlu0 %2344
    %v2347 = vmul.f32 %v2341, %v2345
    %2349 = vrot.lane.b32.xlu0 %v2347, 32
    %v2350 = vpop.permute.xlu0 %2349
    %v2352 = vadd.f32 %v2342, %v2350
    %v2353 = vtanh.pop %v2352
    %2355 = vrot.lane.b32.xlu0 %v2353, 64
    %v2356 = vpop.permute.xlu0 %2355
    %v2358 = vmul.f32 %v2341, %v2356
    %2360 = vrot.lane.b32.xlu0 %v2319, 32
    %v2361 = vpop.permute.xlu0 %2360
    %2363 = vst.msk [vmem:[#allocation2 + $0x68] sm:$0xff] %vm221, %v2361
    %2365 = vrot.lane.b32.xlu0 %v2358, 64
    %v2366 = vpop.permute.xlu0 %2365
    %2368 = vst.msk [vmem:[#allocation2 + $0x50] sm:$0xff] %vm477, %v2366
    %v2369 = vsel %vm221, %v2361, %v2366
    %v2371 = vsel %vm344, %v2369, 0
    %2373 = vmatpush.msra.mxu0 0.0
    %2374 = vmatpush.msra.mxu0 0.0
    %2375 = vmatpush.msra.mxu0 0.0
    %2376 = vmatpush.msra.mxu0 0.0
    %2377 = vmatpush.msra.mxu0 0.0
    %2378 = vmatpush.msra.mxu0 0.0
    %2379 = vmatpush.msra.mxu0 0.0
    %2380 = vmatpush.msra.mxu0 0.0
    %2381 = vmatpush.msra.mxu0 %v1567
    %2382 = vmatpush.msra.mxu0 %v1565
    %2383 = vmatpush.msra.mxu0 %v1563
    %2384 = vmatpush.msra.mxu0 %v1561
    %2385 = vmatpush.msra.mxu0 %v1559
    %2386 = vmatpush.msra.mxu0 %v1557
    %2387 = vmatpush.msra.mxu0 %v1555
    %2388 = vmatpush.msra.mxu0 %v1553
    %2389 = vmatmul.f32.gmra.mxu0 %v2371
    %v2390 = vpop.f32.mrf.mxu0
    %v2391 = vadd.f32 0.0, %v2390
    %2392 = vdwg.mxu0
    %2393 = vmatpush.msra.mxu0 0.0
    %2394 = vmatpush.msra.mxu0 0.0
    %2395 = vmatpush.msra.mxu0 0.0
    %2396 = vmatpush.msra.mxu0 0.0
    %2397 = vmatpush.msra.mxu0 0.0
    %2398 = vmatpush.msra.mxu0 0.0
    %2399 = vmatpush.msra.mxu0 0.0
    %2400 = vmatpush.msra.mxu0 0.0
    %2401 = vmatpush.msra.mxu0 %v1568
    %2402 = vmatpush.msra.mxu0 %v1566
    %2403 = vmatpush.msra.mxu0 %v1564
    %2404 = vmatpush.msra.mxu0 %v1562
    %2405 = vmatpush.msra.mxu0 %v1560
    %2406 = vmatpush.msra.mxu0 %v1558
    %2407 = vmatpush.msra.mxu0 %v1556
    %2408 = vmatpush.msra.mxu0 %v1554
    %2409 = vmatmul.f32.gmra.mxu0 %v2371
    %v2410 = vpop.f32.mrf.mxu0
    %v2411 = vadd.f32 0.0, %v2410
    %2412 = vdwg.mxu0
    %v2413 = vadd.f32 %v1507, %v2391
    %v2414 = vadd.f32 %v1533, %v2411
    %v2415 = vxor.u32 %v2413, 2147483648
    %v2416 = vmul.f32 %v2415, 1.442695
    %v2417 = vpow.pop %v2416
    %v2418 = vadd.f32 %v2417, 1.0
    %v2419 = vrcp.pop %v2418
    %v2420 = vmul.f32 %v2418, %v2419
    %v2421 = vsub.f32 1.0, %v2420
    %v2422 = vmul.f32 %v2419, %v2421
    %v2423 = vadd.f32 %v2419, %v2422
    %vm2424 = vweird.f32 %v2418
    %vm2425 = vweird.f32 %v2419
    %vm2426 = vmor %vm2424, %vm2425
    %v2427 = vsel %vm2426, %v2419, %v2423
    %v2428 = vand.u32 2147483647, %v2418
    %vm2429 = vcmp.eq.f32.partialorder %v2428, 8.507059e+37
    %v2430 = vand.u32 %v2418, 2147483648
    %v2431 = vor.u32 1.1754944e-38, %v2430
    %v2432 = vsel %vm2429, %v2431, %v2427
    %v2433 = vmul.f32 1.0, %v2432
    %v2434 = vmul.f32 %v2433, 2.0
    %v2435 = vsub.f32 %v2434, 1.0
    %v2436 = vsel %vm206, %v2435, %v2433
    %v2437 = vmul.f32 %v2436, %v2313
    %2439 = vrot.lane.b32.xlu0 %v2436, 64
    %v2440 = vpop.permute.xlu0 %2439
    %v2442 = vmul.f32 %v2436, %v2440
    %2444 = vrot.lane.b32.xlu0 %v2442, 32
    %v2445 = vpop.permute.xlu0 %2444
    %v2447 = vadd.f32 %v2437, %v2445
    %v2448 = vtanh.pop %v2447
    %2450 = vrot.lane.b32.xlu0 %v2448, 64
    %v2451 = vpop.permute.xlu0 %2450
    %v2453 = vmul.f32 %v2436, %v2451
    %v2454 = vxor.u32 %v2414, 2147483648
    %v2455 = vmul.f32 %v2454, 1.442695
    %v2456 = vpow.pop %v2455
    %v2457 = vadd.f32 %v2456, 1.0
    %v2458 = vrcp.pop %v2457
    %v2459 = vmul.f32 %v2457, %v2458
    %v2460 = vsub.f32 1.0, %v2459
    %v2461 = vmul.f32 %v2458, %v2460
    %v2462 = vadd.f32 %v2458, %v2461
    %vm2463 = vweird.f32 %v2457
    %vm2464 = vweird.f32 %v2458
    %vm2465 = vmor %vm2463, %vm2464
    %v2466 = vsel %vm2465, %v2458, %v2462
    %v2467 = vand.u32 2147483647, %v2457
    %vm2468 = vcmp.eq.f32.partialorder %v2467, 8.507059e+37
    %v2469 = vand.u32 %v2457, 2147483648
    %v2470 = vor.u32 1.1754944e-38, %v2469
    %v2471 = vsel %vm2468, %v2470, %v2466
    %v2472 = vmul.f32 1.0, %v2471
    %v2473 = vmul.f32 %v2472, 2.0
    %v2474 = vsub.f32 %v2473, 1.0
    %v2475 = vsel %vm206, %v2474, %v2472
    %v2476 = vmul.f32 %v2475, %v2352
    %2478 = vrot.lane.b32.xlu0 %v2475, 64
    %v2479 = vpop.permute.xlu0 %2478
    %v2481 = vmul.f32 %v2475, %v2479
    %2483 = vrot.lane.b32.xlu0 %v2481, 32
    %v2484 = vpop.permute.xlu0 %2483
    %v2486 = vadd.f32 %v2476, %v2484
    %v2487 = vtanh.pop %v2486
    %2489 = vrot.lane.b32.xlu0 %v2487, 64
    %v2490 = vpop.permute.xlu0 %2489
    %v2492 = vmul.f32 %v2475, %v2490
    %2494 = vrot.lane.b32.xlu0 %v2453, 32
    %v2495 = vpop.permute.xlu0 %2494
    %2497 = vst.msk [vmem:[#allocation2 + $0x70] sm:$0xff] %vm221, %v2495
    %2499 = vrot.lane.b32.xlu0 %v2492, 64
    %v2500 = vpop.permute.xlu0 %2499
    %2502 = vst.msk [vmem:[#allocation2 + $0x48] sm:$0xff] %vm477, %v2500
    %v2503 = vsel %vm221, %v2495, %v2500
    %v2505 = vsel %vm344, %v2503, 0
    %2507 = vmatpush.msra.mxu0 0.0
    %2508 = vmatpush.msra.mxu0 0.0
    %2509 = vmatpush.msra.mxu0 0.0
    %2510 = vmatpush.msra.mxu0 0.0
    %2511 = vmatpush.msra.mxu0 0.0
    %2512 = vmatpush.msra.mxu0 0.0
    %2513 = vmatpush.msra.mxu0 0.0
    %2514 = vmatpush.msra.mxu0 0.0
    %2515 = vmatpush.msra.mxu0 %v1567
    %2516 = vmatpush.msra.mxu0 %v1565
    %2517 = vmatpush.msra.mxu0 %v1563
    %2518 = vmatpush.msra.mxu0 %v1561
    %2519 = vmatpush.msra.mxu0 %v1559
    %2520 = vmatpush.msra.mxu0 %v1557
    %2521 = vmatpush.msra.mxu0 %v1555
    %2522 = vmatpush.msra.mxu0 %v1553
    %2523 = vmatmul.f32.gmra.mxu0 %v2505
    %v2524 = vpop.f32.mrf.mxu0
    %v2525 = vadd.f32 0.0, %v2524
    %2526 = vdwg.mxu0
    %2527 = vmatpush.msra.mxu0 0.0
    %2528 = vmatpush.msra.mxu0 0.0
    %2529 = vmatpush.msra.mxu0 0.0
    %2530 = vmatpush.msra.mxu0 0.0
    %2531 = vmatpush.msra.mxu0 0.0
    %2532 = vmatpush.msra.mxu0 0.0
    %2533 = vmatpush.msra.mxu0 0.0
    %2534 = vmatpush.msra.mxu0 0.0
    %2535 = vmatpush.msra.mxu0 %v1568
    %2536 = vmatpush.msra.mxu0 %v1566
    %2537 = vmatpush.msra.mxu0 %v1564
    %2538 = vmatpush.msra.mxu0 %v1562
    %2539 = vmatpush.msra.mxu0 %v1560
    %2540 = vmatpush.msra.mxu0 %v1558
    %2541 = vmatpush.msra.mxu0 %v1556
    %2542 = vmatpush.msra.mxu0 %v1554
    %2543 = vmatmul.f32.gmra.mxu0 %v2505
    %v2544 = vpop.f32.mrf.mxu0
    %v2545 = vadd.f32 0.0, %v2544
    %2546 = vdwg.mxu0
    %v2547 = vadd.f32 %v1510, %v2525
    %v2548 = vadd.f32 %v1530, %v2545
    %v2549 = vxor.u32 %v2547, 2147483648
    %v2550 = vmul.f32 %v2549, 1.442695
    %v2551 = vpow.pop %v2550
    %v2552 = vadd.f32 %v2551, 1.0
    %v2553 = vrcp.pop %v2552
    %v2554 = vmul.f32 %v2552, %v2553
    %v2555 = vsub.f32 1.0, %v2554
    %v2556 = vmul.f32 %v2553, %v2555
    %v2557 = vadd.f32 %v2553, %v2556
    %vm2558 = vweird.f32 %v2552
    %vm2559 = vweird.f32 %v2553
    %vm2560 = vmor %vm2558, %vm2559
    %v2561 = vsel %vm2560, %v2553, %v2557
    %v2562 = vand.u32 2147483647, %v2552
    %vm2563 = vcmp.eq.f32.partialorder %v2562, 8.507059e+37
    %v2564 = vand.u32 %v2552, 2147483648
    %v2565 = vor.u32 1.1754944e-38, %v2564
    %v2566 = vsel %vm2563, %v2565, %v2561
    %v2567 = vmul.f32 1.0, %v2566
    %v2568 = vmul.f32 %v2567, 2.0
    %v2569 = vsub.f32 %v2568, 1.0
    %v2570 = vsel %vm206, %v2569, %v2567
    %v2571 = vmul.f32 %v2570, %v2447
    %2573 = vrot.lane.b32.xlu0 %v2570, 64
    %v2574 = vpop.permute.xlu0 %2573
    %v2576 = vmul.f32 %v2570, %v2574
    %2578 = vrot.lane.b32.xlu0 %v2576, 32
    %v2579 = vpop.permute.xlu0 %2578
    %v2581 = vadd.f32 %v2571, %v2579
    %v2582 = vtanh.pop %v2581
    %2584 = vrot.lane.b32.xlu0 %v2582, 64
    %v2585 = vpop.permute.xlu0 %2584
    %v2587 = vmul.f32 %v2570, %v2585
    %v2588 = vxor.u32 %v2548, 2147483648
    %v2589 = vmul.f32 %v2588, 1.442695
    %v2590 = vpow.pop %v2589
    %v2591 = vadd.f32 %v2590, 1.0
    %v2592 = vrcp.pop %v2591
    %v2593 = vmul.f32 %v2591, %v2592
    %v2594 = vsub.f32 1.0, %v2593
    %v2595 = vmul.f32 %v2592, %v2594
    %v2596 = vadd.f32 %v2592, %v2595
    %vm2597 = vweird.f32 %v2591
    %vm2598 = vweird.f32 %v2592
    %vm2599 = vmor %vm2597, %vm2598
    %v2600 = vsel %vm2599, %v2592, %v2596
    %v2601 = vand.u32 2147483647, %v2591
    %vm2602 = vcmp.eq.f32.partialorder %v2601, 8.507059e+37
    %v2603 = vand.u32 %v2591, 2147483648
    %v2604 = vor.u32 1.1754944e-38, %v2603
    %v2605 = vsel %vm2602, %v2604, %v2600
    %v2606 = vmul.f32 1.0, %v2605
    %v2607 = vmul.f32 %v2606, 2.0
    %v2608 = vsub.f32 %v2607, 1.0
    %v2609 = vsel %vm206, %v2608, %v2606
    %v2610 = vmul.f32 %v2609, %v2486
    %2612 = vrot.lane.b32.xlu0 %v2609, 64
    %v2613 = vpop.permute.xlu0 %2612
    %v2615 = vmul.f32 %v2609, %v2613
    %2617 = vrot.lane.b32.xlu0 %v2615, 32
    %v2618 = vpop.permute.xlu0 %2617
    %v2620 = vadd.f32 %v2610, %v2618
    %v2621 = vtanh.pop %v2620
    %2623 = vrot.lane.b32.xlu0 %v2621, 64
    %v2624 = vpop.permute.xlu0 %2623
    %v2626 = vmul.f32 %v2609, %v2624
    %2628 = vrot.lane.b32.xlu0 %v2587, 32
    %v2629 = vpop.permute.xlu0 %2628
    %2631 = vst.msk [vmem:[#allocation2 + $0x78] sm:$0xff] %vm221, %v2629
    %2633 = vrot.lane.b32.xlu0 %v2626, 64
    %v2634 = vpop.permute.xlu0 %2633
    %2636 = vst.msk [vmem:[#allocation2 + $0x40] sm:$0xff] %vm477, %v2634
    %v2637 = vld [vmem:[#allocation2 + $0x40] sm:$0xff]
    %v2638 = vld [vmem:[#allocation2 + $0x48] sm:$0xff]
    %v2639 = vld [vmem:[#allocation2 + $0x50] sm:$0xff]
    %v2640 = vld [vmem:[#allocation2 + $0x58] sm:$0xff]
    %v2641 = vld [vmem:[#allocation2 + $0x60] sm:$0xff]
    %v2642 = vld [vmem:[#allocation2 + $0x68] sm:$0xff]
    %v2643 = vld [vmem:[#allocation2 + $0x70] sm:$0xff]
    %v2644 = vld [vmem:[#allocation2 + $0x78] sm:$0xff]
    %v2645 = vld [vmem:[%s8] sm:$0xff]
    %v2646 = vld [vmem:[%s8 + $0x8] sm:$0xff]
    %v2647 = vld [vmem:[%s8 + $0x10] sm:$0xff]
    %v2648 = vld [vmem:[%s8 + $0x18] sm:$0xff]
    %v2649 = vld [vmem:[%s8 + $0x20] sm:$0xff]
    %v2650 = vld [vmem:[%s8 + $0x28] sm:$0xff]
    %v2651 = vld [vmem:[%s8 + $0x30] sm:$0xff]
    %v2652 = vld [vmem:[%s8 + $0x38] sm:$0xff]
    %v2653 = vld [vmem:[%s8 + $0x40] sm:$0xff]
    %v2654 = vld [vmem:[%s8 + $0x48] sm:$0xff]
    %v2655 = vld [vmem:[%s8 + $0x50] sm:$0xff]
    %v2656 = vld [vmem:[%s8 + $0x58] sm:$0xff]
    %2657 = vmatpush.msra.mxu0 0.0
    %2658 = vmatpush.msra.mxu0 0.0
    %2659 = vmatpush.msra.mxu0 0.0
    %2660 = vmatpush.msra.mxu0 0.0
    %2661 = vmatpush.msra.mxu0 0.0
    %2662 = vmatpush.msra.mxu0 0.0
    %2663 = vmatpush.msra.mxu0 0.0
    %2664 = vmatpush.msra.mxu0 0.0
    %2665 = vmatpush.msra.mxu0 0.0
    %2666 = vmatpush.msra.mxu0 0.0
    %2667 = vmatpush.msra.mxu0 0.0
    %2668 = vmatpush.msra.mxu0 0.0
    %2669 = vmatpush.msra.mxu0 %v2656
    %2670 = vmatpush.msra.mxu0 %v2655
    %2671 = vmatpush.msra.mxu0 %v2654
    %2672 = vmatpush.msra.mxu0 %v2653
    %2673 = vmatmul.f32.gmra.mxu0 %v223
    %v2674 = vpop.f32.mrf.mxu0
    %v2675 = vadd.f32 0.0, %v2674
    %2676 = vmatmul.f32.gmra.mxu0 %v226
    %v2677 = vpop.f32.mrf.mxu0
    %v2678 = vadd.f32 0.0, %v2677
    %2679 = vmatmul.f32.gmra.mxu0 %v229
    %v2680 = vpop.f32.mrf.mxu0
    %v2681 = vadd.f32 0.0, %v2680
    %2682 = vmatmul.f32.gmra.mxu0 %v232
    %v2683 = vpop.f32.mrf.mxu0
    %v2684 = vadd.f32 0.0, %v2683
    %2685 = vmatmul.f32.gmra.mxu0 %v235
    %v2686 = vpop.f32.mrf.mxu0
    %v2687 = vadd.f32 0.0, %v2686
    %2688 = vmatmul.f32.gmra.mxu0 %v238
    %v2689 = vpop.f32.mrf.mxu0
    %v2690 = vadd.f32 0.0, %v2689
    %2691 = vmatmul.f32.gmra.mxu0 %v241
    %v2692 = vpop.f32.mrf.mxu0
    %v2693 = vadd.f32 0.0, %v2692
    %2694 = vmatmul.f32.gmra.mxu0 %v244
    %v2695 = vpop.f32.mrf.mxu0
    %v2696 = vadd.f32 0.0, %v2695
    %2697 = vdwg.mxu0
    %v2699 = vsel %vm344, %v2637, 0
    %v2702 = vsel %vm344, %v2638, 0
    %v2705 = vsel %vm344, %v2639, 0
    %v2708 = vsel %vm344, %v2640, 0
    %v2711 = vsel %vm344, %v2641, 0
    %v2714 = vsel %vm344, %v2642, 0
    %v2717 = vsel %vm344, %v2643, 0
    %v2720 = vsel %vm344, %v2644, 0
    %2722 = vmatpush.msra.mxu0 0.0
    %2723 = vmatpush.msra.mxu0 0.0
    %2724 = vmatpush.msra.mxu0 0.0
    %2725 = vmatpush.msra.mxu0 0.0
    %2726 = vmatpush.msra.mxu0 0.0
    %2727 = vmatpush.msra.mxu0 0.0
    %2728 = vmatpush.msra.mxu0 0.0
    %2729 = vmatpush.msra.mxu0 0.0
    %2730 = vmatpush.msra.mxu0 %v2652
    %2731 = vmatpush.msra.mxu0 %v2651
    %2732 = vmatpush.msra.mxu0 %v2650
    %2733 = vmatpush.msra.mxu0 %v2649
    %2734 = vmatpush.msra.mxu0 %v2648
    %2735 = vmatpush.msra.mxu0 %v2647
    %2736 = vmatpush.msra.mxu0 %v2646
    %2737 = vmatpush.msra.mxu0 %v2645
    %2738 = vmatmul.f32.gmra.mxu0 %v2699
    %v2739 = vpop.f32.mrf.mxu0
    %v2740 = vadd.f32 %v2675, %v2739
    %2741 = vmatmul.f32.gmra.mxu0 %v2702
    %v2742 = vpop.f32.mrf.mxu0
    %v2743 = vadd.f32 %v2678, %v2742
    %2744 = vmatmul.f32.gmra.mxu0 %v2705
    %v2745 = vpop.f32.mrf.mxu0
    %v2746 = vadd.f32 %v2681, %v2745
    %2747 = vmatmul.f32.gmra.mxu0 %v2708
    %v2748 = vpop.f32.mrf.mxu0
    %v2749 = vadd.f32 %v2684, %v2748
    %2750 = vmatmul.f32.gmra.mxu0 %v2711
    %v2751 = vpop.f32.mrf.mxu0
    %v2752 = vadd.f32 %v2687, %v2751
    %2753 = vmatmul.f32.gmra.mxu0 %v2714
    %v2754 = vpop.f32.mrf.mxu0
    %v2755 = vadd.f32 %v2690, %v2754
    %2756 = vmatmul.f32.gmra.mxu0 %v2717
    %v2757 = vpop.f32.mrf.mxu0
    %v2758 = vadd.f32 %v2693, %v2757
    %2759 = vmatmul.f32.gmra.mxu0 %v2720
    %v2760 = vpop.f32.mrf.mxu0
    %v2761 = vadd.f32 %v2696, %v2760
    %2762 = vdwg.mxu0
    %v2763 = vld [vmem:[%s9] sm:$0x1]
    %v2765 = vperm.slane %v2763, 0
    %v2767 = vadd.f32 %v2740, %v2765
    %v2768 = vadd.f32 %v2743, %v2765
    %v2769 = vadd.f32 %v2746, %v2765
    %v2770 = vadd.f32 %v2749, %v2765
    %v2771 = vadd.f32 %v2752, %v2765
    %v2772 = vadd.f32 %v2755, %v2765
    %v2773 = vadd.f32 %v2758, %v2765
    %v2774 = vadd.f32 %v2761, %v2765
    %v2775 = vtanh.pop %v2767
    %v2776 = vtanh.pop %v2768
    %v2777 = vtanh.pop %v2769
    %v2778 = vtanh.pop %v2770
    %v2779 = vtanh.pop %v2771
    %v2780 = vtanh.pop %v2772
    %v2781 = vtanh.pop %v2773
    %v2782 = vtanh.pop %v2774
    %v2783 = vmax.f32 %v2775, %v2776
    %v2784 = vmax.f32 %v2783, %v2777
    %v2785 = vmax.f32 %v2784, %v2778
    %v2786 = vmax.f32 %v2785, %v2779
    %v2787 = vmax.f32 %v2786, %v2780
    %v2788 = vmax.f32 %v2787, %v2781
    %v2789 = vmax.f32 %v2788, %v2782
    %v2790 = vld [vmem:[#allocation8] sm:$0xff]
    %v2791 = vld [vmem:[#allocation8 + $0x8] sm:$0xff]
    %v2792 = vld [vmem:[#allocation8 + $0x10] sm:$0xff]
    %v2793 = vld [vmem:[#allocation8 + $0x18] sm:$0xff]
    %v2794 = vld [vmem:[#allocation8 + $0x20] sm:$0xff]
    %v2795 = vld [vmem:[#allocation8 + $0x28] sm:$0xff]
    %v2796 = vld [vmem:[#allocation8 + $0x30] sm:$0xff]
    %v2797 = vld [vmem:[#allocation8 + $0x38] sm:$0xff]
    %v2798 = vld [vmem:[%s11] sm:$0x1]
    %v2800 = vperm.slane %v2798, 0
    %v2803 = vsel %vm344, %v2789, 0
    %2805 = vmatpush.msra.mxu0 0.0
    %2806 = vmatpush.msra.mxu0 0.0
    %2807 = vmatpush.msra.mxu0 0.0
    %2808 = vmatpush.msra.mxu0 0.0
    %2809 = vmatpush.msra.mxu0 0.0
    %2810 = vmatpush.msra.mxu0 0.0
    %2811 = vmatpush.msra.mxu0 0.0
    %2812 = vmatpush.msra.mxu0 0.0
    %2813 = vmatpush.msra.mxu0 %v2797
    %2814 = vmatpush.msra.mxu0 %v2796
    %2815 = vmatpush.msra.mxu0 %v2795
    %2816 = vmatpush.msra.mxu0 %v2794
    %2817 = vmatpush.msra.mxu0 %v2793
    %2818 = vmatpush.msra.mxu0 %v2792
    %2819 = vmatpush.msra.mxu0 %v2791
    %2820 = vmatpush.msra.mxu0 %v2790
    %2821 = vmatmul.f32.gmra.mxu0 %v2803
    %v2822 = vpop.f32.mrf.mxu0
    %v2823 = vadd.f32 %v2800, %v2822
    %2824 = vdwg.mxu0
    %vm2825 = vcmp.lt.s32.totalorder %v98, 4
    %v2826 = vsel %vm2825, %v2823, -1e+30
    %2827 = vmax.xlane.f32.xlu0 %v2826
    %v2828 = vpop.xlane.xlu0 %2827
    %v2829 = vsub.f32 %v2826, %v2828
    %v2830 = vmul.f32 %v2829, 1.442695
    %v2831 = vpow.pop %v2830
    %2832 = vadd.xlane.f32.xlu0 %v2831
    %v2833 = vpop.xlane.xlu0 %2832
    %v2834 = vrcp.pop %v2833
    %v2835 = vmul.f32 %v2833, %v2834
    %v2836 = vsub.f32 1.0, %v2835
    %v2837 = vmul.f32 %v2834, %v2836
    %v2838 = vadd.f32 %v2834, %v2837
    %vm2839 = vweird.f32 %v2833
    %vm2840 = vweird.f32 %v2834
    %vm2841 = vmor %vm2839, %vm2840
    %v2842 = vsel %vm2841, %v2834, %v2838
    %v2843 = vand.u32 2147483647, %v2833
    %vm2844 = vcmp.eq.f32.partialorder %v2843, 8.507059e+37
    %v2845 = vand.u32 %v2833, 2147483648
    %v2846 = vor.u32 1.1754944e-38, %v2845
    %v2847 = vsel %vm2844, %v2846, %v2842
    %v2848 = vmul.f32 %v2831, %v2847
    %2849 = vst [vmem:[#allocation9] sm:$0xff] %v2848
    // Predicated region
    $region62: #{tpu_custom_call.1} parent=1 // pred_check
      _
    $region63: #{tpu_custom_call.1} parent=1 // pred_check_branch
      %2851 = sbr.rel (0) target = $region65
    $region64: #{tpu_custom_call.1} parent=1 // pred_region
      %2853 = vsyncadd [#allocation5], 0
      %s2855 = sshll.u32 [#allocation9], 4
      %s2856 = int_to_ptr.vmem [resolvable:$true] %s2855
      %s2857 = sshll.u32 %s12, 4
      %s2858 = int_to_ptr.hbm [resolvable:$true] %s2857
      %2860 = dma.vmem_to_hbm [thread:$0]  %s2856, 128, %s2858, [#allocation5]
    $region65: #{tpu_custom_call.1} parent=1 // pred_fallthru
      _
    // Predicated region
    $region66: #{tpu_custom_call.1} parent=1 // pred_check
      _
    $region67: #{tpu_custom_call.1} parent=1 // pred_check_branch
      %2862 = sbr.rel (0) target = $region69
    $region68: #{tpu_custom_call.1} parent=1 // pred_region
      %2864 = dma.done [#allocation5], 128
    $region69: #{tpu_custom_call.1} parent=1 // pred_fallthru
      _
    %2865 = vsyncpa [#allocation4], 1
    %2866 = vsyncpa [#allocation7], 1
    %2867 = vsyncpa [#allocation5], 1

</llo_original>
